<compile_context>
chip_gen: v7x
topology: tpu7x:2x2x1
jax: 0.10.0
libtpu: 0.0.40
codegen_flags: <defaults>
</compile_context>

<pallas_src>
import functools

import jax
import jax.numpy as jnp
from jax import lax
from jax.experimental import pallas as pl
from jax.experimental.pallas import tpu as pltpu

NEG_INF = -1000000.0
LN_EPS = 1e-5
LEAKY_SLOPE = 0.01


def _leaky_relu(x):
    return jnp.where(x >= 0, x, LEAKY_SLOPE * x)


def _layernorm_fast(x, gamma, beta):
    # E[x^2] - mean^2: the two cross-lane reductions issue independently
    # instead of being serialized by (x - mu) (review: XLU critical path).
    mu = jnp.mean(x, axis=-1, keepdims=True)
    ms = jnp.mean(x * x, axis=-1, keepdims=True)
    var = jnp.maximum(ms - mu * mu, 0.0)
    return (x - mu) * lax.rsqrt(var + LN_EPS) * gamma + beta


def fused_block_kernel(x_ref, bias_ref,
                       wqv_ref, bqv_ref, wff_ref, bff_ref,
                       g1_ref, be1_ref, w1_ref, bf1_ref,
                       w2_ref, bf2_ref, g2_ref, be2_ref,
                       out_ref, *, num_layers, num_head, seq_len, hidden, bt,
                       lane_dense_out):
    """All AttentionNoRelativeKey layers, fused, for a block of Bt batch rows."""
    L, H, nh, Bt = seq_len, hidden, num_head, bt
    d = H // nh
    R = Bt * L                      # rows fed to every matmul / LayerNorm
    G = nh * Bt                     # merged (head, batch) einsum batch axis

    # Running activation, flattened so the MXU sees M = Bt*L rows.
    x2d = x_ref[...].reshape(R, H).astype(jnp.float32)

    # Key-mask bias, hoisted and materialized ONCE at its full (G, L, L) shape.
    bias_full = jnp.broadcast_to(
        bias_ref[...].astype(jnp.float32).reshape(1, Bt, 1, L),
        (nh, Bt, L, L)).reshape(G, L, L)

    def one_layer(x_cur, l):
        x_bf = x_cur.astype(jnp.bfloat16)

        # Fused Q|V projection: single (R,H)@(H,2H) bf16 matmul, f32 accumulate.
        qv = jnp.dot(x_bf, wqv_ref[l],
                     preferred_element_type=jnp.float32) + bqv_ref[l]

        def split_heads(t2d_f32, col0):
            # static lane slices per head -> (nh*Bt, L, d), batch axis = (h, b)
            hs = [t2d_f32[:, col0 + h * d: col0 + (h + 1) * d].reshape(Bt, L, d)
                  for h in range(nh)]
            return jnp.stack(hs, axis=0).reshape(G, L, d).astype(jnp.bfloat16)

        qg = split_heads(qv, 0)        # q = Q(x)
        vg = split_heads(qv, H)        # v = V(x)
        kg = split_heads(x_cur, 0)     # k = x (reference never applies self.K)

        # Batched attention einsums (single leading batch dim).
        s = jnp.einsum('gqd,gkd->gqk', qg, kg,
                       preferred_element_type=jnp.float32)          # (G, L, L)
        s = s + bias_full
        m = jnp.max(s, axis=-1, keepdims=True)
        e = jnp.exp(s - m)
        p = e / jnp.sum(e, axis=-1, keepdims=True)   # exact divide (review)

        o = jnp.einsum('gqk,gkd->gqd', p.astype(jnp.bfloat16), vg,
                       preferred_element_type=jnp.float32)          # (G, L, d)
        o4 = o.reshape(nh, Bt, L, d)
        attn_out = jnp.concatenate(
            [o4[h].reshape(R, d) for h in range(nh)], axis=-1)      # (R, H)

        # output = LeakyReLU(ff_final(output)) + x ; norm1
        y = jnp.dot(attn_out.astype(jnp.bfloat16), wff_ref[l],
                    preferred_element_type=jnp.float32) + bff_ref[l]
        y = _layernorm_fast(_leaky_relu(y) + x_cur, g1_ref[l], be1_ref[l])

        # output = ff2(LeakyReLU(ff1(output))) + residual ; norm2
        hdd = _leaky_relu(jnp.dot(y.astype(jnp.bfloat16), w1_ref[l],
                                  preferred_element_type=jnp.float32) + bf1_ref[l])
        z = jnp.dot(hdd.astype(jnp.bfloat16), w2_ref[l],
                    preferred_element_type=jnp.float32) + bf2_ref[l]
        return _layernorm_fast(z + y, g2_ref[l], be2_ref[l])

    if num_layers <= 4:
        # Short stacks: unrolled (better LLO scheduling visibility).
        for l in range(num_layers):
            x2d = one_layer(x2d, l)
    else:
        # Deep stacks: fori_loop + dynamic ref[l] indexing bounds vreg live ranges.
        x2d = lax.fori_loop(0, num_layers, lambda l, x: one_layer(x, l), x2d)

    if lane_dense_out:
        # Lane-dense store: (Bt*L, H) -> (1, Bt, L*H) slab (multiple of 128 lanes).
        out_ref[...] = x2d.reshape(1, Bt, L * H).astype(out_ref.dtype)
    else:
        out_ref[...] = x2d.reshape(1, R, H).astype(out_ref.dtype)


def _pick_bt(batch, seq_len, target_rows=256):
    """Largest divisor of batch with Bt*L <= ~256 rows, keeping >=2 grid steps
    when batch >= 2 so the parallel axis still shards across v7x's two cores."""
    cap = max(1, target_rows // max(seq_len, 1))
    if batch >= 2:
        cap = min(cap, batch // 2)
    best = 1
    for cand in range(1, min(cap, batch) + 1):
        if batch % cand == 0:
            best = cand
    return best


def attention_norel_block(char, mask, layer_params, num_head):
    """AttentionNoRelativeKey_Block.forward: all layers in ONE pallas_call.

    layer_params: list of per-layer 14-tuples (see init_layer_params).
    Empty list -> identity, like `layer == 0` in the reference.
    """
    if not layer_params:
        return char
    num_layers = len(layer_params)
    B, L, H = char.shape
    assert H % num_head == 0

    # ---- pack params: fuse Q|V, stack on a leading layer axis, bf16 weights.
    def stack(i, dtype):
        return jnp.stack([lp[i] for lp in layer_params], axis=0).astype(dtype)

    wqv = jnp.concatenate([stack(0, jnp.bfloat16), stack(2, jnp.bfloat16)], -1)
    bqv = jnp.concatenate([stack(1, jnp.float32), stack(3, jnp.float32)], -1)
    packed = (
        wqv, bqv,                                          # (NL,H,2H), (NL,1,2H)
        stack(4, jnp.bfloat16), stack(5, jnp.float32),     # wff, bff
        stack(6, jnp.float32), stack(7, jnp.float32),      # norm1 gamma, beta
        stack(8, jnp.bfloat16), stack(9, jnp.float32),     # ff1 w, b
        stack(10, jnp.bfloat16), stack(11, jnp.float32),   # ff2 w, b
        stack(12, jnp.float32), stack(13, jnp.float32),    # norm2 gamma, beta
    )

    bt = _pick_bt(B, L)
    steps = B // bt

    # Additive key-position mask bias (0 / -1e6), computed once per call.
    bias = jnp.where(mask, 0.0, NEG_INF).astype(jnp.float32).reshape(B, 1, L)

    # Explicit scoped-VMEM budget: weights + blocked activations + headroom.
    weight_bytes = sum(int(p.size) * p.dtype.itemsize for p in packed)
    act_bytes = bt * L * (H * 4 + 4) + bt * L * H * char.dtype.itemsize
    vmem_limit = int(min(100 * 2**20,
                         max(8 * 2**20,
                             2 * weight_bytes + 8 * act_bytes + 2 * 2**20)))

    def run(lane_dense, single_buffer):
        kernel = functools.partial(
            fused_block_kernel, num_layers=num_layers, num_head=num_head,
            seq_len=L, hidden=H, bt=bt, lane_dense_out=lane_dense)

        def wspec(p):
            nd = p.ndim
            idx = lambda b, _nd=nd: (0,) * _nd
            if single_buffer:
                # Fetched once (constant index map): single-buffer the resident
                # weight stack instead of pointlessly double-buffering it.
                return pl.BlockSpec(p.shape, idx, pipeline_mode=pl.Buffered(1))
            return pl.BlockSpec(p.shape, idx)

        if lane_dense:
            out_shape = jax.ShapeDtypeStruct((steps, bt, L * H), char.dtype)
            out_spec = pl.BlockSpec((1, bt, L * H), lambda b: (b, 0, 0))
        else:
            out_shape = jax.ShapeDtypeStruct((steps, bt * L, H), char.dtype)
            out_spec = pl.BlockSpec((1, bt * L, H), lambda b: (b, 0, 0))

        return pl.pallas_call(
            kernel,
            out_shape=out_shape,
            grid=(steps,),
            in_specs=[pl.BlockSpec((bt, L, H), lambda b: (b, 0, 0)),
                      pl.BlockSpec((bt, 1, L), lambda b: (b, 0, 0))]
                     + [wspec(p) for p in packed],
            out_specs=out_spec,
            compiler_params=pltpu.CompilerParams(
                dimension_semantics=("parallel",),
                vmem_limit_bytes=vmem_limit),
        )(char, bias, *packed)

    try:
        out = run(lane_dense=True, single_buffer=hasattr(pl, "Buffered"))
    except Exception:
        # Fallback for jax/Mosaic versions lacking single-buffered pipeline_mode
        # or the lane-merging store reshape; semantics are identical.
        out = run(lane_dense=False, single_buffer=False)

    return out.reshape(B, L, H)


# ------------------------- deterministic parameter init -------------------------

def init_layer_params(key, hidden_size):
    H = hidden_size
    ks = jax.random.split(key, 5)

    def lin(k, din, dout):
        k1, k2 = jax.random.split(k)
        w = jax.random.normal(k1, (din, dout), jnp.float32) / jnp.sqrt(jnp.float32(din))
        b = jax.random.normal(k2, (1, dout), jnp.float32) * 0.01
        return w, b

    wq, bq = lin(ks[0], H, H)
    wv, bv = lin(ks[1], H, H)
    wff, bff = lin(ks[2], H, H)
    w1, bf1 = lin(ks[3], H, 3 * H)
    w2, bf2 = lin(ks[4], 3 * H, H)
    g1, be1 = jnp.ones((1, H), jnp.float32), jnp.zeros((1, H), jnp.float32)
    g2, be2 = jnp.ones((1, H), jnp.float32), jnp.zeros((1, H), jnp.float32)
    # TODO(synk): K, KR, u, v parameters exist in the PyTorch __init__ but are
    # unused in forward(); they are intentionally not materialized here.
    return (wq, bq, wv, bv, wff, bff, g1, be1, w1, bf1, w2, bf2, g2, be2)


# ------------------------------- pure-JAX reference -------------------------------

def _ref_layernorm(x, gamma, beta):
    mu = jnp.mean(x, axis=-1, keepdims=True)
    var = jnp.mean((x - mu) ** 2, axis=-1, keepdims=True)
    return (x - mu) * lax.rsqrt(var + LN_EPS) * gamma + beta


def ref_layer(x, mask, params, num_head):
    (wq, bq, wv, bv, wff, bff, g1, be1, w1, bf1, w2, bf2, g2, be2) = params
    B, L, H = x.shape
    d = H // num_head
    q = x @ wq + bq
    v = x @ wv + bv
    qh = q.reshape(B, L, num_head, d).transpose(0, 2, 1, 3)
    kh = x.reshape(B, L, num_head, d).transpose(0, 2, 1, 3)
    vh = v.reshape(B, L, num_head, d).transpose(0, 2, 1, 3)
    attn = jnp.einsum('bhqd,bhkd->bhqk', qh, kh)
    attn = jnp.where(mask[:, None, None, :], attn, NEG_INF)   # masked_fill semantics
    attn = jax.nn.softmax(attn, axis=-1)
    o = jnp.einsum('bhqk,bhkd->bhqd', attn, vh)
    o = o.transpose(0, 2, 1, 3).reshape(B, L, H)
    y = _leaky_relu(o @ wff + bff) + x
    y = _ref_layernorm(y, g1, be1)
    z = _leaky_relu(y @ w1 + bf1) @ w2 + bf2
    z = _ref_layernorm(z + y, g2, be2)
    return z


def ref_block(char, mask, layer_params, num_head):
    for params in layer_params:
        char = ref_layer(char, mask, params, num_head)
    return char


if __name__ == "__main__":
    # conf: num_head=4, hidden_size=32, all dropout probs -> identity in eval
    B, L, H, NUM_HEAD, NUM_LAYERS = 2, 8, 32, 4, 2

    root = jax.random.PRNGKey(0)
    kx, km, *kls = jax.random.split(root, 2 + NUM_LAYERS)

    char = jax.random.normal(kx, (B, L, H), jnp.float32)
    mask = jax.random.bernoulli(km, 0.8, (B, L))
    mask = mask.at[:, 0].set(True)          # ensure at least one valid key per batch

    layer_params = [init_layer_params(k, H) for k in kls]

    out = attention_norel_block(char, mask, layer_params, NUM_HEAD)
    out = jax.block_until_ready(out)

    expected = ref_block(char, mask, layer_params, NUM_HEAD)
    assert out.shape == (B, L, H)
    # Tolerance accounts for bf16 matmul operands (f32 accumulation) vs the
    # pure-f32 reference: observed max abs error is ~1e-2 over 2 layers; 5e-2
    # bounds it with margin while real semantic bugs show O(0.1-1) deviations.
    max_err = jnp.max(jnp.abs(out - expected))
    assert jnp.allclose(out, expected, atol=5e-2, rtol=5e-2), (
        f"max abs err = {max_err}")

    print("KERNEL_OK")
</pallas_src>

<mosaic_0001>
module attributes {stable_mosaic.version = 11 : i64} {
  func.func @fused_block_kernel(%arg0: i32, %arg1: memref<1x8x32xf32, #tpu.memory_space<vmem>>, %arg2: memref<1x1x8xf32, #tpu.memory_space<vmem>>, %arg3: memref<2x32x64xbf16, #tpu.memory_space<vmem>>, %arg4: memref<2x1x64xf32, #tpu.memory_space<vmem>>, %arg5: memref<2x32x32xbf16, #tpu.memory_space<vmem>>, %arg6: memref<2x1x32xf32, #tpu.memory_space<vmem>>, %arg7: memref<2x1x32xf32, #tpu.memory_space<vmem>>, %arg8: memref<2x1x32xf32, #tpu.memory_space<vmem>>, %arg9: memref<2x32x96xbf16, #tpu.memory_space<vmem>>, %arg10: memref<2x1x96xf32, #tpu.memory_space<vmem>>, %arg11: memref<2x96x32xbf16, #tpu.memory_space<vmem>>, %arg12: memref<2x1x32xf32, #tpu.memory_space<vmem>>, %arg13: memref<2x1x32xf32, #tpu.memory_space<vmem>>, %arg14: memref<2x1x32xf32, #tpu.memory_space<vmem>>, %arg15: memref<1x1x256xf32, #tpu.memory_space<vmem>>) attributes {dimension_semantics = [#tpu.dimension_semantics<parallel>], iteration_bounds = array<i64: 2>, scalar_prefetch = 0 : i64, scratch_operands = 0 : i64, tpu.core_type = #tpu.core_type<tc>, window_params = [{transform_indices = @transform_0, window_bounds = array<i64: 1, 8, 32>}, {transform_indices = @transform_1, window_bounds = array<i64: 1, 1, 8>}, {pipeline_mode = #tpu.pipeline_mode<synchronous>, transform_indices = @transform_2, window_bounds = array<i64: 2, 32, 64>}, {pipeline_mode = #tpu.pipeline_mode<synchronous>, transform_indices = @transform_3, window_bounds = array<i64: 2, 1, 64>}, {pipeline_mode = #tpu.pipeline_mode<synchronous>, transform_indices = @transform_4, window_bounds = array<i64: 2, 32, 32>}, {pipeline_mode = #tpu.pipeline_mode<synchronous>, transform_indices = @transform_5, window_bounds = array<i64: 2, 1, 32>}, {pipeline_mode = #tpu.pipeline_mode<synchronous>, transform_indices = @transform_6, window_bounds = array<i64: 2, 1, 32>}, {pipeline_mode = #tpu.pipeline_mode<synchronous>, transform_indices = @transform_7, window_bounds = array<i64: 2, 1, 32>}, {pipeline_mode = #tpu.pipeline_mode<synchronous>, transform_indices = @transform_8, window_bounds = array<i64: 2, 32, 96>}, {pipeline_mode = #tpu.pipeline_mode<synchronous>, transform_indices = @transform_9, window_bounds = array<i64: 2, 1, 96>}, {pipeline_mode = #tpu.pipeline_mode<synchronous>, transform_indices = @transform_10, window_bounds = array<i64: 2, 96, 32>}, {pipeline_mode = #tpu.pipeline_mode<synchronous>, transform_indices = @transform_11, window_bounds = array<i64: 2, 1, 32>}, {pipeline_mode = #tpu.pipeline_mode<synchronous>, transform_indices = @transform_12, window_bounds = array<i64: 2, 1, 32>}, {pipeline_mode = #tpu.pipeline_mode<synchronous>, transform_indices = @transform_13, window_bounds = array<i64: 2, 1, 32>}, {transform_indices = @transform_14, window_bounds = array<i64: 1, 1, 256>}]} {
    %c0 = arith.constant 0 : index
    %c0_0 = arith.constant 0 : index
    %c0_1 = arith.constant 0 : index
    %0 = vector.load %arg1[%c0, %c0_0, %c0_1] : memref<1x8x32xf32, #tpu.memory_space<vmem>>, vector<1x8x32xf32>
    %1 = vector.shape_cast %0 : vector<1x8x32xf32> to vector<8x32xf32>
    %c0_2 = arith.constant 0 : index
    %c0_3 = arith.constant 0 : index
    %c0_4 = arith.constant 0 : index
    %2 = vector.load %arg2[%c0_2, %c0_3, %c0_4] : memref<1x1x8xf32, #tpu.memory_space<vmem>>, vector<1x1x8xf32>
    %3 = vector.shape_cast %2 : vector<1x1x8xf32> to vector<1x1x1x8xf32>
    %4 = vector.shape_cast %3 : vector<1x1x1x8xf32> to vector<1x1x1x8xf32>
    %5 = vector.broadcast %4 : vector<1x1x1x8xf32> to vector<4x1x8x8xf32>
    %6 = vector.shape_cast %5 : vector<4x1x8x8xf32> to vector<4x8x8xf32>
    %7 = arith.truncf %1 : vector<8x32xf32> to vector<8x32xbf16>
    %c0_5 = arith.constant 0 : index
    %c0_6 = arith.constant 0 : index
    %c0_7 = arith.constant 0 : index
    %8 = vector.load %arg3[%c0_5, %c0_6, %c0_7] : memref<2x32x64xbf16, #tpu.memory_space<vmem>>, vector<1x32x64xbf16>
    %9 = vector.shape_cast %8 : vector<1x32x64xbf16> to vector<32x64xbf16>
    %cst = arith.constant dense<0.000000e+00> : vector<8x64xf32>
    %10 = tpu.matmul %7, %9, %cst {dimension_numbers = #tpu.dot_dimension_numbers<[1], [0], [0], [1], [0, 0, 1, 1], [], []>} : vector<8x32xbf16>, vector<32x64xbf16>, vector<8x64xf32> -> vector<8x64xf32>
    %c0_8 = arith.constant 0 : index
    %c0_9 = arith.constant 0 : index
    %c0_10 = arith.constant 0 : index
    %11 = vector.load %arg4[%c0_8, %c0_9, %c0_10] : memref<2x1x64xf32, #tpu.memory_space<vmem>>, vector<1x1x64xf32>
    %12 = vector.shape_cast %11 : vector<1x1x64xf32> to vector<1x64xf32>
    %13 = vector.broadcast %12 : vector<1x64xf32> to vector<8x64xf32>
    %14 = arith.addf %10, %13 : vector<8x64xf32>
    %15 = vector.extract_strided_slice %14 {offsets = [0, 0], sizes = [8, 8], strides = [1, 1]} : vector<8x64xf32> to vector<8x8xf32>
    %16 = vector.shape_cast %15 : vector<8x8xf32> to vector<1x8x8xf32>
    %17 = vector.extract_strided_slice %14 {offsets = [0, 8], sizes = [8, 8], strides = [1, 1]} : vector<8x64xf32> to vector<8x8xf32>
    %18 = vector.shape_cast %17 : vector<8x8xf32> to vector<1x8x8xf32>
    %19 = vector.extract_strided_slice %14 {offsets = [0, 16], sizes = [8, 8], strides = [1, 1]} : vector<8x64xf32> to vector<8x8xf32>
    %20 = vector.shape_cast %19 : vector<8x8xf32> to vector<1x8x8xf32>
    %21 = vector.extract_strided_slice %14 {offsets = [0, 24], sizes = [8, 8], strides = [1, 1]} : vector<8x64xf32> to vector<8x8xf32>
    %22 = vector.shape_cast %21 : vector<8x8xf32> to vector<1x8x8xf32>
    %23 = vector.shape_cast %16 : vector<1x8x8xf32> to vector<1x1x8x8xf32>
    %24 = vector.shape_cast %18 : vector<1x8x8xf32> to vector<1x1x8x8xf32>
    %25 = vector.shape_cast %20 : vector<1x8x8xf32> to vector<1x1x8x8xf32>
    %26 = vector.shape_cast %22 : vector<1x8x8xf32> to vector<1x1x8x8xf32>
    %27 = tpu.concatenate %23, %24, %25, %26 in 0 : vector<1x1x8x8xf32>, vector<1x1x8x8xf32>, vector<1x1x8x8xf32>, vector<1x1x8x8xf32> -> vector<4x1x8x8xf32>
    %28 = vector.shape_cast %27 : vector<4x1x8x8xf32> to vector<4x8x8xf32>
    %29 = arith.truncf %28 : vector<4x8x8xf32> to vector<4x8x8xbf16>
    %30 = vector.extract_strided_slice %14 {offsets = [0, 32], sizes = [8, 8], strides = [1, 1]} : vector<8x64xf32> to vector<8x8xf32>
    %31 = vector.shape_cast %30 : vector<8x8xf32> to vector<1x8x8xf32>
    %32 = vector.extract_strided_slice %14 {offsets = [0, 40], sizes = [8, 8], strides = [1, 1]} : vector<8x64xf32> to vector<8x8xf32>
    %33 = vector.shape_cast %32 : vector<8x8xf32> to vector<1x8x8xf32>
    %34 = vector.extract_strided_slice %14 {offsets = [0, 48], sizes = [8, 8], strides = [1, 1]} : vector<8x64xf32> to vector<8x8xf32>
    %35 = vector.shape_cast %34 : vector<8x8xf32> to vector<1x8x8xf32>
    %36 = vector.extract_strided_slice %14 {offsets = [0, 56], sizes = [8, 8], strides = [1, 1]} : vector<8x64xf32> to vector<8x8xf32>
    %37 = vector.shape_cast %36 : vector<8x8xf32> to vector<1x8x8xf32>
    %38 = vector.shape_cast %31 : vector<1x8x8xf32> to vector<1x1x8x8xf32>
    %39 = vector.shape_cast %33 : vector<1x8x8xf32> to vector<1x1x8x8xf32>
    %40 = vector.shape_cast %35 : vector<1x8x8xf32> to vector<1x1x8x8xf32>
    %41 = vector.shape_cast %37 : vector<1x8x8xf32> to vector<1x1x8x8xf32>
    %42 = tpu.concatenate %38, %39, %40, %41 in 0 : vector<1x1x8x8xf32>, vector<1x1x8x8xf32>, vector<1x1x8x8xf32>, vector<1x1x8x8xf32> -> vector<4x1x8x8xf32>
    %43 = vector.shape_cast %42 : vector<4x1x8x8xf32> to vector<4x8x8xf32>
    %44 = arith.truncf %43 : vector<4x8x8xf32> to vector<4x8x8xbf16>
    %45 = vector.extract_strided_slice %1 {offsets = [0, 0], sizes = [8, 8], strides = [1, 1]} : vector<8x32xf32> to vector<8x8xf32>
    %46 = vector.shape_cast %45 : vector<8x8xf32> to vector<1x8x8xf32>
    %47 = vector.extract_strided_slice %1 {offsets = [0, 8], sizes = [8, 8], strides = [1, 1]} : vector<8x32xf32> to vector<8x8xf32>
    %48 = vector.shape_cast %47 : vector<8x8xf32> to vector<1x8x8xf32>
    %49 = vector.extract_strided_slice %1 {offsets = [0, 16], sizes = [8, 8], strides = [1, 1]} : vector<8x32xf32> to vector<8x8xf32>
    %50 = vector.shape_cast %49 : vector<8x8xf32> to vector<1x8x8xf32>
    %51 = vector.extract_strided_slice %1 {offsets = [0, 24], sizes = [8, 8], strides = [1, 1]} : vector<8x32xf32> to vector<8x8xf32>
    %52 = vector.shape_cast %51 : vector<8x8xf32> to vector<1x8x8xf32>
    %53 = vector.shape_cast %46 : vector<1x8x8xf32> to vector<1x1x8x8xf32>
    %54 = vector.shape_cast %48 : vector<1x8x8xf32> to vector<1x1x8x8xf32>
    %55 = vector.shape_cast %50 : vector<1x8x8xf32> to vector<1x1x8x8xf32>
    %56 = vector.shape_cast %52 : vector<1x8x8xf32> to vector<1x1x8x8xf32>
    %57 = tpu.concatenate %53, %54, %55, %56 in 0 : vector<1x1x8x8xf32>, vector<1x1x8x8xf32>, vector<1x1x8x8xf32>, vector<1x1x8x8xf32> -> vector<4x1x8x8xf32>
    %58 = vector.shape_cast %57 : vector<4x1x8x8xf32> to vector<4x8x8xf32>
    %59 = arith.truncf %58 : vector<4x8x8xf32> to vector<4x8x8xbf16>
    "tpu.trace_start"() <{level = 10 : i32, message = "gqd,gkd->gqk"}> : () -> ()
    %cst_11 = arith.constant dense<0.000000e+00> : vector<4x8x8xf32>
    %60 = tpu.matmul %29, %59, %cst_11 {dimension_numbers = #tpu.dot_dimension_numbers<[2], [2], [1], [1], [0, 0, 0, 1, 1, 1], [0], [0]>} : vector<4x8x8xbf16>, vector<4x8x8xbf16>, vector<4x8x8xf32> -> vector<4x8x8xf32>
    "tpu.trace_stop"() : () -> ()
    %61 = arith.addf %60, %6 : vector<4x8x8xf32>
    %cst_12 = arith.constant dense<0xFF800000> : vector<4x8xf32>
    %62 = vector.multi_reduction <maximumf>, %61, %cst_12 [2] : vector<4x8x8xf32> to vector<4x8xf32>
    %63 = vector.shape_cast %62 : vector<4x8xf32> to vector<4x8x1xf32>
    %64 = vector.broadcast %63 : vector<4x8x1xf32> to vector<4x8x8xf32>
    %65 = arith.subf %61, %64 : vector<4x8x8xf32>
    %66 = math.exp %65 : vector<4x8x8xf32>
    %cst_13 = arith.constant dense<0.000000e+00> : vector<4x8xf32>
    %67 = vector.multi_reduction <add>, %66, %cst_13 [2] : vector<4x8x8xf32> to vector<4x8xf32>
    %68 = vector.shape_cast %67 : vector<4x8xf32> to vector<4x8x1xf32>
    %69 = vector.broadcast %68 : vector<4x8x1xf32> to vector<4x8x8xf32>
    %70 = arith.divf %66, %69 : vector<4x8x8xf32>
    %71 = arith.truncf %70 : vector<4x8x8xf32> to vector<4x8x8xbf16>
    "tpu.trace_start"() <{level = 10 : i32, message = "gqk,gkd->gqd"}> : () -> ()
    %cst_14 = arith.constant dense<0.000000e+00> : vector<4x8x8xf32>
    %72 = tpu.matmul %71, %44, %cst_14 {dimension_numbers = #tpu.dot_dimension_numbers<[2], [1], [1], [2], [0, 0, 0, 1, 1, 2], [0], [0]>} : vector<4x8x8xbf16>, vector<4x8x8xbf16>, vector<4x8x8xf32> -> vector<4x8x8xf32>
    "tpu.trace_stop"() : () -> ()
    %73 = vector.shape_cast %72 : vector<4x8x8xf32> to vector<4x1x8x8xf32>
    %74 = vector.extract_strided_slice %73 {offsets = [0, 0, 0, 0], sizes = [1, 1, 8, 8], strides = [1, 1, 1, 1]} : vector<4x1x8x8xf32> to vector<1x1x8x8xf32>
    %75 = vector.shape_cast %74 : vector<1x1x8x8xf32> to vector<1x8x8xf32>
    %76 = vector.shape_cast %75 : vector<1x8x8xf32> to vector<8x8xf32>
    %77 = vector.extract_strided_slice %73 {offsets = [1, 0, 0, 0], sizes = [1, 1, 8, 8], strides = [1, 1, 1, 1]} : vector<4x1x8x8xf32> to vector<1x1x8x8xf32>
    %78 = vector.shape_cast %77 : vector<1x1x8x8xf32> to vector<1x8x8xf32>
    %79 = vector.shape_cast %78 : vector<1x8x8xf32> to vector<8x8xf32>
    %80 = vector.extract_strided_slice %73 {offsets = [2, 0, 0, 0], sizes = [1, 1, 8, 8], strides = [1, 1, 1, 1]} : vector<4x1x8x8xf32> to vector<1x1x8x8xf32>
    %81 = vector.shape_cast %80 : vector<1x1x8x8xf32> to vector<1x8x8xf32>
    %82 = vector.shape_cast %81 : vector<1x8x8xf32> to vector<8x8xf32>
    %83 = vector.extract_strided_slice %73 {offsets = [3, 0, 0, 0], sizes = [1, 1, 8, 8], strides = [1, 1, 1, 1]} : vector<4x1x8x8xf32> to vector<1x1x8x8xf32>
    %84 = vector.shape_cast %83 : vector<1x1x8x8xf32> to vector<1x8x8xf32>
    %85 = vector.shape_cast %84 : vector<1x8x8xf32> to vector<8x8xf32>
    %86 = tpu.concatenate %76, %79, %82, %85 in 1 : vector<8x8xf32>, vector<8x8xf32>, vector<8x8xf32>, vector<8x8xf32> -> vector<8x32xf32>
    %87 = arith.truncf %86 : vector<8x32xf32> to vector<8x32xbf16>
    %c0_15 = arith.constant 0 : index
    %c0_16 = arith.constant 0 : index
    %c0_17 = arith.constant 0 : index
    %88 = vector.load %arg5[%c0_15, %c0_16, %c0_17] : memref<2x32x32xbf16, #tpu.memory_space<vmem>>, vector<1x32x32xbf16>
    %89 = vector.shape_cast %88 : vector<1x32x32xbf16> to vector<32x32xbf16>
    %cst_18 = arith.constant dense<0.000000e+00> : vector<8x32xf32>
    %90 = tpu.matmul %87, %89, %cst_18 {dimension_numbers = #tpu.dot_dimension_numbers<[1], [0], [0], [1], [0, 0, 1, 1], [], []>} : vector<8x32xbf16>, vector<32x32xbf16>, vector<8x32xf32> -> vector<8x32xf32>
    %c0_19 = arith.constant 0 : index
    %c0_20 = arith.constant 0 : index
    %c0_21 = arith.constant 0 : index
    %91 = vector.load %arg6[%c0_19, %c0_20, %c0_21] : memref<2x1x32xf32, #tpu.memory_space<vmem>>, vector<1x1x32xf32>
    %92 = vector.shape_cast %91 : vector<1x1x32xf32> to vector<1x32xf32>
    %93 = vector.broadcast %92 : vector<1x32xf32> to vector<8x32xf32>
    %94 = arith.addf %90, %93 : vector<8x32xf32>
    %cst_22 = arith.constant 0.000000e+00 : f32
    %95 = vector.broadcast %cst_22 : f32 to vector<8x32xf32>
    %96 = arith.cmpf oge, %94, %95 : vector<8x32xf32>
    %cst_23 = arith.constant 0.00999999977 : f32
    %97 = vector.broadcast %cst_23 : f32 to vector<8x32xf32>
    %98 = arith.mulf %97, %94 : vector<8x32xf32>
    %99 = arith.select %96, %94, %98 : vector<8x32xi1>, vector<8x32xf32>
    %100 = arith.addf %99, %1 : vector<8x32xf32>
    %c0_24 = arith.constant 0 : index
    %c0_25 = arith.constant 0 : index
    %c0_26 = arith.constant 0 : index
    %101 = vector.load %arg7[%c0_24, %c0_25, %c0_26] : memref<2x1x32xf32, #tpu.memory_space<vmem>>, vector<1x1x32xf32>
    %102 = vector.shape_cast %101 : vector<1x1x32xf32> to vector<1x32xf32>
    %c0_27 = arith.constant 0 : index
    %c0_28 = arith.constant 0 : index
    %c0_29 = arith.constant 0 : index
    %103 = vector.load %arg8[%c0_27, %c0_28, %c0_29] : memref<2x1x32xf32, #tpu.memory_space<vmem>>, vector<1x1x32xf32>
    %104 = vector.shape_cast %103 : vector<1x1x32xf32> to vector<1x32xf32>
    %cst_30 = arith.constant dense<0.000000e+00> : vector<8xf32>
    %105 = vector.multi_reduction <add>, %100, %cst_30 [1] : vector<8x32xf32> to vector<8xf32>
    %106 = vector.shape_cast %105 : vector<8xf32> to vector<8x1xf32>
    %cst_31 = arith.constant 3.200000e+01 : f32
    %107 = vector.broadcast %cst_31 : f32 to vector<8x1xf32>
    %108 = arith.divf %106, %107 : vector<8x1xf32>
    %109 = arith.mulf %100, %100 : vector<8x32xf32>
    %cst_32 = arith.constant dense<0.000000e+00> : vector<8xf32>
    %110 = vector.multi_reduction <add>, %109, %cst_32 [1] : vector<8x32xf32> to vector<8xf32>
    %111 = vector.shape_cast %110 : vector<8xf32> to vector<8x1xf32>
    %cst_33 = arith.constant 3.200000e+01 : f32
    %112 = vector.broadcast %cst_33 : f32 to vector<8x1xf32>
    %113 = arith.divf %111, %112 : vector<8x1xf32>
    %114 = arith.mulf %108, %108 : vector<8x1xf32>
    %115 = arith.subf %113, %114 : vector<8x1xf32>
    %cst_34 = arith.constant 0.000000e+00 : f32
    %116 = vector.broadcast %cst_34 : f32 to vector<8x1xf32>
    %117 = arith.maximumf %115, %116 : vector<8x1xf32>
    %118 = vector.broadcast %108 : vector<8x1xf32> to vector<8x32xf32>
    %119 = arith.subf %100, %118 : vector<8x32xf32>
    %cst_35 = arith.constant 9.99999974E-6 : f32
    %120 = vector.broadcast %cst_35 : f32 to vector<8x1xf32>
    %121 = arith.addf %117, %120 : vector<8x1xf32>
    %122 = math.rsqrt %121 : vector<8x1xf32>
    %123 = vector.broadcast %122 : vector<8x1xf32> to vector<8x32xf32>
    %124 = arith.mulf %119, %123 : vector<8x32xf32>
    %125 = vector.broadcast %102 : vector<1x32xf32> to vector<8x32xf32>
    %126 = arith.mulf %124, %125 : vector<8x32xf32>
    %127 = vector.broadcast %104 : vector<1x32xf32> to vector<8x32xf32>
    %128 = arith.addf %126, %127 : vector<8x32xf32>
    %129 = arith.truncf %128 : vector<8x32xf32> to vector<8x32xbf16>
    %c0_36 = arith.constant 0 : index
    %c0_37 = arith.constant 0 : index
    %c0_38 = arith.constant 0 : index
    %130 = vector.load %arg9[%c0_36, %c0_37, %c0_38] : memref<2x32x96xbf16, #tpu.memory_space<vmem>>, vector<1x32x96xbf16>
    %131 = vector.shape_cast %130 : vector<1x32x96xbf16> to vector<32x96xbf16>
    %cst_39 = arith.constant dense<0.000000e+00> : vector<8x96xf32>
    %132 = tpu.matmul %129, %131, %cst_39 {dimension_numbers = #tpu.dot_dimension_numbers<[1], [0], [0], [1], [0, 0, 1, 1], [], []>} : vector<8x32xbf16>, vector<32x96xbf16>, vector<8x96xf32> -> vector<8x96xf32>
    %c0_40 = arith.constant 0 : index
    %c0_41 = arith.constant 0 : index
    %c0_42 = arith.constant 0 : index
    %133 = vector.load %arg10[%c0_40, %c0_41, %c0_42] : memref<2x1x96xf32, #tpu.memory_space<vmem>>, vector<1x1x96xf32>
    %134 = vector.shape_cast %133 : vector<1x1x96xf32> to vector<1x96xf32>
    %135 = vector.broadcast %134 : vector<1x96xf32> to vector<8x96xf32>
    %136 = arith.addf %132, %135 : vector<8x96xf32>
    %cst_43 = arith.constant 0.000000e+00 : f32
    %137 = vector.broadcast %cst_43 : f32 to vector<8x96xf32>
    %138 = arith.cmpf oge, %136, %137 : vector<8x96xf32>
    %cst_44 = arith.constant 0.00999999977 : f32
    %139 = vector.broadcast %cst_44 : f32 to vector<8x96xf32>
    %140 = arith.mulf %139, %136 : vector<8x96xf32>
    %141 = arith.select %138, %136, %140 : vector<8x96xi1>, vector<8x96xf32>
    %142 = arith.truncf %141 : vector<8x96xf32> to vector<8x96xbf16>
    %c0_45 = arith.constant 0 : index
    %c0_46 = arith.constant 0 : index
    %c0_47 = arith.constant 0 : index
    %143 = vector.load %arg11[%c0_45, %c0_46, %c0_47] : memref<2x96x32xbf16, #tpu.memory_space<vmem>>, vector<1x96x32xbf16>
    %144 = vector.shape_cast %143 : vector<1x96x32xbf16> to vector<96x32xbf16>
    %cst_48 = arith.constant dense<0.000000e+00> : vector<8x32xf32>
    %145 = tpu.matmul %142, %144, %cst_48 {dimension_numbers = #tpu.dot_dimension_numbers<[1], [0], [0], [1], [0, 0, 1, 1], [], []>} : vector<8x96xbf16>, vector<96x32xbf16>, vector<8x32xf32> -> vector<8x32xf32>
    %c0_49 = arith.constant 0 : index
    %c0_50 = arith.constant 0 : index
    %c0_51 = arith.constant 0 : index
    %146 = vector.load %arg12[%c0_49, %c0_50, %c0_51] : memref<2x1x32xf32, #tpu.memory_space<vmem>>, vector<1x1x32xf32>
    %147 = vector.shape_cast %146 : vector<1x1x32xf32> to vector<1x32xf32>
    %148 = vector.broadcast %147 : vector<1x32xf32> to vector<8x32xf32>
    %149 = arith.addf %145, %148 : vector<8x32xf32>
    %150 = arith.addf %149, %128 : vector<8x32xf32>
    %c0_52 = arith.constant 0 : index
    %c0_53 = arith.constant 0 : index
    %c0_54 = arith.constant 0 : index
    %151 = vector.load %arg13[%c0_52, %c0_53, %c0_54] : memref<2x1x32xf32, #tpu.memory_space<vmem>>, vector<1x1x32xf32>
    %152 = vector.shape_cast %151 : vector<1x1x32xf32> to vector<1x32xf32>
    %c0_55 = arith.constant 0 : index
    %c0_56 = arith.constant 0 : index
    %c0_57 = arith.constant 0 : index
    %153 = vector.load %arg14[%c0_55, %c0_56, %c0_57] : memref<2x1x32xf32, #tpu.memory_space<vmem>>, vector<1x1x32xf32>
    %154 = vector.shape_cast %153 : vector<1x1x32xf32> to vector<1x32xf32>
    %cst_58 = arith.constant dense<0.000000e+00> : vector<8xf32>
    %155 = vector.multi_reduction <add>, %150, %cst_58 [1] : vector<8x32xf32> to vector<8xf32>
    %156 = vector.shape_cast %155 : vector<8xf32> to vector<8x1xf32>
    %cst_59 = arith.constant 3.200000e+01 : f32
    %157 = vector.broadcast %cst_59 : f32 to vector<8x1xf32>
    %158 = arith.divf %156, %157 : vector<8x1xf32>
    %159 = arith.mulf %150, %150 : vector<8x32xf32>
    %cst_60 = arith.constant dense<0.000000e+00> : vector<8xf32>
    %160 = vector.multi_reduction <add>, %159, %cst_60 [1] : vector<8x32xf32> to vector<8xf32>
    %161 = vector.shape_cast %160 : vector<8xf32> to vector<8x1xf32>
    %cst_61 = arith.constant 3.200000e+01 : f32
    %162 = vector.broadcast %cst_61 : f32 to vector<8x1xf32>
    %163 = arith.divf %161, %162 : vector<8x1xf32>
    %164 = arith.mulf %158, %158 : vector<8x1xf32>
    %165 = arith.subf %163, %164 : vector<8x1xf32>
    %cst_62 = arith.constant 0.000000e+00 : f32
    %166 = vector.broadcast %cst_62 : f32 to vector<8x1xf32>
    %167 = arith.maximumf %165, %166 : vector<8x1xf32>
    %168 = vector.broadcast %158 : vector<8x1xf32> to vector<8x32xf32>
    %169 = arith.subf %150, %168 : vector<8x32xf32>
    %cst_63 = arith.constant 9.99999974E-6 : f32
    %170 = vector.broadcast %cst_63 : f32 to vector<8x1xf32>
    %171 = arith.addf %167, %170 : vector<8x1xf32>
    %172 = math.rsqrt %171 : vector<8x1xf32>
    %173 = vector.broadcast %172 : vector<8x1xf32> to vector<8x32xf32>
    %174 = arith.mulf %169, %173 : vector<8x32xf32>
    %175 = vector.broadcast %152 : vector<1x32xf32> to vector<8x32xf32>
    %176 = arith.mulf %174, %175 : vector<8x32xf32>
    %177 = vector.broadcast %154 : vector<1x32xf32> to vector<8x32xf32>
    %178 = arith.addf %176, %177 : vector<8x32xf32>
    %179 = arith.truncf %178 : vector<8x32xf32> to vector<8x32xbf16>
    %c1 = arith.constant 1 : index
    %c0_64 = arith.constant 0 : index
    %c0_65 = arith.constant 0 : index
    %180 = vector.load %arg3[%c1, %c0_64, %c0_65] : memref<2x32x64xbf16, #tpu.memory_space<vmem>>, vector<1x32x64xbf16>
    %181 = vector.shape_cast %180 : vector<1x32x64xbf16> to vector<32x64xbf16>
    %cst_66 = arith.constant dense<0.000000e+00> : vector<8x64xf32>
    %182 = tpu.matmul %179, %181, %cst_66 {dimension_numbers = #tpu.dot_dimension_numbers<[1], [0], [0], [1], [0, 0, 1, 1], [], []>} : vector<8x32xbf16>, vector<32x64xbf16>, vector<8x64xf32> -> vector<8x64xf32>
    %c1_67 = arith.constant 1 : index
    %c0_68 = arith.constant 0 : index
    %c0_69 = arith.constant 0 : index
    %183 = vector.load %arg4[%c1_67, %c0_68, %c0_69] : memref<2x1x64xf32, #tpu.memory_space<vmem>>, vector<1x1x64xf32>
    %184 = vector.shape_cast %183 : vector<1x1x64xf32> to vector<1x64xf32>
    %185 = vector.broadcast %184 : vector<1x64xf32> to vector<8x64xf32>
    %186 = arith.addf %182, %185 : vector<8x64xf32>
    %187 = vector.extract_strided_slice %186 {offsets = [0, 0], sizes = [8, 8], strides = [1, 1]} : vector<8x64xf32> to vector<8x8xf32>
    %188 = vector.shape_cast %187 : vector<8x8xf32> to vector<1x8x8xf32>
    %189 = vector.extract_strided_slice %186 {offsets = [0, 8], sizes = [8, 8], strides = [1, 1]} : vector<8x64xf32> to vector<8x8xf32>
    %190 = vector.shape_cast %189 : vector<8x8xf32> to vector<1x8x8xf32>
    %191 = vector.extract_strided_slice %186 {offsets = [0, 16], sizes = [8, 8], strides = [1, 1]} : vector<8x64xf32> to vector<8x8xf32>
    %192 = vector.shape_cast %191 : vector<8x8xf32> to vector<1x8x8xf32>
    %193 = vector.extract_strided_slice %186 {offsets = [0, 24], sizes = [8, 8], strides = [1, 1]} : vector<8x64xf32> to vector<8x8xf32>
    %194 = vector.shape_cast %193 : vector<8x8xf32> to vector<1x8x8xf32>
    %195 = vector.shape_cast %188 : vector<1x8x8xf32> to vector<1x1x8x8xf32>
    %196 = vector.shape_cast %190 : vector<1x8x8xf32> to vector<1x1x8x8xf32>
    %197 = vector.shape_cast %192 : vector<1x8x8xf32> to vector<1x1x8x8xf32>
    %198 = vector.shape_cast %194 : vector<1x8x8xf32> to vector<1x1x8x8xf32>
    %199 = tpu.concatenate %195, %196, %197, %198 in 0 : vector<1x1x8x8xf32>, vector<1x1x8x8xf32>, vector<1x1x8x8xf32>, vector<1x1x8x8xf32> -> vector<4x1x8x8xf32>
    %200 = vector.shape_cast %199 : vector<4x1x8x8xf32> to vector<4x8x8xf32>
    %201 = arith.truncf %200 : vector<4x8x8xf32> to vector<4x8x8xbf16>
    %202 = vector.extract_strided_slice %186 {offsets = [0, 32], sizes = [8, 8], strides = [1, 1]} : vector<8x64xf32> to vector<8x8xf32>
    %203 = vector.shape_cast %202 : vector<8x8xf32> to vector<1x8x8xf32>
    %204 = vector.extract_strided_slice %186 {offsets = [0, 40], sizes = [8, 8], strides = [1, 1]} : vector<8x64xf32> to vector<8x8xf32>
    %205 = vector.shape_cast %204 : vector<8x8xf32> to vector<1x8x8xf32>
    %206 = vector.extract_strided_slice %186 {offsets = [0, 48], sizes = [8, 8], strides = [1, 1]} : vector<8x64xf32> to vector<8x8xf32>
    %207 = vector.shape_cast %206 : vector<8x8xf32> to vector<1x8x8xf32>
    %208 = vector.extract_strided_slice %186 {offsets = [0, 56], sizes = [8, 8], strides = [1, 1]} : vector<8x64xf32> to vector<8x8xf32>
    %209 = vector.shape_cast %208 : vector<8x8xf32> to vector<1x8x8xf32>
    %210 = vector.shape_cast %203 : vector<1x8x8xf32> to vector<1x1x8x8xf32>
    %211 = vector.shape_cast %205 : vector<1x8x8xf32> to vector<1x1x8x8xf32>
    %212 = vector.shape_cast %207 : vector<1x8x8xf32> to vector<1x1x8x8xf32>
    %213 = vector.shape_cast %209 : vector<1x8x8xf32> to vector<1x1x8x8xf32>
    %214 = tpu.concatenate %210, %211, %212, %213 in 0 : vector<1x1x8x8xf32>, vector<1x1x8x8xf32>, vector<1x1x8x8xf32>, vector<1x1x8x8xf32> -> vector<4x1x8x8xf32>
    %215 = vector.shape_cast %214 : vector<4x1x8x8xf32> to vector<4x8x8xf32>
    %216 = arith.truncf %215 : vector<4x8x8xf32> to vector<4x8x8xbf16>
    %217 = vector.extract_strided_slice %178 {offsets = [0, 0], sizes = [8, 8], strides = [1, 1]} : vector<8x32xf32> to vector<8x8xf32>
    %218 = vector.shape_cast %217 : vector<8x8xf32> to vector<1x8x8xf32>
    %219 = vector.extract_strided_slice %178 {offsets = [0, 8], sizes = [8, 8], strides = [1, 1]} : vector<8x32xf32> to vector<8x8xf32>
    %220 = vector.shape_cast %219 : vector<8x8xf32> to vector<1x8x8xf32>
    %221 = vector.extract_strided_slice %178 {offsets = [0, 16], sizes = [8, 8], strides = [1, 1]} : vector<8x32xf32> to vector<8x8xf32>
    %222 = vector.shape_cast %221 : vector<8x8xf32> to vector<1x8x8xf32>
    %223 = vector.extract_strided_slice %178 {offsets = [0, 24], sizes = [8, 8], strides = [1, 1]} : vector<8x32xf32> to vector<8x8xf32>
    %224 = vector.shape_cast %223 : vector<8x8xf32> to vector<1x8x8xf32>
    %225 = vector.shape_cast %218 : vector<1x8x8xf32> to vector<1x1x8x8xf32>
    %226 = vector.shape_cast %220 : vector<1x8x8xf32> to vector<1x1x8x8xf32>
    %227 = vector.shape_cast %222 : vector<1x8x8xf32> to vector<1x1x8x8xf32>
    %228 = vector.shape_cast %224 : vector<1x8x8xf32> to vector<1x1x8x8xf32>
    %229 = tpu.concatenate %225, %226, %227, %228 in 0 : vector<1x1x8x8xf32>, vector<1x1x8x8xf32>, vector<1x1x8x8xf32>, vector<1x1x8x8xf32> -> vector<4x1x8x8xf32>
    %230 = vector.shape_cast %229 : vector<4x1x8x8xf32> to vector<4x8x8xf32>
    %231 = arith.truncf %230 : vector<4x8x8xf32> to vector<4x8x8xbf16>
    "tpu.trace_start"() <{level = 10 : i32, message = "gqd,gkd->gqk"}> : () -> ()
    %cst_70 = arith.constant dense<0.000000e+00> : vector<4x8x8xf32>
    %232 = tpu.matmul %201, %231, %cst_70 {dimension_numbers = #tpu.dot_dimension_numbers<[2], [2], [1], [1], [0, 0, 0, 1, 1, 1], [0], [0]>} : vector<4x8x8xbf16>, vector<4x8x8xbf16>, vector<4x8x8xf32> -> vector<4x8x8xf32>
    "tpu.trace_stop"() : () -> ()
    %233 = arith.addf %232, %6 : vector<4x8x8xf32>
    %cst_71 = arith.constant dense<0xFF800000> : vector<4x8xf32>
    %234 = vector.multi_reduction <maximumf>, %233, %cst_71 [2] : vector<4x8x8xf32> to vector<4x8xf32>
    %235 = vector.shape_cast %234 : vector<4x8xf32> to vector<4x8x1xf32>
    %236 = vector.broadcast %235 : vector<4x8x1xf32> to vector<4x8x8xf32>
    %237 = arith.subf %233, %236 : vector<4x8x8xf32>
    %238 = math.exp %237 : vector<4x8x8xf32>
    %cst_72 = arith.constant dense<0.000000e+00> : vector<4x8xf32>
    %239 = vector.multi_reduction <add>, %238, %cst_72 [2] : vector<4x8x8xf32> to vector<4x8xf32>
    %240 = vector.shape_cast %239 : vector<4x8xf32> to vector<4x8x1xf32>
    %241 = vector.broadcast %240 : vector<4x8x1xf32> to vector<4x8x8xf32>
    %242 = arith.divf %238, %241 : vector<4x8x8xf32>
    %243 = arith.truncf %242 : vector<4x8x8xf32> to vector<4x8x8xbf16>
    "tpu.trace_start"() <{level = 10 : i32, message = "gqk,gkd->gqd"}> : () -> ()
    %cst_73 = arith.constant dense<0.000000e+00> : vector<4x8x8xf32>
    %244 = tpu.matmul %243, %216, %cst_73 {dimension_numbers = #tpu.dot_dimension_numbers<[2], [1], [1], [2], [0, 0, 0, 1, 1, 2], [0], [0]>} : vector<4x8x8xbf16>, vector<4x8x8xbf16>, vector<4x8x8xf32> -> vector<4x8x8xf32>
    "tpu.trace_stop"() : () -> ()
    %245 = vector.shape_cast %244 : vector<4x8x8xf32> to vector<4x1x8x8xf32>
    %246 = vector.extract_strided_slice %245 {offsets = [0, 0, 0, 0], sizes = [1, 1, 8, 8], strides = [1, 1, 1, 1]} : vector<4x1x8x8xf32> to vector<1x1x8x8xf32>
    %247 = vector.shape_cast %246 : vector<1x1x8x8xf32> to vector<1x8x8xf32>
    %248 = vector.shape_cast %247 : vector<1x8x8xf32> to vector<8x8xf32>
    %249 = vector.extract_strided_slice %245 {offsets = [1, 0, 0, 0], sizes = [1, 1, 8, 8], strides = [1, 1, 1, 1]} : vector<4x1x8x8xf32> to vector<1x1x8x8xf32>
    %250 = vector.shape_cast %249 : vector<1x1x8x8xf32> to vector<1x8x8xf32>
    %251 = vector.shape_cast %250 : vector<1x8x8xf32> to vector<8x8xf32>
    %252 = vector.extract_strided_slice %245 {offsets = [2, 0, 0, 0], sizes = [1, 1, 8, 8], strides = [1, 1, 1, 1]} : vector<4x1x8x8xf32> to vector<1x1x8x8xf32>
    %253 = vector.shape_cast %252 : vector<1x1x8x8xf32> to vector<1x8x8xf32>
    %254 = vector.shape_cast %253 : vector<1x8x8xf32> to vector<8x8xf32>
    %255 = vector.extract_strided_slice %245 {offsets = [3, 0, 0, 0], sizes = [1, 1, 8, 8], strides = [1, 1, 1, 1]} : vector<4x1x8x8xf32> to vector<1x1x8x8xf32>
    %256 = vector.shape_cast %255 : vector<1x1x8x8xf32> to vector<1x8x8xf32>
    %257 = vector.shape_cast %256 : vector<1x8x8xf32> to vector<8x8xf32>
    %258 = tpu.concatenate %248, %251, %254, %257 in 1 : vector<8x8xf32>, vector<8x8xf32>, vector<8x8xf32>, vector<8x8xf32> -> vector<8x32xf32>
    %259 = arith.truncf %258 : vector<8x32xf32> to vector<8x32xbf16>
    %c1_74 = arith.constant 1 : index
    %c0_75 = arith.constant 0 : index
    %c0_76 = arith.constant 0 : index
    %260 = vector.load %arg5[%c1_74, %c0_75, %c0_76] : memref<2x32x32xbf16, #tpu.memory_space<vmem>>, vector<1x32x32xbf16>
    %261 = vector.shape_cast %260 : vector<1x32x32xbf16> to vector<32x32xbf16>
    %cst_77 = arith.constant dense<0.000000e+00> : vector<8x32xf32>
    %262 = tpu.matmul %259, %261, %cst_77 {dimension_numbers = #tpu.dot_dimension_numbers<[1], [0], [0], [1], [0, 0, 1, 1], [], []>} : vector<8x32xbf16>, vector<32x32xbf16>, vector<8x32xf32> -> vector<8x32xf32>
    %c1_78 = arith.constant 1 : index
    %c0_79 = arith.constant 0 : index
    %c0_80 = arith.constant 0 : index
    %263 = vector.load %arg6[%c1_78, %c0_79, %c0_80] : memref<2x1x32xf32, #tpu.memory_space<vmem>>, vector<1x1x32xf32>
    %264 = vector.shape_cast %263 : vector<1x1x32xf32> to vector<1x32xf32>
    %265 = vector.broadcast %264 : vector<1x32xf32> to vector<8x32xf32>
    %266 = arith.addf %262, %265 : vector<8x32xf32>
    %cst_81 = arith.constant 0.000000e+00 : f32
    %267 = vector.broadcast %cst_81 : f32 to vector<8x32xf32>
    %268 = arith.cmpf oge, %266, %267 : vector<8x32xf32>
    %cst_82 = arith.constant 0.00999999977 : f32
    %269 = vector.broadcast %cst_82 : f32 to vector<8x32xf32>
    %270 = arith.mulf %269, %266 : vector<8x32xf32>
    %271 = arith.select %268, %266, %270 : vector<8x32xi1>, vector<8x32xf32>
    %272 = arith.addf %271, %178 : vector<8x32xf32>
    %c1_83 = arith.constant 1 : index
    %c0_84 = arith.constant 0 : index
    %c0_85 = arith.constant 0 : index
    %273 = vector.load %arg7[%c1_83, %c0_84, %c0_85] : memref<2x1x32xf32, #tpu.memory_space<vmem>>, vector<1x1x32xf32>
    %274 = vector.shape_cast %273 : vector<1x1x32xf32> to vector<1x32xf32>
    %c1_86 = arith.constant 1 : index
    %c0_87 = arith.constant 0 : index
    %c0_88 = arith.constant 0 : index
    %275 = vector.load %arg8[%c1_86, %c0_87, %c0_88] : memref<2x1x32xf32, #tpu.memory_space<vmem>>, vector<1x1x32xf32>
    %276 = vector.shape_cast %275 : vector<1x1x32xf32> to vector<1x32xf32>
    %cst_89 = arith.constant dense<0.000000e+00> : vector<8xf32>
    %277 = vector.multi_reduction <add>, %272, %cst_89 [1] : vector<8x32xf32> to vector<8xf32>
    %278 = vector.shape_cast %277 : vector<8xf32> to vector<8x1xf32>
    %cst_90 = arith.constant 3.200000e+01 : f32
    %279 = vector.broadcast %cst_90 : f32 to vector<8x1xf32>
    %280 = arith.divf %278, %279 : vector<8x1xf32>
    %281 = arith.mulf %272, %272 : vector<8x32xf32>
    %cst_91 = arith.constant dense<0.000000e+00> : vector<8xf32>
    %282 = vector.multi_reduction <add>, %281, %cst_91 [1] : vector<8x32xf32> to vector<8xf32>
    %283 = vector.shape_cast %282 : vector<8xf32> to vector<8x1xf32>
    %cst_92 = arith.constant 3.200000e+01 : f32
    %284 = vector.broadcast %cst_92 : f32 to vector<8x1xf32>
    %285 = arith.divf %283, %284 : vector<8x1xf32>
    %286 = arith.mulf %280, %280 : vector<8x1xf32>
    %287 = arith.subf %285, %286 : vector<8x1xf32>
    %cst_93 = arith.constant 0.000000e+00 : f32
    %288 = vector.broadcast %cst_93 : f32 to vector<8x1xf32>
    %289 = arith.maximumf %287, %288 : vector<8x1xf32>
    %290 = vector.broadcast %280 : vector<8x1xf32> to vector<8x32xf32>
    %291 = arith.subf %272, %290 : vector<8x32xf32>
    %cst_94 = arith.constant 9.99999974E-6 : f32
    %292 = vector.broadcast %cst_94 : f32 to vector<8x1xf32>
    %293 = arith.addf %289, %292 : vector<8x1xf32>
    %294 = math.rsqrt %293 : vector<8x1xf32>
    %295 = vector.broadcast %294 : vector<8x1xf32> to vector<8x32xf32>
    %296 = arith.mulf %291, %295 : vector<8x32xf32>
    %297 = vector.broadcast %274 : vector<1x32xf32> to vector<8x32xf32>
    %298 = arith.mulf %296, %297 : vector<8x32xf32>
    %299 = vector.broadcast %276 : vector<1x32xf32> to vector<8x32xf32>
    %300 = arith.addf %298, %299 : vector<8x32xf32>
    %301 = arith.truncf %300 : vector<8x32xf32> to vector<8x32xbf16>
    %c1_95 = arith.constant 1 : index
    %c0_96 = arith.constant 0 : index
    %c0_97 = arith.constant 0 : index
    %302 = vector.load %arg9[%c1_95, %c0_96, %c0_97] : memref<2x32x96xbf16, #tpu.memory_space<vmem>>, vector<1x32x96xbf16>
    %303 = vector.shape_cast %302 : vector<1x32x96xbf16> to vector<32x96xbf16>
    %cst_98 = arith.constant dense<0.000000e+00> : vector<8x96xf32>
    %304 = tpu.matmul %301, %303, %cst_98 {dimension_numbers = #tpu.dot_dimension_numbers<[1], [0], [0], [1], [0, 0, 1, 1], [], []>} : vector<8x32xbf16>, vector<32x96xbf16>, vector<8x96xf32> -> vector<8x96xf32>
    %c1_99 = arith.constant 1 : index
    %c0_100 = arith.constant 0 : index
    %c0_101 = arith.constant 0 : index
    %305 = vector.load %arg10[%c1_99, %c0_100, %c0_101] : memref<2x1x96xf32, #tpu.memory_space<vmem>>, vector<1x1x96xf32>
    %306 = vector.shape_cast %305 : vector<1x1x96xf32> to vector<1x96xf32>
    %307 = vector.broadcast %306 : vector<1x96xf32> to vector<8x96xf32>
    %308 = arith.addf %304, %307 : vector<8x96xf32>
    %cst_102 = arith.constant 0.000000e+00 : f32
    %309 = vector.broadcast %cst_102 : f32 to vector<8x96xf32>
    %310 = arith.cmpf oge, %308, %309 : vector<8x96xf32>
    %cst_103 = arith.constant 0.00999999977 : f32
    %311 = vector.broadcast %cst_103 : f32 to vector<8x96xf32>
    %312 = arith.mulf %311, %308 : vector<8x96xf32>
    %313 = arith.select %310, %308, %312 : vector<8x96xi1>, vector<8x96xf32>
    %314 = arith.truncf %313 : vector<8x96xf32> to vector<8x96xbf16>
    %c1_104 = arith.constant 1 : index
    %c0_105 = arith.constant 0 : index
    %c0_106 = arith.constant 0 : index
    %315 = vector.load %arg11[%c1_104, %c0_105, %c0_106] : memref<2x96x32xbf16, #tpu.memory_space<vmem>>, vector<1x96x32xbf16>
    %316 = vector.shape_cast %315 : vector<1x96x32xbf16> to vector<96x32xbf16>
    %cst_107 = arith.constant dense<0.000000e+00> : vector<8x32xf32>
    %317 = tpu.matmul %314, %316, %cst_107 {dimension_numbers = #tpu.dot_dimension_numbers<[1], [0], [0], [1], [0, 0, 1, 1], [], []>} : vector<8x96xbf16>, vector<96x32xbf16>, vector<8x32xf32> -> vector<8x32xf32>
    %c1_108 = arith.constant 1 : index
    %c0_109 = arith.constant 0 : index
    %c0_110 = arith.constant 0 : index
    %318 = vector.load %arg12[%c1_108, %c0_109, %c0_110] : memref<2x1x32xf32, #tpu.memory_space<vmem>>, vector<1x1x32xf32>
    %319 = vector.shape_cast %318 : vector<1x1x32xf32> to vector<1x32xf32>
    %320 = vector.broadcast %319 : vector<1x32xf32> to vector<8x32xf32>
    %321 = arith.addf %317, %320 : vector<8x32xf32>
    %322 = arith.addf %321, %300 : vector<8x32xf32>
    %c1_111 = arith.constant 1 : index
    %c0_112 = arith.constant 0 : index
    %c0_113 = arith.constant 0 : index
    %323 = vector.load %arg13[%c1_111, %c0_112, %c0_113] : memref<2x1x32xf32, #tpu.memory_space<vmem>>, vector<1x1x32xf32>
    %324 = vector.shape_cast %323 : vector<1x1x32xf32> to vector<1x32xf32>
    %c1_114 = arith.constant 1 : index
    %c0_115 = arith.constant 0 : index
    %c0_116 = arith.constant 0 : index
    %325 = vector.load %arg14[%c1_114, %c0_115, %c0_116] : memref<2x1x32xf32, #tpu.memory_space<vmem>>, vector<1x1x32xf32>
    %326 = vector.shape_cast %325 : vector<1x1x32xf32> to vector<1x32xf32>
    %cst_117 = arith.constant dense<0.000000e+00> : vector<8xf32>
    %327 = vector.multi_reduction <add>, %322, %cst_117 [1] : vector<8x32xf32> to vector<8xf32>
    %328 = vector.shape_cast %327 : vector<8xf32> to vector<8x1xf32>
    %cst_118 = arith.constant 3.200000e+01 : f32
    %329 = vector.broadcast %cst_118 : f32 to vector<8x1xf32>
    %330 = arith.divf %328, %329 : vector<8x1xf32>
    %331 = arith.mulf %322, %322 : vector<8x32xf32>
    %cst_119 = arith.constant dense<0.000000e+00> : vector<8xf32>
    %332 = vector.multi_reduction <add>, %331, %cst_119 [1] : vector<8x32xf32> to vector<8xf32>
    %333 = vector.shape_cast %332 : vector<8xf32> to vector<8x1xf32>
    %cst_120 = arith.constant 3.200000e+01 : f32
    %334 = vector.broadcast %cst_120 : f32 to vector<8x1xf32>
    %335 = arith.divf %333, %334 : vector<8x1xf32>
    %336 = arith.mulf %330, %330 : vector<8x1xf32>
    %337 = arith.subf %335, %336 : vector<8x1xf32>
    %cst_121 = arith.constant 0.000000e+00 : f32
    %338 = vector.broadcast %cst_121 : f32 to vector<8x1xf32>
    %339 = arith.maximumf %337, %338 : vector<8x1xf32>
    %340 = vector.broadcast %330 : vector<8x1xf32> to vector<8x32xf32>
    %341 = arith.subf %322, %340 : vector<8x32xf32>
    %cst_122 = arith.constant 9.99999974E-6 : f32
    %342 = vector.broadcast %cst_122 : f32 to vector<8x1xf32>
    %343 = arith.addf %339, %342 : vector<8x1xf32>
    %344 = math.rsqrt %343 : vector<8x1xf32>
    %345 = vector.broadcast %344 : vector<8x1xf32> to vector<8x32xf32>
    %346 = arith.mulf %341, %345 : vector<8x32xf32>
    %347 = vector.broadcast %324 : vector<1x32xf32> to vector<8x32xf32>
    %348 = arith.mulf %346, %347 : vector<8x32xf32>
    %349 = vector.broadcast %326 : vector<1x32xf32> to vector<8x32xf32>
    %350 = arith.addf %348, %349 : vector<8x32xf32>
    %351 = vector.shape_cast %350 : vector<8x32xf32> to vector<1x1x256xf32>
    %c0_123 = arith.constant 0 : index
    %c0_124 = arith.constant 0 : index
    %c0_125 = arith.constant 0 : index
    %352 = vector.load %arg15[%c0_123, %c0_124, %c0_125] : memref<1x1x256xf32, #tpu.memory_space<vmem>>, vector<1x1x256xf32>
    tpu.vector_store %arg15[%c0_123, %c0_124, %c0_125], %351 {strides = array<i32>} : memref<1x1x256xf32, #tpu.memory_space<vmem>>, vector<1x1x256xf32>,
    return
  }
  func.func @transform_0(%arg0: i32) -> (i32, i32, i32) {
    %c0_i32 = arith.constant 0 : i32
    %c0_i32_0 = arith.constant 0 : i32
    %c0_i32_1 = arith.constant 0 : i32
    return %arg0, %c0_i32, %c0_i32_0 : i32, i32, i32
  }
  func.func @transform_1(%arg0: i32) -> (i32, i32, i32) {
    %c0_i32 = arith.constant 0 : i32
    %c0_i32_0 = arith.constant 0 : i32
    %c0_i32_1 = arith.constant 0 : i32
    return %arg0, %c0_i32, %c0_i32_0 : i32, i32, i32
  }
  func.func @transform_2(%arg0: i32) -> (i32, i32, i32) {
    %c0_i32 = arith.constant 0 : i32
    %c0_i32_0 = arith.constant 0 : i32
    %c0_i32_1 = arith.constant 0 : i32
    %c0_i32_2 = arith.constant 0 : i32
    return %c0_i32, %c0_i32_0, %c0_i32_1 : i32, i32, i32
  }
  func.func @transform_3(%arg0: i32) -> (i32, i32, i32) {
    %c0_i32 = arith.constant 0 : i32
    %c0_i32_0 = arith.constant 0 : i32
    %c0_i32_1 = arith.constant 0 : i32
    %c0_i32_2 = arith.constant 0 : i32
    return %c0_i32, %c0_i32_0, %c0_i32_1 : i32, i32, i32
  }
  func.func @transform_4(%arg0: i32) -> (i32, i32, i32) {
    %c0_i32 = arith.constant 0 : i32
    %c0_i32_0 = arith.constant 0 : i32
    %c0_i32_1 = arith.constant 0 : i32
    %c0_i32_2 = arith.constant 0 : i32
    return %c0_i32, %c0_i32_0, %c0_i32_1 : i32, i32, i32
  }
  func.func @transform_5(%arg0: i32) -> (i32, i32, i32) {
    %c0_i32 = arith.constant 0 : i32
    %c0_i32_0 = arith.constant 0 : i32
    %c0_i32_1 = arith.constant 0 : i32
    %c0_i32_2 = arith.constant 0 : i32
    return %c0_i32, %c0_i32_0, %c0_i32_1 : i32, i32, i32
  }
  func.func @transform_6(%arg0: i32) -> (i32, i32, i32) {
    %c0_i32 = arith.constant 0 : i32
    %c0_i32_0 = arith.constant 0 : i32
    %c0_i32_1 = arith.constant 0 : i32
    %c0_i32_2 = arith.constant 0 : i32
    return %c0_i32, %c0_i32_0, %c0_i32_1 : i32, i32, i32
  }
  func.func @transform_7(%arg0: i32) -> (i32, i32, i32) {
    %c0_i32 = arith.constant 0 : i32
    %c0_i32_0 = arith.constant 0 : i32
    %c0_i32_1 = arith.constant 0 : i32
    %c0_i32_2 = arith.constant 0 : i32
    return %c0_i32, %c0_i32_0, %c0_i32_1 : i32, i32, i32
  }
  func.func @transform_8(%arg0: i32) -> (i32, i32, i32) {
    %c0_i32 = arith.constant 0 : i32
    %c0_i32_0 = arith.constant 0 : i32
    %c0_i32_1 = arith.constant 0 : i32
    %c0_i32_2 = arith.constant 0 : i32
    return %c0_i32, %c0_i32_0, %c0_i32_1 : i32, i32, i32
  }
  func.func @transform_9(%arg0: i32) -> (i32, i32, i32) {
    %c0_i32 = arith.constant 0 : i32
    %c0_i32_0 = arith.constant 0 : i32
    %c0_i32_1 = arith.constant 0 : i32
    %c0_i32_2 = arith.constant 0 : i32
    return %c0_i32, %c0_i32_0, %c0_i32_1 : i32, i32, i32
  }
  func.func @transform_10(%arg0: i32) -> (i32, i32, i32) {
    %c0_i32 = arith.constant 0 : i32
    %c0_i32_0 = arith.constant 0 : i32
    %c0_i32_1 = arith.constant 0 : i32
    %c0_i32_2 = arith.constant 0 : i32
    return %c0_i32, %c0_i32_0, %c0_i32_1 : i32, i32, i32
  }
  func.func @transform_11(%arg0: i32) -> (i32, i32, i32) {
    %c0_i32 = arith.constant 0 : i32
    %c0_i32_0 = arith.constant 0 : i32
    %c0_i32_1 = arith.constant 0 : i32
    %c0_i32_2 = arith.constant 0 : i32
    return %c0_i32, %c0_i32_0, %c0_i32_1 : i32, i32, i32
  }
  func.func @transform_12(%arg0: i32) -> (i32, i32, i32) {
    %c0_i32 = arith.constant 0 : i32
    %c0_i32_0 = arith.constant 0 : i32
    %c0_i32_1 = arith.constant 0 : i32
    %c0_i32_2 = arith.constant 0 : i32
    return %c0_i32, %c0_i32_0, %c0_i32_1 : i32, i32, i32
  }
  func.func @transform_13(%arg0: i32) -> (i32, i32, i32) {
    %c0_i32 = arith.constant 0 : i32
    %c0_i32_0 = arith.constant 0 : i32
    %c0_i32_1 = arith.constant 0 : i32
    %c0_i32_2 = arith.constant 0 : i32
    return %c0_i32, %c0_i32_0, %c0_i32_1 : i32, i32, i32
  }
  func.func @transform_14(%arg0: i32) -> (i32, i32, i32) {
    %c0_i32 = arith.constant 0 : i32
    %c0_i32_0 = arith.constant 0 : i32
    %c0_i32_1 = arith.constant 0 : i32
    return %arg0, %c0_i32, %c0_i32_0 : i32, i32, i32
  }
}

module attributes {stable_mosaic.version = 11 : i64} {
  func.func @fused_block_kernel(%arg0: i32, %arg1: memref<1x8x32xf32, #tpu.memory_space<vmem>>, %arg2: memref<1x1x8xf32, #tpu.memory_space<vmem>>, %arg3: memref<2x32x64xbf16, #tpu.memory_space<vmem>>, %arg4: memref<2x1x64xf32, #tpu.memory_space<vmem>>, %arg5: memref<2x32x32xbf16, #tpu.memory_space<vmem>>, %arg6: memref<2x1x32xf32, #tpu.memory_space<vmem>>, %arg7: memref<2x1x32xf32, #tpu.memory_space<vmem>>, %arg8: memref<2x1x32xf32, #tpu.memory_space<vmem>>, %arg9: memref<2x32x96xbf16, #tpu.memory_space<vmem>>, %arg10: memref<2x1x96xf32, #tpu.memory_space<vmem>>, %arg11: memref<2x96x32xbf16, #tpu.memory_space<vmem>>, %arg12: memref<2x1x32xf32, #tpu.memory_space<vmem>>, %arg13: memref<2x1x32xf32, #tpu.memory_space<vmem>>, %arg14: memref<2x1x32xf32, #tpu.memory_space<vmem>>, %arg15: memref<1x8x32xf32, #tpu.memory_space<vmem>>) attributes {dimension_semantics = [#tpu.dimension_semantics<parallel>], iteration_bounds = array<i64: 2>, scalar_prefetch = 0 : i64, scratch_operands = 0 : i64, tpu.core_type = #tpu.core_type<tc>, window_params = [{transform_indices = @transform_0, window_bounds = array<i64: 1, 8, 32>}, {transform_indices = @transform_1, window_bounds = array<i64: 1, 1, 8>}, {pipeline_mode = #tpu.pipeline_mode<synchronous>, transform_indices = @transform_2, window_bounds = array<i64: 2, 32, 64>}, {pipeline_mode = #tpu.pipeline_mode<synchronous>, transform_indices = @transform_3, window_bounds = array<i64: 2, 1, 64>}, {pipeline_mode = #tpu.pipeline_mode<synchronous>, transform_indices = @transform_4, window_bounds = array<i64: 2, 32, 32>}, {pipeline_mode = #tpu.pipeline_mode<synchronous>, transform_indices = @transform_5, window_bounds = array<i64: 2, 1, 32>}, {pipeline_mode = #tpu.pipeline_mode<synchronous>, transform_indices = @transform_6, window_bounds = array<i64: 2, 1, 32>}, {pipeline_mode = #tpu.pipeline_mode<synchronous>, transform_indices = @transform_7, window_bounds = array<i64: 2, 1, 32>}, {pipeline_mode = #tpu.pipeline_mode<synchronous>, transform_indices = @transform_8, window_bounds = array<i64: 2, 32, 96>}, {pipeline_mode = #tpu.pipeline_mode<synchronous>, transform_indices = @transform_9, window_bounds = array<i64: 2, 1, 96>}, {pipeline_mode = #tpu.pipeline_mode<synchronous>, transform_indices = @transform_10, window_bounds = array<i64: 2, 96, 32>}, {pipeline_mode = #tpu.pipeline_mode<synchronous>, transform_indices = @transform_11, window_bounds = array<i64: 2, 1, 32>}, {pipeline_mode = #tpu.pipeline_mode<synchronous>, transform_indices = @transform_12, window_bounds = array<i64: 2, 1, 32>}, {pipeline_mode = #tpu.pipeline_mode<synchronous>, transform_indices = @transform_13, window_bounds = array<i64: 2, 1, 32>}, {transform_indices = @transform_14, window_bounds = array<i64: 1, 8, 32>}]} {
    %c0 = arith.constant 0 : index
    %c0_0 = arith.constant 0 : index
    %c0_1 = arith.constant 0 : index
    %0 = vector.load %arg1[%c0, %c0_0, %c0_1] : memref<1x8x32xf32, #tpu.memory_space<vmem>>, vector<1x8x32xf32>
    %1 = vector.shape_cast %0 : vector<1x8x32xf32> to vector<8x32xf32>
    %c0_2 = arith.constant 0 : index
    %c0_3 = arith.constant 0 : index
    %c0_4 = arith.constant 0 : index
    %2 = vector.load %arg2[%c0_2, %c0_3, %c0_4] : memref<1x1x8xf32, #tpu.memory_space<vmem>>, vector<1x1x8xf32>
    %3 = vector.shape_cast %2 : vector<1x1x8xf32> to vector<1x1x1x8xf32>
    %4 = vector.shape_cast %3 : vector<1x1x1x8xf32> to vector<1x1x1x8xf32>
    %5 = vector.broadcast %4 : vector<1x1x1x8xf32> to vector<4x1x8x8xf32>
    %6 = vector.shape_cast %5 : vector<4x1x8x8xf32> to vector<4x8x8xf32>
    %7 = arith.truncf %1 : vector<8x32xf32> to vector<8x32xbf16>
    %c0_5 = arith.constant 0 : index
    %c0_6 = arith.constant 0 : index
    %c0_7 = arith.constant 0 : index
    %8 = vector.load %arg3[%c0_5, %c0_6, %c0_7] : memref<2x32x64xbf16, #tpu.memory_space<vmem>>, vector<1x32x64xbf16>
    %9 = vector.shape_cast %8 : vector<1x32x64xbf16> to vector<32x64xbf16>
    %cst = arith.constant dense<0.000000e+00> : vector<8x64xf32>
    %10 = tpu.matmul %7, %9, %cst {dimension_numbers = #tpu.dot_dimension_numbers<[1], [0], [0], [1], [0, 0, 1, 1], [], []>} : vector<8x32xbf16>, vector<32x64xbf16>, vector<8x64xf32> -> vector<8x64xf32>
    %c0_8 = arith.constant 0 : index
    %c0_9 = arith.constant 0 : index
    %c0_10 = arith.constant 0 : index
    %11 = vector.load %arg4[%c0_8, %c0_9, %c0_10] : memref<2x1x64xf32, #tpu.memory_space<vmem>>, vector<1x1x64xf32>
    %12 = vector.shape_cast %11 : vector<1x1x64xf32> to vector<1x64xf32>
    %13 = vector.broadcast %12 : vector<1x64xf32> to vector<8x64xf32>
    %14 = arith.addf %10, %13 : vector<8x64xf32>
    %15 = vector.extract_strided_slice %14 {offsets = [0, 0], sizes = [8, 8], strides = [1, 1]} : vector<8x64xf32> to vector<8x8xf32>
    %16 = vector.shape_cast %15 : vector<8x8xf32> to vector<1x8x8xf32>
    %17 = vector.extract_strided_slice %14 {offsets = [0, 8], sizes = [8, 8], strides = [1, 1]} : vector<8x64xf32> to vector<8x8xf32>
    %18 = vector.shape_cast %17 : vector<8x8xf32> to vector<1x8x8xf32>
    %19 = vector.extract_strided_slice %14 {offsets = [0, 16], sizes = [8, 8], strides = [1, 1]} : vector<8x64xf32> to vector<8x8xf32>
    %20 = vector.shape_cast %19 : vector<8x8xf32> to vector<1x8x8xf32>
    %21 = vector.extract_strided_slice %14 {offsets = [0, 24], sizes = [8, 8], strides = [1, 1]} : vector<8x64xf32> to vector<8x8xf32>
    %22 = vector.shape_cast %21 : vector<8x8xf32> to vector<1x8x8xf32>
    %23 = vector.shape_cast %16 : vector<1x8x8xf32> to vector<1x1x8x8xf32>
    %24 = vector.shape_cast %18 : vector<1x8x8xf32> to vector<1x1x8x8xf32>
    %25 = vector.shape_cast %20 : vector<1x8x8xf32> to vector<1x1x8x8xf32>
    %26 = vector.shape_cast %22 : vector<1x8x8xf32> to vector<1x1x8x8xf32>
    %27 = tpu.concatenate %23, %24, %25, %26 in 0 : vector<1x1x8x8xf32>, vector<1x1x8x8xf32>, vector<1x1x8x8xf32>, vector<1x1x8x8xf32> -> vector<4x1x8x8xf32>
    %28 = vector.shape_cast %27 : vector<4x1x8x8xf32> to vector<4x8x8xf32>
    %29 = arith.truncf %28 : vector<4x8x8xf32> to vector<4x8x8xbf16>
    %30 = vector.extract_strided_slice %14 {offsets = [0, 32], sizes = [8, 8], strides = [1, 1]} : vector<8x64xf32> to vector<8x8xf32>
    %31 = vector.shape_cast %30 : vector<8x8xf32> to vector<1x8x8xf32>
    %32 = vector.extract_strided_slice %14 {offsets = [0, 40], sizes = [8, 8], strides = [1, 1]} : vector<8x64xf32> to vector<8x8xf32>
    %33 = vector.shape_cast %32 : vector<8x8xf32> to vector<1x8x8xf32>
    %34 = vector.extract_strided_slice %14 {offsets = [0, 48], sizes = [8, 8], strides = [1, 1]} : vector<8x64xf32> to vector<8x8xf32>
    %35 = vector.shape_cast %34 : vector<8x8xf32> to vector<1x8x8xf32>
    %36 = vector.extract_strided_slice %14 {offsets = [0, 56], sizes = [8, 8], strides = [1, 1]} : vector<8x64xf32> to vector<8x8xf32>
    %37 = vector.shape_cast %36 : vector<8x8xf32> to vector<1x8x8xf32>
    %38 = vector.shape_cast %31 : vector<1x8x8xf32> to vector<1x1x8x8xf32>
    %39 = vector.shape_cast %33 : vector<1x8x8xf32> to vector<1x1x8x8xf32>
    %40 = vector.shape_cast %35 : vector<1x8x8xf32> to vector<1x1x8x8xf32>
    %41 = vector.shape_cast %37 : vector<1x8x8xf32> to vector<1x1x8x8xf32>
    %42 = tpu.concatenate %38, %39, %40, %41 in 0 : vector<1x1x8x8xf32>, vector<1x1x8x8xf32>, vector<1x1x8x8xf32>, vector<1x1x8x8xf32> -> vector<4x1x8x8xf32>
    %43 = vector.shape_cast %42 : vector<4x1x8x8xf32> to vector<4x8x8xf32>
    %44 = arith.truncf %43 : vector<4x8x8xf32> to vector<4x8x8xbf16>
    %45 = vector.extract_strided_slice %1 {offsets = [0, 0], sizes = [8, 8], strides = [1, 1]} : vector<8x32xf32> to vector<8x8xf32>
    %46 = vector.shape_cast %45 : vector<8x8xf32> to vector<1x8x8xf32>
    %47 = vector.extract_strided_slice %1 {offsets = [0, 8], sizes = [8, 8], strides = [1, 1]} : vector<8x32xf32> to vector<8x8xf32>
    %48 = vector.shape_cast %47 : vector<8x8xf32> to vector<1x8x8xf32>
    %49 = vector.extract_strided_slice %1 {offsets = [0, 16], sizes = [8, 8], strides = [1, 1]} : vector<8x32xf32> to vector<8x8xf32>
    %50 = vector.shape_cast %49 : vector<8x8xf32> to vector<1x8x8xf32>
    %51 = vector.extract_strided_slice %1 {offsets = [0, 24], sizes = [8, 8], strides = [1, 1]} : vector<8x32xf32> to vector<8x8xf32>
    %52 = vector.shape_cast %51 : vector<8x8xf32> to vector<1x8x8xf32>
    %53 = vector.shape_cast %46 : vector<1x8x8xf32> to vector<1x1x8x8xf32>
    %54 = vector.shape_cast %48 : vector<1x8x8xf32> to vector<1x1x8x8xf32>
    %55 = vector.shape_cast %50 : vector<1x8x8xf32> to vector<1x1x8x8xf32>
    %56 = vector.shape_cast %52 : vector<1x8x8xf32> to vector<1x1x8x8xf32>
    %57 = tpu.concatenate %53, %54, %55, %56 in 0 : vector<1x1x8x8xf32>, vector<1x1x8x8xf32>, vector<1x1x8x8xf32>, vector<1x1x8x8xf32> -> vector<4x1x8x8xf32>
    %58 = vector.shape_cast %57 : vector<4x1x8x8xf32> to vector<4x8x8xf32>
    %59 = arith.truncf %58 : vector<4x8x8xf32> to vector<4x8x8xbf16>
    "tpu.trace_start"() <{level = 10 : i32, message = "gqd,gkd->gqk"}> : () -> ()
    %cst_11 = arith.constant dense<0.000000e+00> : vector<4x8x8xf32>
    %60 = tpu.matmul %29, %59, %cst_11 {dimension_numbers = #tpu.dot_dimension_numbers<[2], [2], [1], [1], [0, 0, 0, 1, 1, 1], [0], [0]>} : vector<4x8x8xbf16>, vector<4x8x8xbf16>, vector<4x8x8xf32> -> vector<4x8x8xf32>
    "tpu.trace_stop"() : () -> ()
    %61 = arith.addf %60, %6 : vector<4x8x8xf32>
    %cst_12 = arith.constant dense<0xFF800000> : vector<4x8xf32>
    %62 = vector.multi_reduction <maximumf>, %61, %cst_12 [2] : vector<4x8x8xf32> to vector<4x8xf32>
    %63 = vector.shape_cast %62 : vector<4x8xf32> to vector<4x8x1xf32>
    %64 = vector.broadcast %63 : vector<4x8x1xf32> to vector<4x8x8xf32>
    %65 = arith.subf %61, %64 : vector<4x8x8xf32>
    %66 = math.exp %65 : vector<4x8x8xf32>
    %cst_13 = arith.constant dense<0.000000e+00> : vector<4x8xf32>
    %67 = vector.multi_reduction <add>, %66, %cst_13 [2] : vector<4x8x8xf32> to vector<4x8xf32>
    %68 = vector.shape_cast %67 : vector<4x8xf32> to vector<4x8x1xf32>
    %69 = vector.broadcast %68 : vector<4x8x1xf32> to vector<4x8x8xf32>
    %70 = arith.divf %66, %69 : vector<4x8x8xf32>
    %71 = arith.truncf %70 : vector<4x8x8xf32> to vector<4x8x8xbf16>
    "tpu.trace_start"() <{level = 10 : i32, message = "gqk,gkd->gqd"}> : () -> ()
    %cst_14 = arith.constant dense<0.000000e+00> : vector<4x8x8xf32>
    %72 = tpu.matmul %71, %44, %cst_14 {dimension_numbers = #tpu.dot_dimension_numbers<[2], [1], [1], [2], [0, 0, 0, 1, 1, 2], [0], [0]>} : vector<4x8x8xbf16>, vector<4x8x8xbf16>, vector<4x8x8xf32> -> vector<4x8x8xf32>
    "tpu.trace_stop"() : () -> ()
    %73 = vector.shape_cast %72 : vector<4x8x8xf32> to vector<4x1x8x8xf32>
    %74 = vector.extract_strided_slice %73 {offsets = [0, 0, 0, 0], sizes = [1, 1, 8, 8], strides = [1, 1, 1, 1]} : vector<4x1x8x8xf32> to vector<1x1x8x8xf32>
    %75 = vector.shape_cast %74 : vector<1x1x8x8xf32> to vector<1x8x8xf32>
    %76 = vector.shape_cast %75 : vector<1x8x8xf32> to vector<8x8xf32>
    %77 = vector.extract_strided_slice %73 {offsets = [1, 0, 0, 0], sizes = [1, 1, 8, 8], strides = [1, 1, 1, 1]} : vector<4x1x8x8xf32> to vector<1x1x8x8xf32>
    %78 = vector.shape_cast %77 : vector<1x1x8x8xf32> to vector<1x8x8xf32>
    %79 = vector.shape_cast %78 : vector<1x8x8xf32> to vector<8x8xf32>
    %80 = vector.extract_strided_slice %73 {offsets = [2, 0, 0, 0], sizes = [1, 1, 8, 8], strides = [1, 1, 1, 1]} : vector<4x1x8x8xf32> to vector<1x1x8x8xf32>
    %81 = vector.shape_cast %80 : vector<1x1x8x8xf32> to vector<1x8x8xf32>
    %82 = vector.shape_cast %81 : vector<1x8x8xf32> to vector<8x8xf32>
    %83 = vector.extract_strided_slice %73 {offsets = [3, 0, 0, 0], sizes = [1, 1, 8, 8], strides = [1, 1, 1, 1]} : vector<4x1x8x8xf32> to vector<1x1x8x8xf32>
    %84 = vector.shape_cast %83 : vector<1x1x8x8xf32> to vector<1x8x8xf32>
    %85 = vector.shape_cast %84 : vector<1x8x8xf32> to vector<8x8xf32>
    %86 = tpu.concatenate %76, %79, %82, %85 in 1 : vector<8x8xf32>, vector<8x8xf32>, vector<8x8xf32>, vector<8x8xf32> -> vector<8x32xf32>
    %87 = arith.truncf %86 : vector<8x32xf32> to vector<8x32xbf16>
    %c0_15 = arith.constant 0 : index
    %c0_16 = arith.constant 0 : index
    %c0_17 = arith.constant 0 : index
    %88 = vector.load %arg5[%c0_15, %c0_16, %c0_17] : memref<2x32x32xbf16, #tpu.memory_space<vmem>>, vector<1x32x32xbf16>
    %89 = vector.shape_cast %88 : vector<1x32x32xbf16> to vector<32x32xbf16>
    %cst_18 = arith.constant dense<0.000000e+00> : vector<8x32xf32>
    %90 = tpu.matmul %87, %89, %cst_18 {dimension_numbers = #tpu.dot_dimension_numbers<[1], [0], [0], [1], [0, 0, 1, 1], [], []>} : vector<8x32xbf16>, vector<32x32xbf16>, vector<8x32xf32> -> vector<8x32xf32>
    %c0_19 = arith.constant 0 : index
    %c0_20 = arith.constant 0 : index
    %c0_21 = arith.constant 0 : index
    %91 = vector.load %arg6[%c0_19, %c0_20, %c0_21] : memref<2x1x32xf32, #tpu.memory_space<vmem>>, vector<1x1x32xf32>
    %92 = vector.shape_cast %91 : vector<1x1x32xf32> to vector<1x32xf32>
    %93 = vector.broadcast %92 : vector<1x32xf32> to vector<8x32xf32>
    %94 = arith.addf %90, %93 : vector<8x32xf32>
    %cst_22 = arith.constant 0.000000e+00 : f32
    %95 = vector.broadcast %cst_22 : f32 to vector<8x32xf32>
    %96 = arith.cmpf oge, %94, %95 : vector<8x32xf32>
    %cst_23 = arith.constant 0.00999999977 : f32
    %97 = vector.broadcast %cst_23 : f32 to vector<8x32xf32>
    %98 = arith.mulf %97, %94 : vector<8x32xf32>
    %99 = arith.select %96, %94, %98 : vector<8x32xi1>, vector<8x32xf32>
    %100 = arith.addf %99, %1 : vector<8x32xf32>
    %c0_24 = arith.constant 0 : index
    %c0_25 = arith.constant 0 : index
    %c0_26 = arith.constant 0 : index
    %101 = vector.load %arg7[%c0_24, %c0_25, %c0_26] : memref<2x1x32xf32, #tpu.memory_space<vmem>>, vector<1x1x32xf32>
    %102 = vector.shape_cast %101 : vector<1x1x32xf32> to vector<1x32xf32>
    %c0_27 = arith.constant 0 : index
    %c0_28 = arith.constant 0 : index
    %c0_29 = arith.constant 0 : index
    %103 = vector.load %arg8[%c0_27, %c0_28, %c0_29] : memref<2x1x32xf32, #tpu.memory_space<vmem>>, vector<1x1x32xf32>
    %104 = vector.shape_cast %103 : vector<1x1x32xf32> to vector<1x32xf32>
    %cst_30 = arith.constant dense<0.000000e+00> : vector<8xf32>
    %105 = vector.multi_reduction <add>, %100, %cst_30 [1] : vector<8x32xf32> to vector<8xf32>
    %106 = vector.shape_cast %105 : vector<8xf32> to vector<8x1xf32>
    %cst_31 = arith.constant 3.200000e+01 : f32
    %107 = vector.broadcast %cst_31 : f32 to vector<8x1xf32>
    %108 = arith.divf %106, %107 : vector<8x1xf32>
    %109 = arith.mulf %100, %100 : vector<8x32xf32>
    %cst_32 = arith.constant dense<0.000000e+00> : vector<8xf32>
    %110 = vector.multi_reduction <add>, %109, %cst_32 [1] : vector<8x32xf32> to vector<8xf32>
    %111 = vector.shape_cast %110 : vector<8xf32> to vector<8x1xf32>
    %cst_33 = arith.constant 3.200000e+01 : f32
    %112 = vector.broadcast %cst_33 : f32 to vector<8x1xf32>
    %113 = arith.divf %111, %112 : vector<8x1xf32>
    %114 = arith.mulf %108, %108 : vector<8x1xf32>
    %115 = arith.subf %113, %114 : vector<8x1xf32>
    %cst_34 = arith.constant 0.000000e+00 : f32
    %116 = vector.broadcast %cst_34 : f32 to vector<8x1xf32>
    %117 = arith.maximumf %115, %116 : vector<8x1xf32>
    %118 = vector.broadcast %108 : vector<8x1xf32> to vector<8x32xf32>
    %119 = arith.subf %100, %118 : vector<8x32xf32>
    %cst_35 = arith.constant 9.99999974E-6 : f32
    %120 = vector.broadcast %cst_35 : f32 to vector<8x1xf32>
    %121 = arith.addf %117, %120 : vector<8x1xf32>
    %122 = math.rsqrt %121 : vector<8x1xf32>
    %123 = vector.broadcast %122 : vector<8x1xf32> to vector<8x32xf32>
    %124 = arith.mulf %119, %123 : vector<8x32xf32>
    %125 = vector.broadcast %102 : vector<1x32xf32> to vector<8x32xf32>
    %126 = arith.mulf %124, %125 : vector<8x32xf32>
    %127 = vector.broadcast %104 : vector<1x32xf32> to vector<8x32xf32>
    %128 = arith.addf %126, %127 : vector<8x32xf32>
    %129 = arith.truncf %128 : vector<8x32xf32> to vector<8x32xbf16>
    %c0_36 = arith.constant 0 : index
    %c0_37 = arith.constant 0 : index
    %c0_38 = arith.constant 0 : index
    %130 = vector.load %arg9[%c0_36, %c0_37, %c0_38] : memref<2x32x96xbf16, #tpu.memory_space<vmem>>, vector<1x32x96xbf16>
    %131 = vector.shape_cast %130 : vector<1x32x96xbf16> to vector<32x96xbf16>
    %cst_39 = arith.constant dense<0.000000e+00> : vector<8x96xf32>
    %132 = tpu.matmul %129, %131, %cst_39 {dimension_numbers = #tpu.dot_dimension_numbers<[1], [0], [0], [1], [0, 0, 1, 1], [], []>} : vector<8x32xbf16>, vector<32x96xbf16>, vector<8x96xf32> -> vector<8x96xf32>
    %c0_40 = arith.constant 0 : index
    %c0_41 = arith.constant 0 : index
    %c0_42 = arith.constant 0 : index
    %133 = vector.load %arg10[%c0_40, %c0_41, %c0_42] : memref<2x1x96xf32, #tpu.memory_space<vmem>>, vector<1x1x96xf32>
    %134 = vector.shape_cast %133 : vector<1x1x96xf32> to vector<1x96xf32>
    %135 = vector.broadcast %134 : vector<1x96xf32> to vector<8x96xf32>
    %136 = arith.addf %132, %135 : vector<8x96xf32>
    %cst_43 = arith.constant 0.000000e+00 : f32
    %137 = vector.broadcast %cst_43 : f32 to vector<8x96xf32>
    %138 = arith.cmpf oge, %136, %137 : vector<8x96xf32>
    %cst_44 = arith.constant 0.00999999977 : f32
    %139 = vector.broadcast %cst_44 : f32 to vector<8x96xf32>
    %140 = arith.mulf %139, %136 : vector<8x96xf32>
    %141 = arith.select %138, %136, %140 : vector<8x96xi1>, vector<8x96xf32>
    %142 = arith.truncf %141 : vector<8x96xf32> to vector<8x96xbf16>
    %c0_45 = arith.constant 0 : index
    %c0_46 = arith.constant 0 : index
    %c0_47 = arith.constant 0 : index
    %143 = vector.load %arg11[%c0_45, %c0_46, %c0_47] : memref<2x96x32xbf16, #tpu.memory_space<vmem>>, vector<1x96x32xbf16>
    %144 = vector.shape_cast %143 : vector<1x96x32xbf16> to vector<96x32xbf16>
    %cst_48 = arith.constant dense<0.000000e+00> : vector<8x32xf32>
    %145 = tpu.matmul %142, %144, %cst_48 {dimension_numbers = #tpu.dot_dimension_numbers<[1], [0], [0], [1], [0, 0, 1, 1], [], []>} : vector<8x96xbf16>, vector<96x32xbf16>, vector<8x32xf32> -> vector<8x32xf32>
    %c0_49 = arith.constant 0 : index
    %c0_50 = arith.constant 0 : index
    %c0_51 = arith.constant 0 : index
    %146 = vector.load %arg12[%c0_49, %c0_50, %c0_51] : memref<2x1x32xf32, #tpu.memory_space<vmem>>, vector<1x1x32xf32>
    %147 = vector.shape_cast %146 : vector<1x1x32xf32> to vector<1x32xf32>
    %148 = vector.broadcast %147 : vector<1x32xf32> to vector<8x32xf32>
    %149 = arith.addf %145, %148 : vector<8x32xf32>
    %150 = arith.addf %149, %128 : vector<8x32xf32>
    %c0_52 = arith.constant 0 : index
    %c0_53 = arith.constant 0 : index
    %c0_54 = arith.constant 0 : index
    %151 = vector.load %arg13[%c0_52, %c0_53, %c0_54] : memref<2x1x32xf32, #tpu.memory_space<vmem>>, vector<1x1x32xf32>
    %152 = vector.shape_cast %151 : vector<1x1x32xf32> to vector<1x32xf32>
    %c0_55 = arith.constant 0 : index
    %c0_56 = arith.constant 0 : index
    %c0_57 = arith.constant 0 : index
    %153 = vector.load %arg14[%c0_55, %c0_56, %c0_57] : memref<2x1x32xf32, #tpu.memory_space<vmem>>, vector<1x1x32xf32>
    %154 = vector.shape_cast %153 : vector<1x1x32xf32> to vector<1x32xf32>
    %cst_58 = arith.constant dense<0.000000e+00> : vector<8xf32>
    %155 = vector.multi_reduction <add>, %150, %cst_58 [1] : vector<8x32xf32> to vector<8xf32>
    %156 = vector.shape_cast %155 : vector<8xf32> to vector<8x1xf32>
    %cst_59 = arith.constant 3.200000e+01 : f32
    %157 = vector.broadcast %cst_59 : f32 to vector<8x1xf32>
    %158 = arith.divf %156, %157 : vector<8x1xf32>
    %159 = arith.mulf %150, %150 : vector<8x32xf32>
    %cst_60 = arith.constant dense<0.000000e+00> : vector<8xf32>
    %160 = vector.multi_reduction <add>, %159, %cst_60 [1] : vector<8x32xf32> to vector<8xf32>
    %161 = vector.shape_cast %160 : vector<8xf32> to vector<8x1xf32>
    %cst_61 = arith.constant 3.200000e+01 : f32
    %162 = vector.broadcast %cst_61 : f32 to vector<8x1xf32>
    %163 = arith.divf %161, %162 : vector<8x1xf32>
    %164 = arith.mulf %158, %158 : vector<8x1xf32>
    %165 = arith.subf %163, %164 : vector<8x1xf32>
    %cst_62 = arith.constant 0.000000e+00 : f32
    %166 = vector.broadcast %cst_62 : f32 to vector<8x1xf32>
    %167 = arith.maximumf %165, %166 : vector<8x1xf32>
    %168 = vector.broadcast %158 : vector<8x1xf32> to vector<8x32xf32>
    %169 = arith.subf %150, %168 : vector<8x32xf32>
    %cst_63 = arith.constant 9.99999974E-6 : f32
    %170 = vector.broadcast %cst_63 : f32 to vector<8x1xf32>
    %171 = arith.addf %167, %170 : vector<8x1xf32>
    %172 = math.rsqrt %171 : vector<8x1xf32>
    %173 = vector.broadcast %172 : vector<8x1xf32> to vector<8x32xf32>
    %174 = arith.mulf %169, %173 : vector<8x32xf32>
    %175 = vector.broadcast %152 : vector<1x32xf32> to vector<8x32xf32>
    %176 = arith.mulf %174, %175 : vector<8x32xf32>
    %177 = vector.broadcast %154 : vector<1x32xf32> to vector<8x32xf32>
    %178 = arith.addf %176, %177 : vector<8x32xf32>
    %179 = arith.truncf %178 : vector<8x32xf32> to vector<8x32xbf16>
    %c1 = arith.constant 1 : index
    %c0_64 = arith.constant 0 : index
    %c0_65 = arith.constant 0 : index
    %180 = vector.load %arg3[%c1, %c0_64, %c0_65] : memref<2x32x64xbf16, #tpu.memory_space<vmem>>, vector<1x32x64xbf16>
    %181 = vector.shape_cast %180 : vector<1x32x64xbf16> to vector<32x64xbf16>
    %cst_66 = arith.constant dense<0.000000e+00> : vector<8x64xf32>
    %182 = tpu.matmul %179, %181, %cst_66 {dimension_numbers = #tpu.dot_dimension_numbers<[1], [0], [0], [1], [0, 0, 1, 1], [], []>} : vector<8x32xbf16>, vector<32x64xbf16>, vector<8x64xf32> -> vector<8x64xf32>
    %c1_67 = arith.constant 1 : index
    %c0_68 = arith.constant 0 : index
    %c0_69 = arith.constant 0 : index
    %183 = vector.load %arg4[%c1_67, %c0_68, %c0_69] : memref<2x1x64xf32, #tpu.memory_space<vmem>>, vector<1x1x64xf32>
    %184 = vector.shape_cast %183 : vector<1x1x64xf32> to vector<1x64xf32>
    %185 = vector.broadcast %184 : vector<1x64xf32> to vector<8x64xf32>
    %186 = arith.addf %182, %185 : vector<8x64xf32>
    %187 = vector.extract_strided_slice %186 {offsets = [0, 0], sizes = [8, 8], strides = [1, 1]} : vector<8x64xf32> to vector<8x8xf32>
    %188 = vector.shape_cast %187 : vector<8x8xf32> to vector<1x8x8xf32>
    %189 = vector.extract_strided_slice %186 {offsets = [0, 8], sizes = [8, 8], strides = [1, 1]} : vector<8x64xf32> to vector<8x8xf32>
    %190 = vector.shape_cast %189 : vector<8x8xf32> to vector<1x8x8xf32>
    %191 = vector.extract_strided_slice %186 {offsets = [0, 16], sizes = [8, 8], strides = [1, 1]} : vector<8x64xf32> to vector<8x8xf32>
    %192 = vector.shape_cast %191 : vector<8x8xf32> to vector<1x8x8xf32>
    %193 = vector.extract_strided_slice %186 {offsets = [0, 24], sizes = [8, 8], strides = [1, 1]} : vector<8x64xf32> to vector<8x8xf32>
    %194 = vector.shape_cast %193 : vector<8x8xf32> to vector<1x8x8xf32>
    %195 = vector.shape_cast %188 : vector<1x8x8xf32> to vector<1x1x8x8xf32>
    %196 = vector.shape_cast %190 : vector<1x8x8xf32> to vector<1x1x8x8xf32>
    %197 = vector.shape_cast %192 : vector<1x8x8xf32> to vector<1x1x8x8xf32>
    %198 = vector.shape_cast %194 : vector<1x8x8xf32> to vector<1x1x8x8xf32>
    %199 = tpu.concatenate %195, %196, %197, %198 in 0 : vector<1x1x8x8xf32>, vector<1x1x8x8xf32>, vector<1x1x8x8xf32>, vector<1x1x8x8xf32> -> vector<4x1x8x8xf32>
    %200 = vector.shape_cast %199 : vector<4x1x8x8xf32> to vector<4x8x8xf32>
    %201 = arith.truncf %200 : vector<4x8x8xf32> to vector<4x8x8xbf16>
    %202 = vector.extract_strided_slice %186 {offsets = [0, 32], sizes = [8, 8], strides = [1, 1]} : vector<8x64xf32> to vector<8x8xf32>
    %203 = vector.shape_cast %202 : vector<8x8xf32> to vector<1x8x8xf32>
    %204 = vector.extract_strided_slice %186 {offsets = [0, 40], sizes = [8, 8], strides = [1, 1]} : vector<8x64xf32> to vector<8x8xf32>
    %205 = vector.shape_cast %204 : vector<8x8xf32> to vector<1x8x8xf32>
    %206 = vector.extract_strided_slice %186 {offsets = [0, 48], sizes = [8, 8], strides = [1, 1]} : vector<8x64xf32> to vector<8x8xf32>
    %207 = vector.shape_cast %206 : vector<8x8xf32> to vector<1x8x8xf32>
    %208 = vector.extract_strided_slice %186 {offsets = [0, 56], sizes = [8, 8], strides = [1, 1]} : vector<8x64xf32> to vector<8x8xf32>
    %209 = vector.shape_cast %208 : vector<8x8xf32> to vector<1x8x8xf32>
    %210 = vector.shape_cast %203 : vector<1x8x8xf32> to vector<1x1x8x8xf32>
    %211 = vector.shape_cast %205 : vector<1x8x8xf32> to vector<1x1x8x8xf32>
    %212 = vector.shape_cast %207 : vector<1x8x8xf32> to vector<1x1x8x8xf32>
    %213 = vector.shape_cast %209 : vector<1x8x8xf32> to vector<1x1x8x8xf32>
    %214 = tpu.concatenate %210, %211, %212, %213 in 0 : vector<1x1x8x8xf32>, vector<1x1x8x8xf32>, vector<1x1x8x8xf32>, vector<1x1x8x8xf32> -> vector<4x1x8x8xf32>
    %215 = vector.shape_cast %214 : vector<4x1x8x8xf32> to vector<4x8x8xf32>
    %216 = arith.truncf %215 : vector<4x8x8xf32> to vector<4x8x8xbf16>
    %217 = vector.extract_strided_slice %178 {offsets = [0, 0], sizes = [8, 8], strides = [1, 1]} : vector<8x32xf32> to vector<8x8xf32>
    %218 = vector.shape_cast %217 : vector<8x8xf32> to vector<1x8x8xf32>
    %219 = vector.extract_strided_slice %178 {offsets = [0, 8], sizes = [8, 8], strides = [1, 1]} : vector<8x32xf32> to vector<8x8xf32>
    %220 = vector.shape_cast %219 : vector<8x8xf32> to vector<1x8x8xf32>
    %221 = vector.extract_strided_slice %178 {offsets = [0, 16], sizes = [8, 8], strides = [1, 1]} : vector<8x32xf32> to vector<8x8xf32>
    %222 = vector.shape_cast %221 : vector<8x8xf32> to vector<1x8x8xf32>
    %223 = vector.extract_strided_slice %178 {offsets = [0, 24], sizes = [8, 8], strides = [1, 1]} : vector<8x32xf32> to vector<8x8xf32>
    %224 = vector.shape_cast %223 : vector<8x8xf32> to vector<1x8x8xf32>
    %225 = vector.shape_cast %218 : vector<1x8x8xf32> to vector<1x1x8x8xf32>
    %226 = vector.shape_cast %220 : vector<1x8x8xf32> to vector<1x1x8x8xf32>
    %227 = vector.shape_cast %222 : vector<1x8x8xf32> to vector<1x1x8x8xf32>
    %228 = vector.shape_cast %224 : vector<1x8x8xf32> to vector<1x1x8x8xf32>
    %229 = tpu.concatenate %225, %226, %227, %228 in 0 : vector<1x1x8x8xf32>, vector<1x1x8x8xf32>, vector<1x1x8x8xf32>, vector<1x1x8x8xf32> -> vector<4x1x8x8xf32>
    %230 = vector.shape_cast %229 : vector<4x1x8x8xf32> to vector<4x8x8xf32>
    %231 = arith.truncf %230 : vector<4x8x8xf32> to vector<4x8x8xbf16>
    "tpu.trace_start"() <{level = 10 : i32, message = "gqd,gkd->gqk"}> : () -> ()
    %cst_70 = arith.constant dense<0.000000e+00> : vector<4x8x8xf32>
    %232 = tpu.matmul %201, %231, %cst_70 {dimension_numbers = #tpu.dot_dimension_numbers<[2], [2], [1], [1], [0, 0, 0, 1, 1, 1], [0], [0]>} : vector<4x8x8xbf16>, vector<4x8x8xbf16>, vector<4x8x8xf32> -> vector<4x8x8xf32>
    "tpu.trace_stop"() : () -> ()
    %233 = arith.addf %232, %6 : vector<4x8x8xf32>
    %cst_71 = arith.constant dense<0xFF800000> : vector<4x8xf32>
    %234 = vector.multi_reduction <maximumf>, %233, %cst_71 [2] : vector<4x8x8xf32> to vector<4x8xf32>
    %235 = vector.shape_cast %234 : vector<4x8xf32> to vector<4x8x1xf32>
    %236 = vector.broadcast %235 : vector<4x8x1xf32> to vector<4x8x8xf32>
    %237 = arith.subf %233, %236 : vector<4x8x8xf32>
    %238 = math.exp %237 : vector<4x8x8xf32>
    %cst_72 = arith.constant dense<0.000000e+00> : vector<4x8xf32>
    %239 = vector.multi_reduction <add>, %238, %cst_72 [2] : vector<4x8x8xf32> to vector<4x8xf32>
    %240 = vector.shape_cast %239 : vector<4x8xf32> to vector<4x8x1xf32>
    %241 = vector.broadcast %240 : vector<4x8x1xf32> to vector<4x8x8xf32>
    %242 = arith.divf %238, %241 : vector<4x8x8xf32>
    %243 = arith.truncf %242 : vector<4x8x8xf32> to vector<4x8x8xbf16>
    "tpu.trace_start"() <{level = 10 : i32, message = "gqk,gkd->gqd"}> : () -> ()
    %cst_73 = arith.constant dense<0.000000e+00> : vector<4x8x8xf32>
    %244 = tpu.matmul %243, %216, %cst_73 {dimension_numbers = #tpu.dot_dimension_numbers<[2], [1], [1], [2], [0, 0, 0, 1, 1, 2], [0], [0]>} : vector<4x8x8xbf16>, vector<4x8x8xbf16>, vector<4x8x8xf32> -> vector<4x8x8xf32>
    "tpu.trace_stop"() : () -> ()
    %245 = vector.shape_cast %244 : vector<4x8x8xf32> to vector<4x1x8x8xf32>
    %246 = vector.extract_strided_slice %245 {offsets = [0, 0, 0, 0], sizes = [1, 1, 8, 8], strides = [1, 1, 1, 1]} : vector<4x1x8x8xf32> to vector<1x1x8x8xf32>
    %247 = vector.shape_cast %246 : vector<1x1x8x8xf32> to vector<1x8x8xf32>
    %248 = vector.shape_cast %247 : vector<1x8x8xf32> to vector<8x8xf32>
    %249 = vector.extract_strided_slice %245 {offsets = [1, 0, 0, 0], sizes = [1, 1, 8, 8], strides = [1, 1, 1, 1]} : vector<4x1x8x8xf32> to vector<1x1x8x8xf32>
    %250 = vector.shape_cast %249 : vector<1x1x8x8xf32> to vector<1x8x8xf32>
    %251 = vector.shape_cast %250 : vector<1x8x8xf32> to vector<8x8xf32>
    %252 = vector.extract_strided_slice %245 {offsets = [2, 0, 0, 0], sizes = [1, 1, 8, 8], strides = [1, 1, 1, 1]} : vector<4x1x8x8xf32> to vector<1x1x8x8xf32>
    %253 = vector.shape_cast %252 : vector<1x1x8x8xf32> to vector<1x8x8xf32>
    %254 = vector.shape_cast %253 : vector<1x8x8xf32> to vector<8x8xf32>
    %255 = vector.extract_strided_slice %245 {offsets = [3, 0, 0, 0], sizes = [1, 1, 8, 8], strides = [1, 1, 1, 1]} : vector<4x1x8x8xf32> to vector<1x1x8x8xf32>
    %256 = vector.shape_cast %255 : vector<1x1x8x8xf32> to vector<1x8x8xf32>
    %257 = vector.shape_cast %256 : vector<1x8x8xf32> to vector<8x8xf32>
    %258 = tpu.concatenate %248, %251, %254, %257 in 1 : vector<8x8xf32>, vector<8x8xf32>, vector<8x8xf32>, vector<8x8xf32> -> vector<8x32xf32>
    %259 = arith.truncf %258 : vector<8x32xf32> to vector<8x32xbf16>
    %c1_74 = arith.constant 1 : index
    %c0_75 = arith.constant 0 : index
    %c0_76 = arith.constant 0 : index
    %260 = vector.load %arg5[%c1_74, %c0_75, %c0_76] : memref<2x32x32xbf16, #tpu.memory_space<vmem>>, vector<1x32x32xbf16>
    %261 = vector.shape_cast %260 : vector<1x32x32xbf16> to vector<32x32xbf16>
    %cst_77 = arith.constant dense<0.000000e+00> : vector<8x32xf32>
    %262 = tpu.matmul %259, %261, %cst_77 {dimension_numbers = #tpu.dot_dimension_numbers<[1], [0], [0], [1], [0, 0, 1, 1], [], []>} : vector<8x32xbf16>, vector<32x32xbf16>, vector<8x32xf32> -> vector<8x32xf32>
    %c1_78 = arith.constant 1 : index
    %c0_79 = arith.constant 0 : index
    %c0_80 = arith.constant 0 : index
    %263 = vector.load %arg6[%c1_78, %c0_79, %c0_80] : memref<2x1x32xf32, #tpu.memory_space<vmem>>, vector<1x1x32xf32>
    %264 = vector.shape_cast %263 : vector<1x1x32xf32> to vector<1x32xf32>
    %265 = vector.broadcast %264 : vector<1x32xf32> to vector<8x32xf32>
    %266 = arith.addf %262, %265 : vector<8x32xf32>
    %cst_81 = arith.constant 0.000000e+00 : f32
    %267 = vector.broadcast %cst_81 : f32 to vector<8x32xf32>
    %268 = arith.cmpf oge, %266, %267 : vector<8x32xf32>
    %cst_82 = arith.constant 0.00999999977 : f32
    %269 = vector.broadcast %cst_82 : f32 to vector<8x32xf32>
    %270 = arith.mulf %269, %266 : vector<8x32xf32>
    %271 = arith.select %268, %266, %270 : vector<8x32xi1>, vector<8x32xf32>
    %272 = arith.addf %271, %178 : vector<8x32xf32>
    %c1_83 = arith.constant 1 : index
    %c0_84 = arith.constant 0 : index
    %c0_85 = arith.constant 0 : index
    %273 = vector.load %arg7[%c1_83, %c0_84, %c0_85] : memref<2x1x32xf32, #tpu.memory_space<vmem>>, vector<1x1x32xf32>
    %274 = vector.shape_cast %273 : vector<1x1x32xf32> to vector<1x32xf32>
    %c1_86 = arith.constant 1 : index
    %c0_87 = arith.constant 0 : index
    %c0_88 = arith.constant 0 : index
    %275 = vector.load %arg8[%c1_86, %c0_87, %c0_88] : memref<2x1x32xf32, #tpu.memory_space<vmem>>, vector<1x1x32xf32>
    %276 = vector.shape_cast %275 : vector<1x1x32xf32> to vector<1x32xf32>
    %cst_89 = arith.constant dense<0.000000e+00> : vector<8xf32>
    %277 = vector.multi_reduction <add>, %272, %cst_89 [1] : vector<8x32xf32> to vector<8xf32>
    %278 = vector.shape_cast %277 : vector<8xf32> to vector<8x1xf32>
    %cst_90 = arith.constant 3.200000e+01 : f32
    %279 = vector.broadcast %cst_90 : f32 to vector<8x1xf32>
    %280 = arith.divf %278, %279 : vector<8x1xf32>
    %281 = arith.mulf %272, %272 : vector<8x32xf32>
    %cst_91 = arith.constant dense<0.000000e+00> : vector<8xf32>
    %282 = vector.multi_reduction <add>, %281, %cst_91 [1] : vector<8x32xf32> to vector<8xf32>
    %283 = vector.shape_cast %282 : vector<8xf32> to vector<8x1xf32>
    %cst_92 = arith.constant 3.200000e+01 : f32
    %284 = vector.broadcast %cst_92 : f32 to vector<8x1xf32>
    %285 = arith.divf %283, %284 : vector<8x1xf32>
    %286 = arith.mulf %280, %280 : vector<8x1xf32>
    %287 = arith.subf %285, %286 : vector<8x1xf32>
    %cst_93 = arith.constant 0.000000e+00 : f32
    %288 = vector.broadcast %cst_93 : f32 to vector<8x1xf32>
    %289 = arith.maximumf %287, %288 : vector<8x1xf32>
    %290 = vector.broadcast %280 : vector<8x1xf32> to vector<8x32xf32>
    %291 = arith.subf %272, %290 : vector<8x32xf32>
    %cst_94 = arith.constant 9.99999974E-6 : f32
    %292 = vector.broadcast %cst_94 : f32 to vector<8x1xf32>
    %293 = arith.addf %289, %292 : vector<8x1xf32>
    %294 = math.rsqrt %293 : vector<8x1xf32>
    %295 = vector.broadcast %294 : vector<8x1xf32> to vector<8x32xf32>
    %296 = arith.mulf %291, %295 : vector<8x32xf32>
    %297 = vector.broadcast %274 : vector<1x32xf32> to vector<8x32xf32>
    %298 = arith.mulf %296, %297 : vector<8x32xf32>
    %299 = vector.broadcast %276 : vector<1x32xf32> to vector<8x32xf32>
    %300 = arith.addf %298, %299 : vector<8x32xf32>
    %301 = arith.truncf %300 : vector<8x32xf32> to vector<8x32xbf16>
    %c1_95 = arith.constant 1 : index
    %c0_96 = arith.constant 0 : index
    %c0_97 = arith.constant 0 : index
    %302 = vector.load %arg9[%c1_95, %c0_96, %c0_97] : memref<2x32x96xbf16, #tpu.memory_space<vmem>>, vector<1x32x96xbf16>
    %303 = vector.shape_cast %302 : vector<1x32x96xbf16> to vector<32x96xbf16>
    %cst_98 = arith.constant dense<0.000000e+00> : vector<8x96xf32>
    %304 = tpu.matmul %301, %303, %cst_98 {dimension_numbers = #tpu.dot_dimension_numbers<[1], [0], [0], [1], [0, 0, 1, 1], [], []>} : vector<8x32xbf16>, vector<32x96xbf16>, vector<8x96xf32> -> vector<8x96xf32>
    %c1_99 = arith.constant 1 : index
    %c0_100 = arith.constant 0 : index
    %c0_101 = arith.constant 0 : index
    %305 = vector.load %arg10[%c1_99, %c0_100, %c0_101] : memref<2x1x96xf32, #tpu.memory_space<vmem>>, vector<1x1x96xf32>
    %306 = vector.shape_cast %305 : vector<1x1x96xf32> to vector<1x96xf32>
    %307 = vector.broadcast %306 : vector<1x96xf32> to vector<8x96xf32>
    %308 = arith.addf %304, %307 : vector<8x96xf32>
    %cst_102 = arith.constant 0.000000e+00 : f32
    %309 = vector.broadcast %cst_102 : f32 to vector<8x96xf32>
    %310 = arith.cmpf oge, %308, %309 : vector<8x96xf32>
    %cst_103 = arith.constant 0.00999999977 : f32
    %311 = vector.broadcast %cst_103 : f32 to vector<8x96xf32>
    %312 = arith.mulf %311, %308 : vector<8x96xf32>
    %313 = arith.select %310, %308, %312 : vector<8x96xi1>, vector<8x96xf32>
    %314 = arith.truncf %313 : vector<8x96xf32> to vector<8x96xbf16>
    %c1_104 = arith.constant 1 : index
    %c0_105 = arith.constant 0 : index
    %c0_106 = arith.constant 0 : index
    %315 = vector.load %arg11[%c1_104, %c0_105, %c0_106] : memref<2x96x32xbf16, #tpu.memory_space<vmem>>, vector<1x96x32xbf16>
    %316 = vector.shape_cast %315 : vector<1x96x32xbf16> to vector<96x32xbf16>
    %cst_107 = arith.constant dense<0.000000e+00> : vector<8x32xf32>
    %317 = tpu.matmul %314, %316, %cst_107 {dimension_numbers = #tpu.dot_dimension_numbers<[1], [0], [0], [1], [0, 0, 1, 1], [], []>} : vector<8x96xbf16>, vector<96x32xbf16>, vector<8x32xf32> -> vector<8x32xf32>
    %c1_108 = arith.constant 1 : index
    %c0_109 = arith.constant 0 : index
    %c0_110 = arith.constant 0 : index
    %318 = vector.load %arg12[%c1_108, %c0_109, %c0_110] : memref<2x1x32xf32, #tpu.memory_space<vmem>>, vector<1x1x32xf32>
    %319 = vector.shape_cast %318 : vector<1x1x32xf32> to vector<1x32xf32>
    %320 = vector.broadcast %319 : vector<1x32xf32> to vector<8x32xf32>
    %321 = arith.addf %317, %320 : vector<8x32xf32>
    %322 = arith.addf %321, %300 : vector<8x32xf32>
    %c1_111 = arith.constant 1 : index
    %c0_112 = arith.constant 0 : index
    %c0_113 = arith.constant 0 : index
    %323 = vector.load %arg13[%c1_111, %c0_112, %c0_113] : memref<2x1x32xf32, #tpu.memory_space<vmem>>, vector<1x1x32xf32>
    %324 = vector.shape_cast %323 : vector<1x1x32xf32> to vector<1x32xf32>
    %c1_114 = arith.constant 1 : index
    %c0_115 = arith.constant 0 : index
    %c0_116 = arith.constant 0 : index
    %325 = vector.load %arg14[%c1_114, %c0_115, %c0_116] : memref<2x1x32xf32, #tpu.memory_space<vmem>>, vector<1x1x32xf32>
    %326 = vector.shape_cast %325 : vector<1x1x32xf32> to vector<1x32xf32>
    %cst_117 = arith.constant dense<0.000000e+00> : vector<8xf32>
    %327 = vector.multi_reduction <add>, %322, %cst_117 [1] : vector<8x32xf32> to vector<8xf32>
    %328 = vector.shape_cast %327 : vector<8xf32> to vector<8x1xf32>
    %cst_118 = arith.constant 3.200000e+01 : f32
    %329 = vector.broadcast %cst_118 : f32 to vector<8x1xf32>
    %330 = arith.divf %328, %329 : vector<8x1xf32>
    %331 = arith.mulf %322, %322 : vector<8x32xf32>
    %cst_119 = arith.constant dense<0.000000e+00> : vector<8xf32>
    %332 = vector.multi_reduction <add>, %331, %cst_119 [1] : vector<8x32xf32> to vector<8xf32>
    %333 = vector.shape_cast %332 : vector<8xf32> to vector<8x1xf32>
    %cst_120 = arith.constant 3.200000e+01 : f32
    %334 = vector.broadcast %cst_120 : f32 to vector<8x1xf32>
    %335 = arith.divf %333, %334 : vector<8x1xf32>
    %336 = arith.mulf %330, %330 : vector<8x1xf32>
    %337 = arith.subf %335, %336 : vector<8x1xf32>
    %cst_121 = arith.constant 0.000000e+00 : f32
    %338 = vector.broadcast %cst_121 : f32 to vector<8x1xf32>
    %339 = arith.maximumf %337, %338 : vector<8x1xf32>
    %340 = vector.broadcast %330 : vector<8x1xf32> to vector<8x32xf32>
    %341 = arith.subf %322, %340 : vector<8x32xf32>
    %cst_122 = arith.constant 9.99999974E-6 : f32
    %342 = vector.broadcast %cst_122 : f32 to vector<8x1xf32>
    %343 = arith.addf %339, %342 : vector<8x1xf32>
    %344 = math.rsqrt %343 : vector<8x1xf32>
    %345 = vector.broadcast %344 : vector<8x1xf32> to vector<8x32xf32>
    %346 = arith.mulf %341, %345 : vector<8x32xf32>
    %347 = vector.broadcast %324 : vector<1x32xf32> to vector<8x32xf32>
    %348 = arith.mulf %346, %347 : vector<8x32xf32>
    %349 = vector.broadcast %326 : vector<1x32xf32> to vector<8x32xf32>
    %350 = arith.addf %348, %349 : vector<8x32xf32>
    %351 = vector.shape_cast %350 : vector<8x32xf32> to vector<1x8x32xf32>
    %c0_123 = arith.constant 0 : index
    %c0_124 = arith.constant 0 : index
    %c0_125 = arith.constant 0 : index
    %352 = vector.load %arg15[%c0_123, %c0_124, %c0_125] : memref<1x8x32xf32, #tpu.memory_space<vmem>>, vector<1x8x32xf32>
    tpu.vector_store %arg15[%c0_123, %c0_124, %c0_125], %351 {strides = array<i32>} : memref<1x8x32xf32, #tpu.memory_space<vmem>>, vector<1x8x32xf32>,
    return
  }
  func.func @transform_0(%arg0: i32) -> (i32, i32, i32) {
    %c0_i32 = arith.constant 0 : i32
    %c0_i32_0 = arith.constant 0 : i32
    %c0_i32_1 = arith.constant 0 : i32
    return %arg0, %c0_i32, %c0_i32_0 : i32, i32, i32
  }
  func.func @transform_1(%arg0: i32) -> (i32, i32, i32) {
    %c0_i32 = arith.constant 0 : i32
    %c0_i32_0 = arith.constant 0 : i32
    %c0_i32_1 = arith.constant 0 : i32
    return %arg0, %c0_i32, %c0_i32_0 : i32, i32, i32
  }
  func.func @transform_2(%arg0: i32) -> (i32, i32, i32) {
    %c0_i32 = arith.constant 0 : i32
    %c0_i32_0 = arith.constant 0 : i32
    %c0_i32_1 = arith.constant 0 : i32
    %c0_i32_2 = arith.constant 0 : i32
    return %c0_i32, %c0_i32_0, %c0_i32_1 : i32, i32, i32
  }
  func.func @transform_3(%arg0: i32) -> (i32, i32, i32) {
    %c0_i32 = arith.constant 0 : i32
    %c0_i32_0 = arith.constant 0 : i32
    %c0_i32_1 = arith.constant 0 : i32
    %c0_i32_2 = arith.constant 0 : i32
    return %c0_i32, %c0_i32_0, %c0_i32_1 : i32, i32, i32
  }
  func.func @transform_4(%arg0: i32) -> (i32, i32, i32) {
    %c0_i32 = arith.constant 0 : i32
    %c0_i32_0 = arith.constant 0 : i32
    %c0_i32_1 = arith.constant 0 : i32
    %c0_i32_2 = arith.constant 0 : i32
    return %c0_i32, %c0_i32_0, %c0_i32_1 : i32, i32, i32
  }
  func.func @transform_5(%arg0: i32) -> (i32, i32, i32) {
    %c0_i32 = arith.constant 0 : i32
    %c0_i32_0 = arith.constant 0 : i32
    %c0_i32_1 = arith.constant 0 : i32
    %c0_i32_2 = arith.constant 0 : i32
    return %c0_i32, %c0_i32_0, %c0_i32_1 : i32, i32, i32
  }
  func.func @transform_6(%arg0: i32) -> (i32, i32, i32) {
    %c0_i32 = arith.constant 0 : i32
    %c0_i32_0 = arith.constant 0 : i32
    %c0_i32_1 = arith.constant 0 : i32
    %c0_i32_2 = arith.constant 0 : i32
    return %c0_i32, %c0_i32_0, %c0_i32_1 : i32, i32, i32
  }
  func.func @transform_7(%arg0: i32) -> (i32, i32, i32) {
    %c0_i32 = arith.constant 0 : i32
    %c0_i32_0 = arith.constant 0 : i32
    %c0_i32_1 = arith.constant 0 : i32
    %c0_i32_2 = arith.constant 0 : i32
    return %c0_i32, %c0_i32_0, %c0_i32_1 : i32, i32, i32
  }
  func.func @transform_8(%arg0: i32) -> (i32, i32, i32) {
    %c0_i32 = arith.constant 0 : i32
    %c0_i32_0 = arith.constant 0 : i32
    %c0_i32_1 = arith.constant 0 : i32
    %c0_i32_2 = arith.constant 0 : i32
    return %c0_i32, %c0_i32_0, %c0_i32_1 : i32, i32, i32
  }
  func.func @transform_9(%arg0: i32) -> (i32, i32, i32) {
    %c0_i32 = arith.constant 0 : i32
    %c0_i32_0 = arith.constant 0 : i32
    %c0_i32_1 = arith.constant 0 : i32
    %c0_i32_2 = arith.constant 0 : i32
    return %c0_i32, %c0_i32_0, %c0_i32_1 : i32, i32, i32
  }
  func.func @transform_10(%arg0: i32) -> (i32, i32, i32) {
    %c0_i32 = arith.constant 0 : i32
    %c0_i32_0 = arith.constant 0 : i32
    %c0_i32_1 = arith.constant 0 : i32
    %c0_i32_2 = arith.constant 0 : i32
    return %c0_i32, %c0_i32_0, %c0_i32_1 : i32, i32, i32
  }
  func.func @transform_11(%arg0: i32) -> (i32, i32, i32) {
    %c0_i32 = arith.constant 0 : i32
    %c0_i32_0 = arith.constant 0 : i32
    %c0_i32_1 = arith.constant 0 : i32
    %c0_i32_2 = arith.constant 0 : i32
    return %c0_i32, %c0_i32_0, %c0_i32_1 : i32, i32, i32
  }
  func.func @transform_12(%arg0: i32) -> (i32, i32, i32) {
    %c0_i32 = arith.constant 0 : i32
    %c0_i32_0 = arith.constant 0 : i32
    %c0_i32_1 = arith.constant 0 : i32
    %c0_i32_2 = arith.constant 0 : i32
    return %c0_i32, %c0_i32_0, %c0_i32_1 : i32, i32, i32
  }
  func.func @transform_13(%arg0: i32) -> (i32, i32, i32) {
    %c0_i32 = arith.constant 0 : i32
    %c0_i32_0 = arith.constant 0 : i32
    %c0_i32_1 = arith.constant 0 : i32
    %c0_i32_2 = arith.constant 0 : i32
    return %c0_i32, %c0_i32_0, %c0_i32_1 : i32, i32, i32
  }
  func.func @transform_14(%arg0: i32) -> (i32, i32, i32) {
    %c0_i32 = arith.constant 0 : i32
    %c0_i32_0 = arith.constant 0 : i32
    %c0_i32_1 = arith.constant 0 : i32
    return %arg0, %c0_i32, %c0_i32_0 : i32, i32, i32
  }
}

</mosaic_0001>

<llo_original>
// kernel: tpu_custom_call.1
$region0: #{tpu_custom_call.1}
  #allocation0 [shape = 'u32[]', space=smem, size = 0x4, offset = 0x4, fixed_abs, tag = 'smem constant byte address 0x4 - core index']
  #allocation1 [shape = 'u32[144,128]{1,0:T(1,128)}', space=vmem, size = 0x12000, scoped, tag = 'internal scratch']
  %s0 = inlined_call_operand.vmem [shape: f32[2,8,32], index: 0, kind: input, shape index: {}]
  %s1 = inlined_call_operand.vmem [shape: f32[2,1,8], index: 1, kind: input, shape index: {}]
  %s2 = inlined_call_operand.vmem [shape: bf16[2,32,64], index: 2, kind: input, shape index: {}]
  %s3 = inlined_call_operand.vmem [shape: f32[2,1,64], index: 3, kind: input, shape index: {}]
  %s4 = inlined_call_operand.vmem [shape: bf16[2,32,32], index: 4, kind: input, shape index: {}]
  %s5 = inlined_call_operand.vmem [shape: f32[2,1,32], index: 5, kind: input, shape index: {}]
  %s6 = inlined_call_operand.vmem [shape: f32[2,1,32], index: 6, kind: input, shape index: {}]
  %s7 = inlined_call_operand.vmem [shape: f32[2,1,32], index: 7, kind: input, shape index: {}]
  %s8 = inlined_call_operand.vmem [shape: bf16[2,32,96], index: 8, kind: input, shape index: {}]
  %s9 = inlined_call_operand.vmem [shape: f32[2,1,96], index: 9, kind: input, shape index: {}]
  %s10 = inlined_call_operand.vmem [shape: bf16[2,96,32], index: 10, kind: input, shape index: {}]
  %s11 = inlined_call_operand.vmem [shape: f32[2,1,32], index: 11, kind: input, shape index: {}]
  %s12 = inlined_call_operand.vmem [shape: f32[2,1,32], index: 12, kind: input, shape index: {}]
  %s13 = inlined_call_operand.vmem [shape: f32[2,1,32], index: 13, kind: input, shape index: {}]
  %s14 = inlined_call_operand.hbm [shape: f32[2,8,32], index: 14, kind: output, shape index: {}]
  %s15 = sld [smem:[#allocation0]]
  $region89: #{tpu_custom_call.1} parent=0
    _
  %s17 = ssub.s32 1, %s15
  %s18 = scalar_select 0, %s17, %s15
  $region1: #{tpu_custom_call.1} parent=0
    #allocation2 [shape = 'u8[8192]{0}', space=vmem, size = 0x2000, scoped, tag = 'output window, operand 0']
    #allocation3 [shape = 's32[2]{0}', space=sflag, size = 0x8, scoped, tag = 'scoped memory for tpu_custom_call.1']
    %19 = vsyncpa [#allocation3], 0
    %s20 = scalar_lea.sflag [#allocation3], 1
    %21 = vsyncpa %s20, 0
    loop: start=0, step=1, limit=4
    $region2: #{tpu_custom_call.1} parent=1 // loop_pre_header
      _
    $region3: #{tpu_custom_call.1} parent=1 // loop_header
      %s23 = sphi 0, %s27
      %p24 = scmp.ge.s32.totalorder %s23, 4
      %s33 = sphi 0, %s35
      %s36 = sphi 0, %s33
      %s37 = sphi 0, %s36
      %s53 = sphi 0, %s37
      %s59 = sphi 0, %s61
      %s62 = sphi 0, %s59
      %s63 = sphi 0, %s62
      %s79 = sphi 0, %s63
      %s83 = sphi 0, %s83
      %s85 = sphi 0, %s83
      %s86 = sphi 0, %s85
      %s100 = sphi 0, %s86
      %s104 = sphi 0, %s104
      %s106 = sphi 0, %s104
      %s107 = sphi 0, %s106
      %s121 = sphi 0, %s107
      %s125 = sphi 0, %s125
      %s127 = sphi 0, %s125
      %s128 = sphi 0, %s127
      %s142 = sphi 0, %s128
      %s146 = sphi 0, %s146
      %s148 = sphi 0, %s146
      %s149 = sphi 0, %s148
      %s163 = sphi 0, %s149
      %s167 = sphi 0, %s167
      %s169 = sphi 0, %s167
      %s170 = sphi 0, %s169
      %s184 = sphi 0, %s170
      %s188 = sphi 0, %s188
      %s190 = sphi 0, %s188
      %s191 = sphi 0, %s190
      %s205 = sphi 0, %s191
      %s209 = sphi 0, %s209
      %s211 = sphi 0, %s209
      %s212 = sphi 0, %s211
      %s226 = sphi 0, %s212
      %s230 = sphi 0, %s230
      %s232 = sphi 0, %s230
      %s233 = sphi 0, %s232
      %s247 = sphi 0, %s233
      %s251 = sphi 0, %s251
      %s253 = sphi 0, %s251
      %s254 = sphi 0, %s253
      %s268 = sphi 0, %s254
      %s272 = sphi 0, %s272
      %s274 = sphi 0, %s272
      %s275 = sphi 0, %s274
      %s289 = sphi 0, %s275
      %s293 = sphi 0, %s293
      %s295 = sphi 0, %s293
      %s296 = sphi 0, %s295
      %s310 = sphi 0, %s296
      %s314 = sphi 0, %s314
      %s316 = sphi 0, %s314
      %s317 = sphi 0, %s316
      %s331 = sphi 0, %s317
      %s337 = sphi 0, %s339
      %s340 = sphi 0, %s337
      %s341 = sphi 0, %s340
      %s357 = sphi 0, %s341
    $region4: #{tpu_custom_call.1} parent=1 // loop_header_branch
      %26 = sbr.rel (%p24) target = $region8
    $region5: #{tpu_custom_call.1} parent=1 // loop_body
      %s28 = ssub.s32 %s23, 1
      %s29 = ssub.s32 %s23, 2
      %s30 = sadd.s32 %s23, 1
      %s31 = ssub.s32 %s23, %s30
      %p32 = scmp.eq.s32.totalorder %s31, 0
      %s34 = sadd.s32 %s33, 1
      %s35 = scalar_select %p32, %s33, %s34
      %p38 = pneg %p32
      %p39 = scmp.eq.s32.totalorder %s23, 1
      %p40 = por %p38, %p39
      %p41 = scmp.ne.s32.totalorder %s33, %s36
      %p42 = scmp.eq.s32.totalorder %s23, 0
      %p43 = por %p41, %p42
      %p44 = scmp.ne.s32.totalorder %s33, %s36
      %p45 = scmp.eq.s32.totalorder %s28, 1
      %p46 = por %p44, %p45
      %p47 = scmp.ne.s32.totalorder %s36, %s37
      %p48 = scmp.eq.s32.totalorder %s28, 0
      %p49 = por %p47, %p48
      %p50 = scmp.ne.s32.totalorder %s36, %s37
      %p51 = scmp.eq.s32.totalorder %s29, 1
      %p52 = por %p50, %p51
      %p54 = scmp.ne.s32.totalorder %s37, %s53
      %p55 = scmp.eq.s32.totalorder %s29, 0
      %p56 = por %p54, %p55
      %s57 = ssub.s32 %s23, %s30
      %p58 = scmp.eq.s32.totalorder %s57, 0
      %s60 = sadd.s32 %s59, 1
      %s61 = scalar_select %p58, %s59, %s60
      %p64 = pneg %p58
      %p65 = scmp.eq.s32.totalorder %s23, 1
      %p66 = por %p64, %p65
      %p67 = scmp.ne.s32.totalorder %s59, %s62
      %p68 = scmp.eq.s32.totalorder %s23, 0
      %p69 = por %p67, %p68
      %p70 = scmp.ne.s32.totalorder %s59, %s62
      %p71 = scmp.eq.s32.totalorder %s28, 1
      %p72 = por %p70, %p71
      %p73 = scmp.ne.s32.totalorder %s62, %s63
      %p74 = scmp.eq.s32.totalorder %s28, 0
      %p75 = por %p73, %p74
      %p76 = scmp.ne.s32.totalorder %s62, %s63
      %p77 = scmp.eq.s32.totalorder %s29, 1
      %p78 = por %p76, %p77
      %p80 = scmp.ne.s32.totalorder %s63, %s79
      %p81 = scmp.eq.s32.totalorder %s29, 0
      %p82 = por %p80, %p81
      %s84 = sadd.s32 %s83, 1
      %p87 = scmp.eq.s32.totalorder %s23, 1
      %p88 = scmp.ne.s32.totalorder %s83, %s85
      %p89 = scmp.eq.s32.totalorder %s23, 0
      %p90 = por %p88, %p89
      %p91 = scmp.ne.s32.totalorder %s83, %s85
      %p92 = scmp.eq.s32.totalorder %s28, 1
      %p93 = por %p91, %p92
      %p94 = scmp.ne.s32.totalorder %s85, %s86
      %p95 = scmp.eq.s32.totalorder %s28, 0
      %p96 = por %p94, %p95
      %p97 = scmp.ne.s32.totalorder %s85, %s86
      %p98 = scmp.eq.s32.totalorder %s29, 1
      %p99 = por %p97, %p98
      %p101 = scmp.ne.s32.totalorder %s86, %s100
      %p102 = scmp.eq.s32.totalorder %s29, 0
      %p103 = por %p101, %p102
      %s105 = sadd.s32 %s104, 1
      %p108 = scmp.eq.s32.totalorder %s23, 1
      %p109 = scmp.ne.s32.totalorder %s104, %s106
      %p110 = scmp.eq.s32.totalorder %s23, 0
      %p111 = por %p109, %p110
      %p112 = scmp.ne.s32.totalorder %s104, %s106
      %p113 = scmp.eq.s32.totalorder %s28, 1
      %p114 = por %p112, %p113
      %p115 = scmp.ne.s32.totalorder %s106, %s107
      %p116 = scmp.eq.s32.totalorder %s28, 0
      %p117 = por %p115, %p116
      %p118 = scmp.ne.s32.totalorder %s106, %s107
      %p119 = scmp.eq.s32.totalorder %s29, 1
      %p120 = por %p118, %p119
      %p122 = scmp.ne.s32.totalorder %s107, %s121
      %p123 = scmp.eq.s32.totalorder %s29, 0
      %p124 = por %p122, %p123
      %s126 = sadd.s32 %s125, 1
      %p129 = scmp.eq.s32.totalorder %s23, 1
      %p130 = scmp.ne.s32.totalorder %s125, %s127
      %p131 = scmp.eq.s32.totalorder %s23, 0
      %p132 = por %p130, %p131
      %p133 = scmp.ne.s32.totalorder %s125, %s127
      %p134 = scmp.eq.s32.totalorder %s28, 1
      %p135 = por %p133, %p134
      %p136 = scmp.ne.s32.totalorder %s127, %s128
      %p137 = scmp.eq.s32.totalorder %s28, 0
      %p138 = por %p136, %p137
      %p139 = scmp.ne.s32.totalorder %s127, %s128
      %p140 = scmp.eq.s32.totalorder %s29, 1
      %p141 = por %p139, %p140
      %p143 = scmp.ne.s32.totalorder %s128, %s142
      %p144 = scmp.eq.s32.totalorder %s29, 0
      %p145 = por %p143, %p144
      %s147 = sadd.s32 %s146, 1
      %p150 = scmp.eq.s32.totalorder %s23, 1
      %p151 = scmp.ne.s32.totalorder %s146, %s148
      %p152 = scmp.eq.s32.totalorder %s23, 0
      %p153 = por %p151, %p152
      %p154 = scmp.ne.s32.totalorder %s146, %s148
      %p155 = scmp.eq.s32.totalorder %s28, 1
      %p156 = por %p154, %p155
      %p157 = scmp.ne.s32.totalorder %s148, %s149
      %p158 = scmp.eq.s32.totalorder %s28, 0
      %p159 = por %p157, %p158
      %p160 = scmp.ne.s32.totalorder %s148, %s149
      %p161 = scmp.eq.s32.totalorder %s29, 1
      %p162 = por %p160, %p161
      %p164 = scmp.ne.s32.totalorder %s149, %s163
      %p165 = scmp.eq.s32.totalorder %s29, 0
      %p166 = por %p164, %p165
      %s168 = sadd.s32 %s167, 1
      %p171 = scmp.eq.s32.totalorder %s23, 1
      %p172 = scmp.ne.s32.totalorder %s167, %s169
      %p173 = scmp.eq.s32.totalorder %s23, 0
      %p174 = por %p172, %p173
      %p175 = scmp.ne.s32.totalorder %s167, %s169
      %p176 = scmp.eq.s32.totalorder %s28, 1
      %p177 = por %p175, %p176
      %p178 = scmp.ne.s32.totalorder %s169, %s170
      %p179 = scmp.eq.s32.totalorder %s28, 0
      %p180 = por %p178, %p179
      %p181 = scmp.ne.s32.totalorder %s169, %s170
      %p182 = scmp.eq.s32.totalorder %s29, 1
      %p183 = por %p181, %p182
      %p185 = scmp.ne.s32.totalorder %s170, %s184
      %p186 = scmp.eq.s32.totalorder %s29, 0
      %p187 = por %p185, %p186
      %s189 = sadd.s32 %s188, 1
      %p192 = scmp.eq.s32.totalorder %s23, 1
      %p193 = scmp.ne.s32.totalorder %s188, %s190
      %p194 = scmp.eq.s32.totalorder %s23, 0
      %p195 = por %p193, %p194
      %p196 = scmp.ne.s32.totalorder %s188, %s190
      %p197 = scmp.eq.s32.totalorder %s28, 1
      %p198 = por %p196, %p197
      %p199 = scmp.ne.s32.totalorder %s190, %s191
      %p200 = scmp.eq.s32.totalorder %s28, 0
      %p201 = por %p199, %p200
      %p202 = scmp.ne.s32.totalorder %s190, %s191
      %p203 = scmp.eq.s32.totalorder %s29, 1
      %p204 = por %p202, %p203
      %p206 = scmp.ne.s32.totalorder %s191, %s205
      %p207 = scmp.eq.s32.totalorder %s29, 0
      %p208 = por %p206, %p207
      %s210 = sadd.s32 %s209, 1
      %p213 = scmp.eq.s32.totalorder %s23, 1
      %p214 = scmp.ne.s32.totalorder %s209, %s211
      %p215 = scmp.eq.s32.totalorder %s23, 0
      %p216 = por %p214, %p215
      %p217 = scmp.ne.s32.totalorder %s209, %s211
      %p218 = scmp.eq.s32.totalorder %s28, 1
      %p219 = por %p217, %p218
      %p220 = scmp.ne.s32.totalorder %s211, %s212
      %p221 = scmp.eq.s32.totalorder %s28, 0
      %p222 = por %p220, %p221
      %p223 = scmp.ne.s32.totalorder %s211, %s212
      %p224 = scmp.eq.s32.totalorder %s29, 1
      %p225 = por %p223, %p224
      %p227 = scmp.ne.s32.totalorder %s212, %s226
      %p228 = scmp.eq.s32.totalorder %s29, 0
      %p229 = por %p227, %p228
      %s231 = sadd.s32 %s230, 1
      %p234 = scmp.eq.s32.totalorder %s23, 1
      %p235 = scmp.ne.s32.totalorder %s230, %s232
      %p236 = scmp.eq.s32.totalorder %s23, 0
      %p237 = por %p235, %p236
      %p238 = scmp.ne.s32.totalorder %s230, %s232
      %p239 = scmp.eq.s32.totalorder %s28, 1
      %p240 = por %p238, %p239
      %p241 = scmp.ne.s32.totalorder %s232, %s233
      %p242 = scmp.eq.s32.totalorder %s28, 0
      %p243 = por %p241, %p242
      %p244 = scmp.ne.s32.totalorder %s232, %s233
      %p245 = scmp.eq.s32.totalorder %s29, 1
      %p246 = por %p244, %p245
      %p248 = scmp.ne.s32.totalorder %s233, %s247
      %p249 = scmp.eq.s32.totalorder %s29, 0
      %p250 = por %p248, %p249
      %s252 = sadd.s32 %s251, 1
      %p255 = scmp.eq.s32.totalorder %s23, 1
      %p256 = scmp.ne.s32.totalorder %s251, %s253
      %p257 = scmp.eq.s32.totalorder %s23, 0
      %p258 = por %p256, %p257
      %p259 = scmp.ne.s32.totalorder %s251, %s253
      %p260 = scmp.eq.s32.totalorder %s28, 1
      %p261 = por %p259, %p260
      %p262 = scmp.ne.s32.totalorder %s253, %s254
      %p263 = scmp.eq.s32.totalorder %s28, 0
      %p264 = por %p262, %p263
      %p265 = scmp.ne.s32.totalorder %s253, %s254
      %p266 = scmp.eq.s32.totalorder %s29, 1
      %p267 = por %p265, %p266
      %p269 = scmp.ne.s32.totalorder %s254, %s268
      %p270 = scmp.eq.s32.totalorder %s29, 0
      %p271 = por %p269, %p270
      %s273 = sadd.s32 %s272, 1
      %p276 = scmp.eq.s32.totalorder %s23, 1
      %p277 = scmp.ne.s32.totalorder %s272, %s274
      %p278 = scmp.eq.s32.totalorder %s23, 0
      %p279 = por %p277, %p278
      %p280 = scmp.ne.s32.totalorder %s272, %s274
      %p281 = scmp.eq.s32.totalorder %s28, 1
      %p282 = por %p280, %p281
      %p283 = scmp.ne.s32.totalorder %s274, %s275
      %p284 = scmp.eq.s32.totalorder %s28, 0
      %p285 = por %p283, %p284
      %p286 = scmp.ne.s32.totalorder %s274, %s275
      %p287 = scmp.eq.s32.totalorder %s29, 1
      %p288 = por %p286, %p287
      %p290 = scmp.ne.s32.totalorder %s275, %s289
      %p291 = scmp.eq.s32.totalorder %s29, 0
      %p292 = por %p290, %p291
      %s294 = sadd.s32 %s293, 1
      %p297 = scmp.eq.s32.totalorder %s23, 1
      %p298 = scmp.ne.s32.totalorder %s293, %s295
      %p299 = scmp.eq.s32.totalorder %s23, 0
      %p300 = por %p298, %p299
      %p301 = scmp.ne.s32.totalorder %s293, %s295
      %p302 = scmp.eq.s32.totalorder %s28, 1
      %p303 = por %p301, %p302
      %p304 = scmp.ne.s32.totalorder %s295, %s296
      %p305 = scmp.eq.s32.totalorder %s28, 0
      %p306 = por %p304, %p305
      %p307 = scmp.ne.s32.totalorder %s295, %s296
      %p308 = scmp.eq.s32.totalorder %s29, 1
      %p309 = por %p307, %p308
      %p311 = scmp.ne.s32.totalorder %s296, %s310
      %p312 = scmp.eq.s32.totalorder %s29, 0
      %p313 = por %p311, %p312
      %s315 = sadd.s32 %s314, 1
      %p318 = scmp.eq.s32.totalorder %s23, 1
      %p319 = scmp.ne.s32.totalorder %s314, %s316
      %p320 = scmp.eq.s32.totalorder %s23, 0
      %p321 = por %p319, %p320
      %p322 = scmp.ne.s32.totalorder %s314, %s316
      %p323 = scmp.eq.s32.totalorder %s28, 1
      %p324 = por %p322, %p323
      %p325 = scmp.ne.s32.totalorder %s316, %s317
      %p326 = scmp.eq.s32.totalorder %s28, 0
      %p327 = por %p325, %p326
      %p328 = scmp.ne.s32.totalorder %s316, %s317
      %p329 = scmp.eq.s32.totalorder %s29, 1
      %p330 = por %p328, %p329
      %p332 = scmp.ne.s32.totalorder %s317, %s331
      %p333 = scmp.eq.s32.totalorder %s29, 0
      %p334 = por %p332, %p333
      %s335 = ssub.s32 %s23, %s30
      %p336 = scmp.eq.s32.totalorder %s335, 0
      %s338 = sadd.s32 %s337, 1
      %s339 = scalar_select %p336, %s337, %s338
      %p342 = pneg %p336
      %p343 = scmp.eq.s32.totalorder %s23, 1
      %p344 = por %p342, %p343
      %p345 = scmp.ne.s32.totalorder %s337, %s340
      %p346 = scmp.eq.s32.totalorder %s23, 0
      %p347 = por %p345, %p346
      %p348 = scmp.ne.s32.totalorder %s337, %s340
      %p349 = scmp.eq.s32.totalorder %s28, 1
      %p350 = por %p348, %p349
      %p351 = scmp.ne.s32.totalorder %s340, %s341
      %p352 = scmp.eq.s32.totalorder %s28, 0
      %p353 = por %p351, %p352
      %p354 = scmp.ne.s32.totalorder %s340, %s341
      %p355 = scmp.eq.s32.totalorder %s29, 1
      %p356 = por %p354, %p355
      %p358 = scmp.ne.s32.totalorder %s341, %s357
      %p359 = scmp.eq.s32.totalorder %s29, 0
      %p360 = por %p358, %p359
      %p361 = scmp.le.s32.totalorder 1, %s23
      %p362 = scmp.lt.s32.totalorder %s23, 3
      %p363 = pnand %p361, %p362
      %p364 = pneg %p363
      // Predicated region
      $region9: #{tpu_custom_call.1} parent=5 // pred_check
        _
      $region10: #{tpu_custom_call.1} parent=5 // pred_check_branch
        %366 = sbr.rel (%p363) target = $region12
      $region11: #{tpu_custom_call.1} parent=5 // pred_region
        %s367 = ssub.s32 %s23, 1
        // Predicated region
        $region13: #{tpu_custom_call.1} parent=11 // pred_check
          %p368 = pneg %p96
        $region14: #{tpu_custom_call.1} parent=11 // pred_check_branch
          %370 = sbr.rel (%p368) target = $region16
        $region15: #{tpu_custom_call.1} parent=11 // pred_region
          _
        $region16: #{tpu_custom_call.1} parent=11 // pred_fallthru
          _
        // Predicated region
        $region17: #{tpu_custom_call.1} parent=11 // pred_check
          %p371 = pneg %p117
        $region18: #{tpu_custom_call.1} parent=11 // pred_check_branch
          %373 = sbr.rel (%p371) target = $region20
        $region19: #{tpu_custom_call.1} parent=11 // pred_region
          _
        $region20: #{tpu_custom_call.1} parent=11 // pred_fallthru
          _
        // Predicated region
        $region21: #{tpu_custom_call.1} parent=11 // pred_check
          %p374 = pneg %p138
        $region22: #{tpu_custom_call.1} parent=11 // pred_check_branch
          %376 = sbr.rel (%p374) target = $region24
        $region23: #{tpu_custom_call.1} parent=11 // pred_region
          _
        $region24: #{tpu_custom_call.1} parent=11 // pred_fallthru
          _
        // Predicated region
        $region25: #{tpu_custom_call.1} parent=11 // pred_check
          %p377 = pneg %p159
        $region26: #{tpu_custom_call.1} parent=11 // pred_check_branch
          %379 = sbr.rel (%p377) target = $region28
        $region27: #{tpu_custom_call.1} parent=11 // pred_region
          _
        $region28: #{tpu_custom_call.1} parent=11 // pred_fallthru
          _
        // Predicated region
        $region29: #{tpu_custom_call.1} parent=11 // pred_check
          %p380 = pneg %p180
        $region30: #{tpu_custom_call.1} parent=11 // pred_check_branch
          %382 = sbr.rel (%p380) target = $region32
        $region31: #{tpu_custom_call.1} parent=11 // pred_region
          _
        $region32: #{tpu_custom_call.1} parent=11 // pred_fallthru
          _
        // Predicated region
        $region33: #{tpu_custom_call.1} parent=11 // pred_check
          %p383 = pneg %p201
        $region34: #{tpu_custom_call.1} parent=11 // pred_check_branch
          %385 = sbr.rel (%p383) target = $region36
        $region35: #{tpu_custom_call.1} parent=11 // pred_region
          _
        $region36: #{tpu_custom_call.1} parent=11 // pred_fallthru
          _
        // Predicated region
        $region37: #{tpu_custom_call.1} parent=11 // pred_check
          %p386 = pneg %p222
        $region38: #{tpu_custom_call.1} parent=11 // pred_check_branch
          %388 = sbr.rel (%p386) target = $region40
        $region39: #{tpu_custom_call.1} parent=11 // pred_region
          _
        $region40: #{tpu_custom_call.1} parent=11 // pred_fallthru
          _
        // Predicated region
        $region41: #{tpu_custom_call.1} parent=11 // pred_check
          %p389 = pneg %p243
        $region42: #{tpu_custom_call.1} parent=11 // pred_check_branch
          %391 = sbr.rel (%p389) target = $region44
        $region43: #{tpu_custom_call.1} parent=11 // pred_region
          _
        $region44: #{tpu_custom_call.1} parent=11 // pred_fallthru
          _
        // Predicated region
        $region45: #{tpu_custom_call.1} parent=11 // pred_check
          %p392 = pneg %p264
        $region46: #{tpu_custom_call.1} parent=11 // pred_check_branch
          %394 = sbr.rel (%p392) target = $region48
        $region47: #{tpu_custom_call.1} parent=11 // pred_region
          _
        $region48: #{tpu_custom_call.1} parent=11 // pred_fallthru
          _
        // Predicated region
        $region49: #{tpu_custom_call.1} parent=11 // pred_check
          %p395 = pneg %p285
        $region50: #{tpu_custom_call.1} parent=11 // pred_check_branch
          %397 = sbr.rel (%p395) target = $region52
        $region51: #{tpu_custom_call.1} parent=11 // pred_region
          _
        $region52: #{tpu_custom_call.1} parent=11 // pred_fallthru
          _
        // Predicated region
        $region53: #{tpu_custom_call.1} parent=11 // pred_check
          %p398 = pneg %p306
        $region54: #{tpu_custom_call.1} parent=11 // pred_check_branch
          %400 = sbr.rel (%p398) target = $region56
        $region55: #{tpu_custom_call.1} parent=11 // pred_region
          _
        $region56: #{tpu_custom_call.1} parent=11 // pred_fallthru
          _
        // Predicated region
        $region57: #{tpu_custom_call.1} parent=11 // pred_check
          %p401 = pneg %p327
        $region58: #{tpu_custom_call.1} parent=11 // pred_check_branch
          %403 = sbr.rel (%p401) target = $region60
        $region59: #{tpu_custom_call.1} parent=11 // pred_region
          _
        $region60: #{tpu_custom_call.1} parent=11 // pred_fallthru
          _
      $region12: #{tpu_custom_call.1} parent=5 // pred_fallthru
        _
      %p404 = scmp.lt.s32.totalorder %s23, 2
      // Predicated region
      $region61: #{tpu_custom_call.1} parent=5 // pred_check
        %p405 = pneg %p404
      $region62: #{tpu_custom_call.1} parent=5 // pred_check_branch
        %407 = sbr.rel (%p405) target = $region64
      $region63: #{tpu_custom_call.1} parent=5 // pred_region
        // Predicated region
        $region65: #{tpu_custom_call.1} parent=63 // pred_check
          %p408 = pneg %p43
        $region66: #{tpu_custom_call.1} parent=63 // pred_check_branch
          %410 = sbr.rel (%p408) target = $region68
        $region67: #{tpu_custom_call.1} parent=63 // pred_region
          %p411 = scmp.lt.s32.totalorder %s23, 1
          %s412 = scalar_select %p411, %s23, 1
          %s413 = smul.addr %s412, 8
          %s414 = scalar_lea.vmem %s0, %s413
        $region68: #{tpu_custom_call.1} parent=63 // pred_fallthru
          _
        // Predicated region
        $region69: #{tpu_custom_call.1} parent=63 // pred_check
          %p415 = pneg %p69
        $region70: #{tpu_custom_call.1} parent=63 // pred_check_branch
          %417 = sbr.rel (%p415) target = $region72
        $region71: #{tpu_custom_call.1} parent=63 // pred_region
          %p418 = scmp.lt.s32.totalorder %s23, 1
          %s419 = scalar_select %p418, %s23, 1
          %s420 = scalar_lea.vmem %s1, %s419
        $region72: #{tpu_custom_call.1} parent=63 // pred_fallthru
          _
      $region64: #{tpu_custom_call.1} parent=5 // pred_fallthru
        _
      %p421 = scmp.le.s32.totalorder 1, %s23
      %p422 = scmp.lt.s32.totalorder %s23, 3
      %p423 = pnand %p421, %p422
      %p424 = pneg %p423
      // Predicated region
      $region73: #{tpu_custom_call.1} parent=5 // pred_check
        _
      $region74: #{tpu_custom_call.1} parent=5 // pred_check_branch
        %426 = sbr.rel (%p423) target = $region76
      $region75: #{tpu_custom_call.1} parent=5 // pred_region
        %s427 = ssub.s32 %s23, 1
        %p428 = scmp.lt.s32.totalorder %s28, 1
        %s429 = scalar_select %p428, %s28, 1
        %s430 = smul.addr %s429, 8
        %s431 = scalar_lea.vmem %s0, %s430
        %p432 = pneg %p49
        %p433 = pneg %p46
        %p434 = scmp.lt.s32.totalorder %s28, 1
        %s435 = scalar_select %p434, %s28, 1
        %s436 = scalar_lea.vmem %s1, %s435
        %p437 = pneg %p75
        %p438 = pneg %p72
        %p439 = pneg %p96
        %p440 = pneg %p93
        %p441 = pneg %p117
        %p442 = pneg %p114
        %p443 = pneg %p138
        %p444 = pneg %p135
        %p445 = pneg %p159
        %p446 = pneg %p156
        %p447 = pneg %p180
        %p448 = pneg %p177
        %p449 = pneg %p201
        %p450 = pneg %p198
        %p451 = pneg %p222
        %p452 = pneg %p219
        %p453 = pneg %p243
        %p454 = pneg %p240
        %p455 = pneg %p264
        %p456 = pneg %p261
        %p457 = pneg %p285
        %p458 = pneg %p282
        %p459 = pneg %p306
        %p460 = pneg %p303
        %p461 = pneg %p327
        %p462 = pneg %p324
        %p463 = pneg %p353
        %p464 = pneg %p350
        %s465 = sand.u32 %s340, 1
        %s466 = scalar_lea.sflag [#allocation3], %s465
        %s467 = sand.u32 %s340, 1
        %s468 = smul.addr %s467, 8
        %s469 = scalar_lea.vmem [#allocation2], %s468
        %p470 = scmp.lt.s32.totalorder %s28, 1
        %s471 = scalar_select %p470, %s28, 1
        %s472 = smul.addr %s471, 8
        %s473 = scalar_lea.vmem %s0, %s472
        %p474 = scmp.lt.s32.totalorder %s28, 1
        %s475 = scalar_select %p474, %s28, 1
        %s476 = scalar_lea.vmem %s1, %s475
        %v478 = vld [vmem:[%s473] sm:$0xff]
        %v479 = vld [vmem:[%s476] sm:$0x1]
        %v481 = vlaneseq
        %v482 = vshrl.u32 %v481, 7
        %v483 = vsub.s32 0, %v482
        %v484 = vrot.slane %v479, %v483
        %v486 = vpack.c.bf16 %v478, %v478
        %v487 = vld [vmem:[%s2] sm:$0xf]
        %v488 = vld [vmem:[%s2 + $0x4] sm:$0xf]
        %v489 = vld [vmem:[%s2 + $0x8] sm:$0xf]
        %v490 = vld [vmem:[%s2 + $0xc] sm:$0xf]
        %v491 = vld [vmem:[%s3] sm:$0x1]
        %v493 = vlaneseq
        %v494 = vshrl.u32 %v493, 7
        %v495 = vsub.s32 0, %v494
        %v496 = vrot.slane %v491, %v495
        %v502 = vunpack.c.l.b16 %v487
        %v503 = vunpack.c.l.b16 %v488
        %v504 = vunpack.c.l.b16 %v489
        %v505 = vunpack.c.l.b16 %v490
        %v506 = vpack.c.b16 %v503, %v502
        %v507 = vpack.c.b16 %v505, %v504
        %vm510 = vcmask 261120
        %v512 = vsel %vm510, %v486, 0
        %514 = vmatprep.subr.bf16.mxu0 0
        %515 = vmatpush1.bf16.msra.mxu0 %v506
        %516 = vmatprep.subr.bf16.mxu0 0
        %517 = vmatpush1.bf16.msra.mxu0 %v507
        %518 = vmatprep.subr.bf16.mxu0 0
        %519 = vmatpush1.bf16.msra.mxu0 0
        %520 = vmatprep.subr.bf16.mxu0 0
        %521 = vmatpush1.bf16.msra.mxu0 0
        %522 = vmatprep.subr.bf16.mxu0 0
        %523 = vmatpush1.bf16.msra.mxu0 0
        %524 = vmatprep.subr.bf16.mxu0 0
        %525 = vmatpush1.bf16.msra.mxu0 0
        %526 = vmatprep.subr.bf16.mxu0 0
        %527 = vmatpush1.bf16.msra.mxu0 0
        %528 = vmatprep.subr.bf16.mxu0 0
        %529 = vmatpush1.bf16.msra.mxu0 0
        %530 = vmatprep.subr.bf16.mxu0 0
        %531 = vmatpush1.bf16.msra.mxu0 0
        %532 = vmatprep.subr.bf16.mxu0 0
        %533 = vmatpush1.bf16.msra.mxu0 0
        %534 = vmatprep.subr.bf16.mxu0 0
        %535 = vmatpush1.bf16.msra.mxu0 0
        %536 = vmatprep.subr.bf16.mxu0 0
        %537 = vmatpush1.bf16.msra.mxu0 0
        %538 = vmatprep.subr.bf16.mxu0 0
        %539 = vmatpush1.bf16.msra.mxu0 0
        %540 = vmatprep.subr.bf16.mxu0 0
        %541 = vmatpush1.bf16.msra.mxu0 0
        %542 = vmatprep.subr.bf16.mxu0 0
        %543 = vmatpush1.bf16.msra.mxu0 0
        %544 = vmatprep.subr.bf16.mxu0 0
        %545 = vmatpush1.bf16.msra.mxu0 0
        %546 = vmatprep.mubr.bf16.mxu0 0
        %547 = vmatmul.mubr.bf16.gmra.mrb[0].mxu0 %v512
        %v548 = vpop.f32.mrb[0].mxu0
        %v549 = vadd.f32 %v496, %v548
        %v550 = vpop.f32.mrb[0].mxu0
        %v551 = vpop.f32.mrb[0].mxu0
        %v552 = vpop.f32.mrb[0].mxu0
        %553 = vdwg.mxu0
        %555 = vrot.lane.b32.xlu0 %v549, 120
        %v556 = vpop.permute.xlu0 %555
        %558 = vrot.lane.b32.xlu0 %v549, 112
        %v559 = vpop.permute.xlu0 %558
        %561 = vrot.lane.b32.xlu0 %v549, 104
        %v562 = vpop.permute.xlu0 %561
        %v564 = vpack.c.bf16 %v549, %v549
        %v565 = vpack.c.bf16 %v556, %v556
        %v566 = vpack.c.bf16 %v559, %v559
        %v567 = vpack.c.bf16 %v562, %v562
        %569 = vrot.lane.b32.xlu0 %v478, 120
        %v570 = vpop.permute.xlu0 %569
        %572 = vrot.lane.b32.xlu0 %v478, 112
        %v573 = vpop.permute.xlu0 %572
        %575 = vrot.lane.b32.xlu0 %v478, 104
        %v576 = vpop.permute.xlu0 %575
        %v578 = vpack.c.bf16 %v570, %v570
        %v579 = vpack.c.bf16 %v573, %v573
        %v580 = vpack.c.bf16 %v576, %v576
        %vm581 = vcmask 64512
        %v583 = vsel %vm581, %v564, 0
        %v585 = vsel %vm581, %v486, 0
        %587 = vmatprep.subr.bf16.mxu0 0
        %588 = vmatpush1.bf16.xpose.msra.mxu0 %v585
        %589 = vmatprep.subr.bf16.mxu0 0
        %590 = vmatpush1.bf16.xpose.msra.mxu0 0
        %591 = vmatprep.subr.bf16.mxu0 0
        %592 = vmatpush1.bf16.xpose.msra.mxu0 0
        %593 = vmatprep.subr.bf16.mxu0 0
        %594 = vmatpush1.bf16.xpose.msra.mxu0 0
        %595 = vmatprep.subr.bf16.mxu0 0
        %596 = vmatpush1.bf16.xpose.msra.mxu0 0
        %597 = vmatprep.subr.bf16.mxu0 0
        %598 = vmatpush1.bf16.xpose.msra.mxu0 0
        %599 = vmatprep.subr.bf16.mxu0 0
        %600 = vmatpush1.bf16.xpose.msra.mxu0 0
        %601 = vmatprep.subr.bf16.mxu0 0
        %602 = vmatpush1.bf16.xpose.msra.mxu0 0
        %603 = vmatprep.subr.bf16.mxu0 0
        %604 = vmatpush1.bf16.xpose.msra.mxu0 0
        %605 = vmatprep.subr.bf16.mxu0 0
        %606 = vmatpush1.bf16.xpose.msra.mxu0 0
        %607 = vmatprep.subr.bf16.mxu0 0
        %608 = vmatpush1.bf16.xpose.msra.mxu0 0
        %609 = vmatprep.subr.bf16.mxu0 0
        %610 = vmatpush1.bf16.xpose.msra.mxu0 0
        %611 = vmatprep.subr.bf16.mxu0 0
        %612 = vmatpush1.bf16.xpose.msra.mxu0 0
        %613 = vmatprep.subr.bf16.mxu0 0
        %614 = vmatpush1.bf16.xpose.msra.mxu0 0
        %615 = vmatprep.subr.bf16.mxu0 0
        %616 = vmatpush1.bf16.xpose.msra.mxu0 0
        %617 = vmatprep.subr.bf16.mxu0 0
        %618 = vmatpush1.bf16.xpose.msra.mxu0 0
        %619 = vmatprep.mubr.bf16.mxu0 0
        %620 = vmatmul.mubr.bf16.gmra.mrb[0].mxu0 %v583
        %v621 = vpop.f32.mrb[0].mxu0
        %v622 = vadd.f32 %v484, %v621
        %v623 = vpop.f32.mrb[0].mxu0
        %v624 = vpop.f32.mrb[0].mxu0
        %v625 = vpop.f32.mrb[0].mxu0
        %626 = vdwg.mxu0
        %v628 = vsel %vm581, %v565, 0
        %v631 = vsel %vm581, %v578, 0
        %633 = vmatprep.subr.bf16.mxu0 0
        %634 = vmatpush1.bf16.xpose.msra.mxu0 %v631
        %635 = vmatprep.subr.bf16.mxu0 0
        %636 = vmatpush1.bf16.xpose.msra.mxu0 0
        %637 = vmatprep.subr.bf16.mxu0 0
        %638 = vmatpush1.bf16.xpose.msra.mxu0 0
        %639 = vmatprep.subr.bf16.mxu0 0
        %640 = vmatpush1.bf16.xpose.msra.mxu0 0
        %641 = vmatprep.subr.bf16.mxu0 0
        %642 = vmatpush1.bf16.xpose.msra.mxu0 0
        %643 = vmatprep.subr.bf16.mxu0 0
        %644 = vmatpush1.bf16.xpose.msra.mxu0 0
        %645 = vmatprep.subr.bf16.mxu0 0
        %646 = vmatpush1.bf16.xpose.msra.mxu0 0
        %647 = vmatprep.subr.bf16.mxu0 0
        %648 = vmatpush1.bf16.xpose.msra.mxu0 0
        %649 = vmatprep.subr.bf16.mxu0 0
        %650 = vmatpush1.bf16.xpose.msra.mxu0 0
        %651 = vmatprep.subr.bf16.mxu0 0
        %652 = vmatpush1.bf16.xpose.msra.mxu0 0
        %653 = vmatprep.subr.bf16.mxu0 0
        %654 = vmatpush1.bf16.xpose.msra.mxu0 0
        %655 = vmatprep.subr.bf16.mxu0 0
        %656 = vmatpush1.bf16.xpose.msra.mxu0 0
        %657 = vmatprep.subr.bf16.mxu0 0
        %658 = vmatpush1.bf16.xpose.msra.mxu0 0
        %659 = vmatprep.subr.bf16.mxu0 0
        %660 = vmatpush1.bf16.xpose.msra.mxu0 0
        %661 = vmatprep.subr.bf16.mxu0 0
        %662 = vmatpush1.bf16.xpose.msra.mxu0 0
        %663 = vmatprep.subr.bf16.mxu0 0
        %664 = vmatpush1.bf16.xpose.msra.mxu0 0
        %665 = vmatprep.mubr.bf16.mxu0 0
        %666 = vmatmul.mubr.bf16.gmra.mrb[0].mxu0 %v628
        %v667 = vpop.f32.mrb[0].mxu0
        %v668 = vadd.f32 %v484, %v667
        %v669 = vpop.f32.mrb[0].mxu0
        %v670 = vpop.f32.mrb[0].mxu0
        %v671 = vpop.f32.mrb[0].mxu0
        %672 = vdwg.mxu0
        %v674 = vsel %vm581, %v566, 0
        %v677 = vsel %vm581, %v579, 0
        %679 = vmatprep.subr.bf16.mxu0 0
        %680 = vmatpush1.bf16.xpose.msra.mxu0 %v677
        %681 = vmatprep.subr.bf16.mxu0 0
        %682 = vmatpush1.bf16.xpose.msra.mxu0 0
        %683 = vmatprep.subr.bf16.mxu0 0
        %684 = vmatpush1.bf16.xpose.msra.mxu0 0
        %685 = vmatprep.subr.bf16.mxu0 0
        %686 = vmatpush1.bf16.xpose.msra.mxu0 0
        %687 = vmatprep.subr.bf16.mxu0 0
        %688 = vmatpush1.bf16.xpose.msra.mxu0 0
        %689 = vmatprep.subr.bf16.mxu0 0
        %690 = vmatpush1.bf16.xpose.msra.mxu0 0
        %691 = vmatprep.subr.bf16.mxu0 0
        %692 = vmatpush1.bf16.xpose.msra.mxu0 0
        %693 = vmatprep.subr.bf16.mxu0 0
        %694 = vmatpush1.bf16.xpose.msra.mxu0 0
        %695 = vmatprep.subr.bf16.mxu0 0
        %696 = vmatpush1.bf16.xpose.msra.mxu0 0
        %697 = vmatprep.subr.bf16.mxu0 0
        %698 = vmatpush1.bf16.xpose.msra.mxu0 0
        %699 = vmatprep.subr.bf16.mxu0 0
        %700 = vmatpush1.bf16.xpose.msra.mxu0 0
        %701 = vmatprep.subr.bf16.mxu0 0
        %702 = vmatpush1.bf16.xpose.msra.mxu0 0
        %703 = vmatprep.subr.bf16.mxu0 0
        %704 = vmatpush1.bf16.xpose.msra.mxu0 0
        %705 = vmatprep.subr.bf16.mxu0 0
        %706 = vmatpush1.bf16.xpose.msra.mxu0 0
        %707 = vmatprep.subr.bf16.mxu0 0
        %708 = vmatpush1.bf16.xpose.msra.mxu0 0
        %709 = vmatprep.subr.bf16.mxu0 0
        %710 = vmatpush1.bf16.xpose.msra.mxu0 0
        %711 = vmatprep.mubr.bf16.mxu0 0
        %712 = vmatmul.mubr.bf16.gmra.mrb[0].mxu0 %v674
        %v713 = vpop.f32.mrb[0].mxu0
        %v714 = vadd.f32 %v484, %v713
        %v715 = vpop.f32.mrb[0].mxu0
        %v716 = vpop.f32.mrb[0].mxu0
        %v717 = vpop.f32.mrb[0].mxu0
        %718 = vdwg.mxu0
        %v720 = vsel %vm581, %v567, 0
        %v723 = vsel %vm581, %v580, 0
        %725 = vmatprep.subr.bf16.mxu0 0
        %726 = vmatpush1.bf16.xpose.msra.mxu0 %v723
        %727 = vmatprep.subr.bf16.mxu0 0
        %728 = vmatpush1.bf16.xpose.msra.mxu0 0
        %729 = vmatprep.subr.bf16.mxu0 0
        %730 = vmatpush1.bf16.xpose.msra.mxu0 0
        %731 = vmatprep.subr.bf16.mxu0 0
        %732 = vmatpush1.bf16.xpose.msra.mxu0 0
        %733 = vmatprep.subr.bf16.mxu0 0
        %734 = vmatpush1.bf16.xpose.msra.mxu0 0
        %735 = vmatprep.subr.bf16.mxu0 0
        %736 = vmatpush1.bf16.xpose.msra.mxu0 0
        %737 = vmatprep.subr.bf16.mxu0 0
        %738 = vmatpush1.bf16.xpose.msra.mxu0 0
        %739 = vmatprep.subr.bf16.mxu0 0
        %740 = vmatpush1.bf16.xpose.msra.mxu0 0
        %741 = vmatprep.subr.bf16.mxu0 0
        %742 = vmatpush1.bf16.xpose.msra.mxu0 0
        %743 = vmatprep.subr.bf16.mxu0 0
        %744 = vmatpush1.bf16.xpose.msra.mxu0 0
        %745 = vmatprep.subr.bf16.mxu0 0
        %746 = vmatpush1.bf16.xpose.msra.mxu0 0
        %747 = vmatprep.subr.bf16.mxu0 0
        %748 = vmatpush1.bf16.xpose.msra.mxu0 0
        %749 = vmatprep.subr.bf16.mxu0 0
        %750 = vmatpush1.bf16.xpose.msra.mxu0 0
        %751 = vmatprep.subr.bf16.mxu0 0
        %752 = vmatpush1.bf16.xpose.msra.mxu0 0
        %753 = vmatprep.subr.bf16.mxu0 0
        %754 = vmatpush1.bf16.xpose.msra.mxu0 0
        %755 = vmatprep.subr.bf16.mxu0 0
        %756 = vmatpush1.bf16.xpose.msra.mxu0 0
        %757 = vmatprep.mubr.bf16.mxu0 0
        %758 = vmatmul.mubr.bf16.gmra.mrb[0].mxu0 %v720
        %v759 = vpop.f32.mrb[0].mxu0
        %v760 = vadd.f32 %v484, %v759
        %v761 = vpop.f32.mrb[0].mxu0
        %v762 = vpop.f32.mrb[0].mxu0
        %v763 = vpop.f32.mrb[0].mxu0
        %764 = vdwg.mxu0
        %v765 = vsel %vm581, %v622, -inf
        %766 = vmax.xlane.f32.xlu0 %v765
        %v767 = vpop.xlane.xlu0 %766
        %v768 = vsel %vm581, %v668, -inf
        %769 = vmax.xlane.f32.xlu0 %v768
        %v770 = vpop.xlane.xlu0 %769
        %v771 = vsel %vm581, %v714, -inf
        %772 = vmax.xlane.f32.xlu0 %v771
        %v773 = vpop.xlane.xlu0 %772
        %v774 = vsel %vm581, %v760, -inf
        %775 = vmax.xlane.f32.xlu0 %v774
        %v776 = vpop.xlane.xlu0 %775
        %v777 = vsub.f32 %v622, %v767
        %v778 = vsub.f32 %v668, %v770
        %v779 = vsub.f32 %v714, %v773
        %v780 = vsub.f32 %v760, %v776
        %v781 = vmul.f32 %v777, 1.442695
        %v782 = vpow.pop %v781
        %v783 = vmul.f32 %v778, 1.442695
        %v784 = vpow.pop %v783
        %v785 = vmul.f32 %v779, 1.442695
        %v786 = vpow.pop %v785
        %v787 = vmul.f32 %v780, 1.442695
        %v788 = vpow.pop %v787
        %v789 = vsel %vm581, %v782, 0.0
        %790 = vadd.xlane.f32.xlu0 %v789
        %v791 = vpop.xlane.xlu0 %790
        %v792 = vsel %vm581, %v784, 0.0
        %793 = vadd.xlane.f32.xlu0 %v792
        %v794 = vpop.xlane.xlu0 %793
        %v795 = vsel %vm581, %v786, 0.0
        %796 = vadd.xlane.f32.xlu0 %v795
        %v797 = vpop.xlane.xlu0 %796
        %v798 = vsel %vm581, %v788, 0.0
        %799 = vadd.xlane.f32.xlu0 %v798
        %v800 = vpop.xlane.xlu0 %799
        %v801 = vrcp.pop %v791
        %v802 = vmul.f32 %v782, %v801
        %v803 = vrcp.pop %v794
        %v804 = vmul.f32 %v784, %v803
        %v805 = vrcp.pop %v797
        %v806 = vmul.f32 %v786, %v805
        %v807 = vrcp.pop %v800
        %v808 = vmul.f32 %v788, %v807
        %v809 = vpack.c.bf16 %v802, %v802
        %v810 = vpack.c.bf16 %v804, %v804
        %v811 = vpack.c.bf16 %v806, %v806
        %v812 = vpack.c.bf16 %v808, %v808
        %814 = vrot.lane.b32.xlu0 %v564, 96
        %v815 = vpop.permute.xlu0 %814
        %v817 = vsel %vm581, %v809, 0
        %vm819 = vcmask 1043456
        %v821 = vsel %vm819, %v815, 0
        %823 = vmatprep.subr.bf16.mxu0 0
        %824 = vmatpush1.bf16.msra.mxu0 %v821
        %825 = vmatprep.subr.bf16.mxu0 0
        %826 = vmatpush1.bf16.msra.mxu0 0
        %827 = vmatprep.subr.bf16.mxu0 0
        %828 = vmatpush1.bf16.msra.mxu0 0
        %829 = vmatprep.subr.bf16.mxu0 0
        %830 = vmatpush1.bf16.msra.mxu0 0
        %831 = vmatprep.subr.bf16.mxu0 0
        %832 = vmatpush1.bf16.msra.mxu0 0
        %833 = vmatprep.subr.bf16.mxu0 0
        %834 = vmatpush1.bf16.msra.mxu0 0
        %835 = vmatprep.subr.bf16.mxu0 0
        %836 = vmatpush1.bf16.msra.mxu0 0
        %837 = vmatprep.subr.bf16.mxu0 0
        %838 = vmatpush1.bf16.msra.mxu0 0
        %839 = vmatprep.subr.bf16.mxu0 0
        %840 = vmatpush1.bf16.msra.mxu0 0
        %841 = vmatprep.subr.bf16.mxu0 0
        %842 = vmatpush1.bf16.msra.mxu0 0
        %843 = vmatprep.subr.bf16.mxu0 0
        %844 = vmatpush1.bf16.msra.mxu0 0
        %845 = vmatprep.subr.bf16.mxu0 0
        %846 = vmatpush1.bf16.msra.mxu0 0
        %847 = vmatprep.subr.bf16.mxu0 0
        %848 = vmatpush1.bf16.msra.mxu0 0
        %849 = vmatprep.subr.bf16.mxu0 0
        %850 = vmatpush1.bf16.msra.mxu0 0
        %851 = vmatprep.subr.bf16.mxu0 0
        %852 = vmatpush1.bf16.msra.mxu0 0
        %853 = vmatprep.subr.bf16.mxu0 0
        %854 = vmatpush1.bf16.msra.mxu0 0
        %855 = vmatprep.mubr.bf16.mxu0 0
        %856 = vmatmul.mubr.bf16.gmra.mrb[0].mxu0 %v817
        %v857 = vpop.f32.mrb[0].mxu0
        %v858 = vadd.f32 0.0, %v857
        %v859 = vpop.f32.mrb[0].mxu0
        %v860 = vpop.f32.mrb[0].mxu0
        %v861 = vpop.f32.mrb[0].mxu0
        %862 = vdwg.mxu0
        %864 = vrot.lane.b32.xlu0 %v565, 96
        %v865 = vpop.permute.xlu0 %864
        %v867 = vsel %vm581, %v810, 0
        %v870 = vsel %vm819, %v865, 0
        %872 = vmatprep.subr.bf16.mxu0 0
        %873 = vmatpush1.bf16.msra.mxu0 %v870
        %874 = vmatprep.subr.bf16.mxu0 0
        %875 = vmatpush1.bf16.msra.mxu0 0
        %876 = vmatprep.subr.bf16.mxu0 0
        %877 = vmatpush1.bf16.msra.mxu0 0
        %878 = vmatprep.subr.bf16.mxu0 0
        %879 = vmatpush1.bf16.msra.mxu0 0
        %880 = vmatprep.subr.bf16.mxu0 0
        %881 = vmatpush1.bf16.msra.mxu0 0
        %882 = vmatprep.subr.bf16.mxu0 0
        %883 = vmatpush1.bf16.msra.mxu0 0
        %884 = vmatprep.subr.bf16.mxu0 0
        %885 = vmatpush1.bf16.msra.mxu0 0
        %886 = vmatprep.subr.bf16.mxu0 0
        %887 = vmatpush1.bf16.msra.mxu0 0
        %888 = vmatprep.subr.bf16.mxu0 0
        %889 = vmatpush1.bf16.msra.mxu0 0
        %890 = vmatprep.subr.bf16.mxu0 0
        %891 = vmatpush1.bf16.msra.mxu0 0
        %892 = vmatprep.subr.bf16.mxu0 0
        %893 = vmatpush1.bf16.msra.mxu0 0
        %894 = vmatprep.subr.bf16.mxu0 0
        %895 = vmatpush1.bf16.msra.mxu0 0
        %896 = vmatprep.subr.bf16.mxu0 0
        %897 = vmatpush1.bf16.msra.mxu0 0
        %898 = vmatprep.subr.bf16.mxu0 0
        %899 = vmatpush1.bf16.msra.mxu0 0
        %900 = vmatprep.subr.bf16.mxu0 0
        %901 = vmatpush1.bf16.msra.mxu0 0
        %902 = vmatprep.subr.bf16.mxu0 0
        %903 = vmatpush1.bf16.msra.mxu0 0
        %904 = vmatprep.mubr.bf16.mxu0 0
        %905 = vmatmul.mubr.bf16.gmra.mrb[0].mxu0 %v867
        %v906 = vpop.f32.mrb[0].mxu0
        %v907 = vadd.f32 0.0, %v906
        %v908 = vpop.f32.mrb[0].mxu0
        %v909 = vpop.f32.mrb[0].mxu0
        %v910 = vpop.f32.mrb[0].mxu0
        %911 = vdwg.mxu0
        %913 = vrot.lane.b32.xlu0 %v566, 96
        %v914 = vpop.permute.xlu0 %913
        %v916 = vsel %vm581, %v811, 0
        %v919 = vsel %vm819, %v914, 0
        %921 = vmatprep.subr.bf16.mxu0 0
        %922 = vmatpush1.bf16.msra.mxu0 %v919
        %923 = vmatprep.subr.bf16.mxu0 0
        %924 = vmatpush1.bf16.msra.mxu0 0
        %925 = vmatprep.subr.bf16.mxu0 0
        %926 = vmatpush1.bf16.msra.mxu0 0
        %927 = vmatprep.subr.bf16.mxu0 0
        %928 = vmatpush1.bf16.msra.mxu0 0
        %929 = vmatprep.subr.bf16.mxu0 0
        %930 = vmatpush1.bf16.msra.mxu0 0
        %931 = vmatprep.subr.bf16.mxu0 0
        %932 = vmatpush1.bf16.msra.mxu0 0
        %933 = vmatprep.subr.bf16.mxu0 0
        %934 = vmatpush1.bf16.msra.mxu0 0
        %935 = vmatprep.subr.bf16.mxu0 0
        %936 = vmatpush1.bf16.msra.mxu0 0
        %937 = vmatprep.subr.bf16.mxu0 0
        %938 = vmatpush1.bf16.msra.mxu0 0
        %939 = vmatprep.subr.bf16.mxu0 0
        %940 = vmatpush1.bf16.msra.mxu0 0
        %941 = vmatprep.subr.bf16.mxu0 0
        %942 = vmatpush1.bf16.msra.mxu0 0
        %943 = vmatprep.subr.bf16.mxu0 0
        %944 = vmatpush1.bf16.msra.mxu0 0
        %945 = vmatprep.subr.bf16.mxu0 0
        %946 = vmatpush1.bf16.msra.mxu0 0
        %947 = vmatprep.subr.bf16.mxu0 0
        %948 = vmatpush1.bf16.msra.mxu0 0
        %949 = vmatprep.subr.bf16.mxu0 0
        %950 = vmatpush1.bf16.msra.mxu0 0
        %951 = vmatprep.subr.bf16.mxu0 0
        %952 = vmatpush1.bf16.msra.mxu0 0
        %953 = vmatprep.mubr.bf16.mxu0 0
        %954 = vmatmul.mubr.bf16.gmra.mrb[0].mxu0 %v916
        %v955 = vpop.f32.mrb[0].mxu0
        %v956 = vadd.f32 0.0, %v955
        %v957 = vpop.f32.mrb[0].mxu0
        %v958 = vpop.f32.mrb[0].mxu0
        %v959 = vpop.f32.mrb[0].mxu0
        %960 = vdwg.mxu0
        %962 = vrot.lane.b32.xlu0 %v567, 96
        %v963 = vpop.permute.xlu0 %962
        %v965 = vsel %vm581, %v812, 0
        %v968 = vsel %vm819, %v963, 0
        %970 = vmatprep.subr.bf16.mxu0 0
        %971 = vmatpush1.bf16.msra.mxu0 %v968
        %972 = vmatprep.subr.bf16.mxu0 0
        %973 = vmatpush1.bf16.msra.mxu0 0
        %974 = vmatprep.subr.bf16.mxu0 0
        %975 = vmatpush1.bf16.msra.mxu0 0
        %976 = vmatprep.subr.bf16.mxu0 0
        %977 = vmatpush1.bf16.msra.mxu0 0
        %978 = vmatprep.subr.bf16.mxu0 0
        %979 = vmatpush1.bf16.msra.mxu0 0
        %980 = vmatprep.subr.bf16.mxu0 0
        %981 = vmatpush1.bf16.msra.mxu0 0
        %982 = vmatprep.subr.bf16.mxu0 0
        %983 = vmatpush1.bf16.msra.mxu0 0
        %984 = vmatprep.subr.bf16.mxu0 0
        %985 = vmatpush1.bf16.msra.mxu0 0
        %986 = vmatprep.subr.bf16.mxu0 0
        %987 = vmatpush1.bf16.msra.mxu0 0
        %988 = vmatprep.subr.bf16.mxu0 0
        %989 = vmatpush1.bf16.msra.mxu0 0
        %990 = vmatprep.subr.bf16.mxu0 0
        %991 = vmatpush1.bf16.msra.mxu0 0
        %992 = vmatprep.subr.bf16.mxu0 0
        %993 = vmatpush1.bf16.msra.mxu0 0
        %994 = vmatprep.subr.bf16.mxu0 0
        %995 = vmatpush1.bf16.msra.mxu0 0
        %996 = vmatprep.subr.bf16.mxu0 0
        %997 = vmatpush1.bf16.msra.mxu0 0
        %998 = vmatprep.subr.bf16.mxu0 0
        %999 = vmatpush1.bf16.msra.mxu0 0
        %1000 = vmatprep.subr.bf16.mxu0 0
        %1001 = vmatpush1.bf16.msra.mxu0 0
        %1002 = vmatprep.mubr.bf16.mxu0 0
        %1003 = vmatmul.mubr.bf16.gmra.mrb[0].mxu0 %v965
        %v1004 = vpop.f32.mrb[0].mxu0
        %v1005 = vadd.f32 0.0, %v1004
        %v1006 = vpop.f32.mrb[0].mxu0
        %v1007 = vpop.f32.mrb[0].mxu0
        %v1008 = vpop.f32.mrb[0].mxu0
        %1009 = vdwg.mxu0
        %1011 = vrot.lane.b32.xlu0 %v907, 8
        %v1012 = vpop.permute.xlu0 %1011
        %1015 = vrot.lane.b32.xlu0 %v956, 16
        %v1016 = vpop.permute.xlu0 %1015
        %1019 = vrot.lane.b32.xlu0 %v1005, 24
        %v1020 = vpop.permute.xlu0 %1019
        %v1022 = vsel %vm581, %v858, %v1012
        %vm1023 = vcmask 130048
        %v1024 = vsel %vm1023, %v1022, %v1016
        %vm1025 = vcmask 195584
        %v1026 = vsel %vm1025, %v1024, %v1020
        %v1027 = vpack.c.bf16 %v1026, %v1026
        %v1028 = vld [vmem:[%s4] sm:$0xf]
        %v1029 = vld [vmem:[%s4 + $0x4] sm:$0xf]
        %v1030 = vld [vmem:[%s4 + $0x8] sm:$0xf]
        %v1031 = vld [vmem:[%s4 + $0xc] sm:$0xf]
        %v1032 = vld [vmem:[%s5] sm:$0x1]
        %v1034 = vlaneseq
        %v1035 = vshrl.u32 %v1034, 7
        %v1036 = vsub.s32 0, %v1035
        %v1037 = vrot.slane %v1032, %v1036
        %v1043 = vunpack.c.l.b16 %v1028
        %v1044 = vunpack.c.l.b16 %v1029
        %v1045 = vunpack.c.l.b16 %v1030
        %v1046 = vunpack.c.l.b16 %v1031
        %v1047 = vpack.c.b16 %v1044, %v1043
        %v1048 = vpack.c.b16 %v1046, %v1045
        %v1052 = vsel %vm510, %v1027, 0
        %1054 = vmatprep.subr.bf16.mxu0 0
        %1055 = vmatpush1.bf16.msra.mxu0 %v1047
        %1056 = vmatprep.subr.bf16.mxu0 0
        %1057 = vmatpush1.bf16.msra.mxu0 %v1048
        %1058 = vmatprep.subr.bf16.mxu0 0
        %1059 = vmatpush1.bf16.msra.mxu0 0
        %1060 = vmatprep.subr.bf16.mxu0 0
        %1061 = vmatpush1.bf16.msra.mxu0 0
        %1062 = vmatprep.subr.bf16.mxu0 0
        %1063 = vmatpush1.bf16.msra.mxu0 0
        %1064 = vmatprep.subr.bf16.mxu0 0
        %1065 = vmatpush1.bf16.msra.mxu0 0
        %1066 = vmatprep.subr.bf16.mxu0 0
        %1067 = vmatpush1.bf16.msra.mxu0 0
        %1068 = vmatprep.subr.bf16.mxu0 0
        %1069 = vmatpush1.bf16.msra.mxu0 0
        %1070 = vmatprep.subr.bf16.mxu0 0
        %1071 = vmatpush1.bf16.msra.mxu0 0
        %1072 = vmatprep.subr.bf16.mxu0 0
        %1073 = vmatpush1.bf16.msra.mxu0 0
        %1074 = vmatprep.subr.bf16.mxu0 0
        %1075 = vmatpush1.bf16.msra.mxu0 0
        %1076 = vmatprep.subr.bf16.mxu0 0
        %1077 = vmatpush1.bf16.msra.mxu0 0
        %1078 = vmatprep.subr.bf16.mxu0 0
        %1079 = vmatpush1.bf16.msra.mxu0 0
        %1080 = vmatprep.subr.bf16.mxu0 0
        %1081 = vmatpush1.bf16.msra.mxu0 0
        %1082 = vmatprep.subr.bf16.mxu0 0
        %1083 = vmatpush1.bf16.msra.mxu0 0
        %1084 = vmatprep.subr.bf16.mxu0 0
        %1085 = vmatpush1.bf16.msra.mxu0 0
        %1086 = vmatprep.mubr.bf16.mxu0 0
        %1087 = vmatmul.mubr.bf16.gmra.mrb[0].mxu0 %v1052
        %v1088 = vpop.f32.mrb[0].mxu0
        %v1089 = vadd.f32 %v1037, %v1088
        %v1090 = vpop.f32.mrb[0].mxu0
        %v1091 = vpop.f32.mrb[0].mxu0
        %v1092 = vpop.f32.mrb[0].mxu0
        %1093 = vdwg.mxu0
        %vm1094 = vcmp.ge.f32.partialorder %v1089, 0.0
        %v1095 = vmul.f32 %v1089, 0.01
        %v1096 = vsel %vm1094, %v1089, %v1095
        %v1097 = vadd.f32 %v1096, %v478
        %v1098 = vld [vmem:[%s6] sm:$0x1]
        %v1099 = vld [vmem:[%s7] sm:$0x1]
        %v1100 = vsel %vm510, %v1097, 0.0
        %1101 = vadd.xlane.f32.xlu0 %v1100
        %v1102 = vpop.xlane.xlu0 %1101
        %v1103 = vrcp.pop 32.0
        %v1104 = vmul.f32 %v1102, %v1103
        %v1105 = vmul.f32 %v1097, %v1097
        %v1106 = vsel %vm510, %v1105, 0.0
        %1107 = vadd.xlane.f32.xlu0 %v1106
        %v1108 = vpop.xlane.xlu0 %1107
        %v1109 = vmul.f32 %v1108, %v1103
        %v1110 = vmul.f32 %v1104, %v1104
        %v1111 = vsub.f32 %v1109, %v1110
        %v1112 = vmax.f32 %v1111, 0.0
        %v1113 = vsub.f32 %v1097, %v1104
        %v1114 = vadd.f32 %v1112, 1e-05
        %v1115 = vrsqrt.pop %v1114
        %v1116 = vmul.f32 %v1113, %v1115
        %v1118 = vlaneseq
        %v1119 = vshrl.u32 %v1118, 7
        %v1120 = vsub.s32 0, %v1119
        %v1121 = vrot.slane %v1098, %v1120
        %v1123 = vmul.f32 %v1116, %v1121
        %v1125 = vlaneseq
        %v1126 = vshrl.u32 %v1125, 7
        %v1127 = vsub.s32 0, %v1126
        %v1128 = vrot.slane %v1099, %v1127
        %v1130 = vadd.f32 %v1123, %v1128
        %v1131 = vpack.c.bf16 %v1130, %v1130
        %v1132 = vld [vmem:[%s8] sm:$0xf]
        %v1133 = vld [vmem:[%s8 + $0x4] sm:$0xf]
        %v1134 = vld [vmem:[%s8 + $0x8] sm:$0xf]
        %v1135 = vld [vmem:[%s8 + $0xc] sm:$0xf]
        %v1136 = vld [vmem:[%s9] sm:$0x1]
        %v1138 = vlaneseq
        %v1139 = vshrl.u32 %v1138, 7
        %v1140 = vsub.s32 0, %v1139
        %v1141 = vrot.slane %v1136, %v1140
        %v1147 = vunpack.c.l.b16 %v1132
        %v1148 = vunpack.c.l.b16 %v1133
        %v1149 = vunpack.c.l.b16 %v1134
        %v1150 = vunpack.c.l.b16 %v1135
        %v1151 = vpack.c.b16 %v1148, %v1147
        %v1152 = vpack.c.b16 %v1150, %v1149
        %v1156 = vsel %vm510, %v1131, 0
        %1158 = vmatprep.subr.bf16.mxu0 0
        %1159 = vmatpush1.bf16.msra.mxu0 %v1151
        %1160 = vmatprep.subr.bf16.mxu0 0
        %1161 = vmatpush1.bf16.msra.mxu0 %v1152
        %1162 = vmatprep.subr.bf16.mxu0 0
        %1163 = vmatpush1.bf16.msra.mxu0 0
        %1164 = vmatprep.subr.bf16.mxu0 0
        %1165 = vmatpush1.bf16.msra.mxu0 0
        %1166 = vmatprep.subr.bf16.mxu0 0
        %1167 = vmatpush1.bf16.msra.mxu0 0
        %1168 = vmatprep.subr.bf16.mxu0 0
        %1169 = vmatpush1.bf16.msra.mxu0 0
        %1170 = vmatprep.subr.bf16.mxu0 0
        %1171 = vmatpush1.bf16.msra.mxu0 0
        %1172 = vmatprep.subr.bf16.mxu0 0
        %1173 = vmatpush1.bf16.msra.mxu0 0
        %1174 = vmatprep.subr.bf16.mxu0 0
        %1175 = vmatpush1.bf16.msra.mxu0 0
        %1176 = vmatprep.subr.bf16.mxu0 0
        %1177 = vmatpush1.bf16.msra.mxu0 0
        %1178 = vmatprep.subr.bf16.mxu0 0
        %1179 = vmatpush1.bf16.msra.mxu0 0
        %1180 = vmatprep.subr.bf16.mxu0 0
        %1181 = vmatpush1.bf16.msra.mxu0 0
        %1182 = vmatprep.subr.bf16.mxu0 0
        %1183 = vmatpush1.bf16.msra.mxu0 0
        %1184 = vmatprep.subr.bf16.mxu0 0
        %1185 = vmatpush1.bf16.msra.mxu0 0
        %1186 = vmatprep.subr.bf16.mxu0 0
        %1187 = vmatpush1.bf16.msra.mxu0 0
        %1188 = vmatprep.subr.bf16.mxu0 0
        %1189 = vmatpush1.bf16.msra.mxu0 0
        %1190 = vmatprep.mubr.bf16.mxu0 0
        %1191 = vmatmul.mubr.bf16.gmra.mrb[0].mxu0 %v1156
        %v1192 = vpop.f32.mrb[0].mxu0
        %v1193 = vadd.f32 %v1141, %v1192
        %v1194 = vpop.f32.mrb[0].mxu0
        %v1195 = vpop.f32.mrb[0].mxu0
        %v1196 = vpop.f32.mrb[0].mxu0
        %1197 = vdwg.mxu0
        %vm1198 = vcmp.ge.f32.partialorder %v1193, 0.0
        %v1199 = vmul.f32 %v1193, 0.01
        %v1200 = vsel %vm1198, %v1193, %v1199
        %v1201 = vpack.c.bf16 %v1200, %v1200
        %v1202 = vld [vmem:[%s10] sm:$0xf]
        %v1203 = vld [vmem:[%s10 + $0x4] sm:$0xf]
        %v1204 = vld [vmem:[%s10 + $0x8] sm:$0xf]
        %v1205 = vld [vmem:[%s10 + $0xc] sm:$0xf]
        %v1206 = vld [vmem:[%s10 + $0x10] sm:$0xf]
        %v1207 = vld [vmem:[%s10 + $0x14] sm:$0xf]
        %v1208 = vld [vmem:[%s10 + $0x18] sm:$0xf]
        %v1209 = vld [vmem:[%s10 + $0x1c] sm:$0xf]
        %v1210 = vld [vmem:[%s10 + $0x20] sm:$0xf]
        %v1211 = vld [vmem:[%s10 + $0x24] sm:$0xf]
        %v1212 = vld [vmem:[%s10 + $0x28] sm:$0xf]
        %v1213 = vld [vmem:[%s10 + $0x2c] sm:$0xf]
        %v1214 = vld [vmem:[%s11] sm:$0x1]
        %v1216 = vlaneseq
        %v1217 = vshrl.u32 %v1216, 7
        %v1218 = vsub.s32 0, %v1217
        %v1219 = vrot.slane %v1214, %v1218
        %v1233 = vunpack.c.l.b16 %v1202
        %v1234 = vunpack.c.l.b16 %v1203
        %v1235 = vunpack.c.l.b16 %v1204
        %v1236 = vunpack.c.l.b16 %v1205
        %v1237 = vunpack.c.l.b16 %v1206
        %v1238 = vunpack.c.l.b16 %v1207
        %v1239 = vunpack.c.l.b16 %v1208
        %v1240 = vunpack.c.l.b16 %v1209
        %v1241 = vunpack.c.l.b16 %v1210
        %v1242 = vunpack.c.l.b16 %v1211
        %v1243 = vunpack.c.l.b16 %v1212
        %v1244 = vunpack.c.l.b16 %v1213
        %v1245 = vpack.c.b16 %v1234, %v1233
        %v1246 = vpack.c.b16 %v1236, %v1235
        %v1247 = vpack.c.b16 %v1238, %v1237
        %v1248 = vpack.c.b16 %v1240, %v1239
        %v1249 = vpack.c.b16 %v1242, %v1241
        %v1250 = vpack.c.b16 %v1244, %v1243
        %vm1257 = vcmask 785408
        %v1259 = vsel %vm1257, %v1201, 0
        %1261 = vmatprep.subr.bf16.mxu0 0
        %1262 = vmatpush1.bf16.msra.mxu0 %v1245
        %1263 = vmatprep.subr.bf16.mxu0 0
        %1264 = vmatpush1.bf16.msra.mxu0 %v1246
        %1265 = vmatprep.subr.bf16.mxu0 0
        %1266 = vmatpush1.bf16.msra.mxu0 %v1247
        %1267 = vmatprep.subr.bf16.mxu0 0
        %1268 = vmatpush1.bf16.msra.mxu0 %v1248
        %1269 = vmatprep.subr.bf16.mxu0 0
        %1270 = vmatpush1.bf16.msra.mxu0 %v1249
        %1271 = vmatprep.subr.bf16.mxu0 0
        %1272 = vmatpush1.bf16.msra.mxu0 %v1250
        %1273 = vmatprep.subr.bf16.mxu0 0
        %1274 = vmatpush1.bf16.msra.mxu0 0
        %1275 = vmatprep.subr.bf16.mxu0 0
        %1276 = vmatpush1.bf16.msra.mxu0 0
        %1277 = vmatprep.subr.bf16.mxu0 0
        %1278 = vmatpush1.bf16.msra.mxu0 0
        %1279 = vmatprep.subr.bf16.mxu0 0
        %1280 = vmatpush1.bf16.msra.mxu0 0
        %1281 = vmatprep.subr.bf16.mxu0 0
        %1282 = vmatpush1.bf16.msra.mxu0 0
        %1283 = vmatprep.subr.bf16.mxu0 0
        %1284 = vmatpush1.bf16.msra.mxu0 0
        %1285 = vmatprep.subr.bf16.mxu0 0
        %1286 = vmatpush1.bf16.msra.mxu0 0
        %1287 = vmatprep.subr.bf16.mxu0 0
        %1288 = vmatpush1.bf16.msra.mxu0 0
        %1289 = vmatprep.subr.bf16.mxu0 0
        %1290 = vmatpush1.bf16.msra.mxu0 0
        %1291 = vmatprep.subr.bf16.mxu0 0
        %1292 = vmatpush1.bf16.msra.mxu0 0
        %1293 = vmatprep.mubr.bf16.mxu0 0
        %1294 = vmatmul.mubr.bf16.gmra.mrb[0].mxu0 %v1259
        %v1295 = vpop.f32.mrb[0].mxu0
        %v1296 = vadd.f32 %v1219, %v1295
        %v1297 = vpop.f32.mrb[0].mxu0
        %v1298 = vpop.f32.mrb[0].mxu0
        %v1299 = vpop.f32.mrb[0].mxu0
        %1300 = vdwg.mxu0
        %v1301 = vadd.f32 %v1296, %v1130
        %v1302 = vld [vmem:[%s12] sm:$0x1]
        %v1303 = vld [vmem:[%s13] sm:$0x1]
        %v1304 = vsel %vm510, %v1301, 0.0
        %1305 = vadd.xlane.f32.xlu0 %v1304
        %v1306 = vpop.xlane.xlu0 %1305
        %v1307 = vmul.f32 %v1306, %v1103
        %v1308 = vmul.f32 %v1301, %v1301
        %v1309 = vsel %vm510, %v1308, 0.0
        %1310 = vadd.xlane.f32.xlu0 %v1309
        %v1311 = vpop.xlane.xlu0 %1310
        %v1312 = vmul.f32 %v1311, %v1103
        %v1313 = vmul.f32 %v1307, %v1307
        %v1314 = vsub.f32 %v1312, %v1313
        %v1315 = vmax.f32 %v1314, 0.0
        %v1316 = vsub.f32 %v1301, %v1307
        %v1317 = vadd.f32 %v1315, 1e-05
        %v1318 = vrsqrt.pop %v1317
        %v1319 = vmul.f32 %v1316, %v1318
        %v1321 = vlaneseq
        %v1322 = vshrl.u32 %v1321, 7
        %v1323 = vsub.s32 0, %v1322
        %v1324 = vrot.slane %v1302, %v1323
        %v1326 = vmul.f32 %v1319, %v1324
        %v1328 = vlaneseq
        %v1329 = vshrl.u32 %v1328, 7
        %v1330 = vsub.s32 0, %v1329
        %v1331 = vrot.slane %v1303, %v1330
        %v1333 = vadd.f32 %v1326, %v1331
        %v1334 = vpack.c.bf16 %v1333, %v1333
        %s1335 = scalar_lea.vmem %s2, 16
        %v1336 = vld [vmem:[%s1335] sm:$0xf]
        %v1337 = vld [vmem:[%s1335 + $0x4] sm:$0xf]
        %v1338 = vld [vmem:[%s1335 + $0x8] sm:$0xf]
        %v1339 = vld [vmem:[%s1335 + $0xc] sm:$0xf]
        %s1340 = scalar_lea.vmem %s3, 1
        %v1341 = vld [vmem:[%s1340] sm:$0x1]
        %v1343 = vlaneseq
        %v1344 = vshrl.u32 %v1343, 7
        %v1345 = vsub.s32 0, %v1344
        %v1346 = vrot.slane %v1341, %v1345
        %v1352 = vunpack.c.l.b16 %v1336
        %v1353 = vunpack.c.l.b16 %v1337
        %v1354 = vunpack.c.l.b16 %v1338
        %v1355 = vunpack.c.l.b16 %v1339
        %v1356 = vpack.c.b16 %v1353, %v1352
        %v1357 = vpack.c.b16 %v1355, %v1354
        %v1361 = vsel %vm510, %v1334, 0
        %1363 = vmatprep.subr.bf16.mxu0 0
        %1364 = vmatpush1.bf16.msra.mxu0 %v1356
        %1365 = vmatprep.subr.bf16.mxu0 0
        %1366 = vmatpush1.bf16.msra.mxu0 %v1357
        %1367 = vmatprep.subr.bf16.mxu0 0
        %1368 = vmatpush1.bf16.msra.mxu0 0
        %1369 = vmatprep.subr.bf16.mxu0 0
        %1370 = vmatpush1.bf16.msra.mxu0 0
        %1371 = vmatprep.subr.bf16.mxu0 0
        %1372 = vmatpush1.bf16.msra.mxu0 0
        %1373 = vmatprep.subr.bf16.mxu0 0
        %1374 = vmatpush1.bf16.msra.mxu0 0
        %1375 = vmatprep.subr.bf16.mxu0 0
        %1376 = vmatpush1.bf16.msra.mxu0 0
        %1377 = vmatprep.subr.bf16.mxu0 0
        %1378 = vmatpush1.bf16.msra.mxu0 0
        %1379 = vmatprep.subr.bf16.mxu0 0
        %1380 = vmatpush1.bf16.msra.mxu0 0
        %1381 = vmatprep.subr.bf16.mxu0 0
        %1382 = vmatpush1.bf16.msra.mxu0 0
        %1383 = vmatprep.subr.bf16.mxu0 0
        %1384 = vmatpush1.bf16.msra.mxu0 0
        %1385 = vmatprep.subr.bf16.mxu0 0
        %1386 = vmatpush1.bf16.msra.mxu0 0
        %1387 = vmatprep.subr.bf16.mxu0 0
        %1388 = vmatpush1.bf16.msra.mxu0 0
        %1389 = vmatprep.subr.bf16.mxu0 0
        %1390 = vmatpush1.bf16.msra.mxu0 0
        %1391 = vmatprep.subr.bf16.mxu0 0
        %1392 = vmatpush1.bf16.msra.mxu0 0
        %1393 = vmatprep.subr.bf16.mxu0 0
        %1394 = vmatpush1.bf16.msra.mxu0 0
        %1395 = vmatprep.mubr.bf16.mxu0 0
        %1396 = vmatmul.mubr.bf16.gmra.mrb[0].mxu0 %v1361
        %v1397 = vpop.f32.mrb[0].mxu0
        %v1398 = vadd.f32 %v1346, %v1397
        %v1399 = vpop.f32.mrb[0].mxu0
        %v1400 = vpop.f32.mrb[0].mxu0
        %v1401 = vpop.f32.mrb[0].mxu0
        %1402 = vdwg.mxu0
        %1404 = vrot.lane.b32.xlu0 %v1398, 120
        %v1405 = vpop.permute.xlu0 %1404
        %1407 = vrot.lane.b32.xlu0 %v1398, 112
        %v1408 = vpop.permute.xlu0 %1407
        %1410 = vrot.lane.b32.xlu0 %v1398, 104
        %v1411 = vpop.permute.xlu0 %1410
        %v1413 = vpack.c.bf16 %v1398, %v1398
        %v1414 = vpack.c.bf16 %v1405, %v1405
        %v1415 = vpack.c.bf16 %v1408, %v1408
        %v1416 = vpack.c.bf16 %v1411, %v1411
        %1418 = vrot.lane.b32.xlu0 %v1333, 120
        %v1419 = vpop.permute.xlu0 %1418
        %1421 = vrot.lane.b32.xlu0 %v1333, 112
        %v1422 = vpop.permute.xlu0 %1421
        %1424 = vrot.lane.b32.xlu0 %v1333, 104
        %v1425 = vpop.permute.xlu0 %1424
        %v1427 = vpack.c.bf16 %v1419, %v1419
        %v1428 = vpack.c.bf16 %v1422, %v1422
        %v1429 = vpack.c.bf16 %v1425, %v1425
        %v1431 = vsel %vm581, %v1413, 0
        %v1433 = vsel %vm581, %v1334, 0
        %1435 = vmatprep.subr.bf16.mxu0 0
        %1436 = vmatpush1.bf16.xpose.msra.mxu0 %v1433
        %1437 = vmatprep.subr.bf16.mxu0 0
        %1438 = vmatpush1.bf16.xpose.msra.mxu0 0
        %1439 = vmatprep.subr.bf16.mxu0 0
        %1440 = vmatpush1.bf16.xpose.msra.mxu0 0
        %1441 = vmatprep.subr.bf16.mxu0 0
        %1442 = vmatpush1.bf16.xpose.msra.mxu0 0
        %1443 = vmatprep.subr.bf16.mxu0 0
        %1444 = vmatpush1.bf16.xpose.msra.mxu0 0
        %1445 = vmatprep.subr.bf16.mxu0 0
        %1446 = vmatpush1.bf16.xpose.msra.mxu0 0
        %1447 = vmatprep.subr.bf16.mxu0 0
        %1448 = vmatpush1.bf16.xpose.msra.mxu0 0
        %1449 = vmatprep.subr.bf16.mxu0 0
        %1450 = vmatpush1.bf16.xpose.msra.mxu0 0
        %1451 = vmatprep.subr.bf16.mxu0 0
        %1452 = vmatpush1.bf16.xpose.msra.mxu0 0
        %1453 = vmatprep.subr.bf16.mxu0 0
        %1454 = vmatpush1.bf16.xpose.msra.mxu0 0
        %1455 = vmatprep.subr.bf16.mxu0 0
        %1456 = vmatpush1.bf16.xpose.msra.mxu0 0
        %1457 = vmatprep.subr.bf16.mxu0 0
        %1458 = vmatpush1.bf16.xpose.msra.mxu0 0
        %1459 = vmatprep.subr.bf16.mxu0 0
        %1460 = vmatpush1.bf16.xpose.msra.mxu0 0
        %1461 = vmatprep.subr.bf16.mxu0 0
        %1462 = vmatpush1.bf16.xpose.msra.mxu0 0
        %1463 = vmatprep.subr.bf16.mxu0 0
        %1464 = vmatpush1.bf16.xpose.msra.mxu0 0
        %1465 = vmatprep.subr.bf16.mxu0 0
        %1466 = vmatpush1.bf16.xpose.msra.mxu0 0
        %1467 = vmatprep.mubr.bf16.mxu0 0
        %1468 = vmatmul.mubr.bf16.gmra.mrb[0].mxu0 %v1431
        %v1469 = vpop.f32.mrb[0].mxu0
        %v1470 = vadd.f32 %v484, %v1469
        %v1471 = vpop.f32.mrb[0].mxu0
        %v1472 = vpop.f32.mrb[0].mxu0
        %v1473 = vpop.f32.mrb[0].mxu0
        %1474 = vdwg.mxu0
        %v1476 = vsel %vm581, %v1414, 0
        %v1479 = vsel %vm581, %v1427, 0
        %1481 = vmatprep.subr.bf16.mxu0 0
        %1482 = vmatpush1.bf16.xpose.msra.mxu0 %v1479
        %1483 = vmatprep.subr.bf16.mxu0 0
        %1484 = vmatpush1.bf16.xpose.msra.mxu0 0
        %1485 = vmatprep.subr.bf16.mxu0 0
        %1486 = vmatpush1.bf16.xpose.msra.mxu0 0
        %1487 = vmatprep.subr.bf16.mxu0 0
        %1488 = vmatpush1.bf16.xpose.msra.mxu0 0
        %1489 = vmatprep.subr.bf16.mxu0 0
        %1490 = vmatpush1.bf16.xpose.msra.mxu0 0
        %1491 = vmatprep.subr.bf16.mxu0 0
        %1492 = vmatpush1.bf16.xpose.msra.mxu0 0
        %1493 = vmatprep.subr.bf16.mxu0 0
        %1494 = vmatpush1.bf16.xpose.msra.mxu0 0
        %1495 = vmatprep.subr.bf16.mxu0 0
        %1496 = vmatpush1.bf16.xpose.msra.mxu0 0
        %1497 = vmatprep.subr.bf16.mxu0 0
        %1498 = vmatpush1.bf16.xpose.msra.mxu0 0
        %1499 = vmatprep.subr.bf16.mxu0 0
        %1500 = vmatpush1.bf16.xpose.msra.mxu0 0
        %1501 = vmatprep.subr.bf16.mxu0 0
        %1502 = vmatpush1.bf16.xpose.msra.mxu0 0
        %1503 = vmatprep.subr.bf16.mxu0 0
        %1504 = vmatpush1.bf16.xpose.msra.mxu0 0
        %1505 = vmatprep.subr.bf16.mxu0 0
        %1506 = vmatpush1.bf16.xpose.msra.mxu0 0
        %1507 = vmatprep.subr.bf16.mxu0 0
        %1508 = vmatpush1.bf16.xpose.msra.mxu0 0
        %1509 = vmatprep.subr.bf16.mxu0 0
        %1510 = vmatpush1.bf16.xpose.msra.mxu0 0
        %1511 = vmatprep.subr.bf16.mxu0 0
        %1512 = vmatpush1.bf16.xpose.msra.mxu0 0
        %1513 = vmatprep.mubr.bf16.mxu0 0
        %1514 = vmatmul.mubr.bf16.gmra.mrb[0].mxu0 %v1476
        %v1515 = vpop.f32.mrb[0].mxu0
        %v1516 = vadd.f32 %v484, %v1515
        %v1517 = vpop.f32.mrb[0].mxu0
        %v1518 = vpop.f32.mrb[0].mxu0
        %v1519 = vpop.f32.mrb[0].mxu0
        %1520 = vdwg.mxu0
        %v1522 = vsel %vm581, %v1415, 0
        %v1525 = vsel %vm581, %v1428, 0
        %1527 = vmatprep.subr.bf16.mxu0 0
        %1528 = vmatpush1.bf16.xpose.msra.mxu0 %v1525
        %1529 = vmatprep.subr.bf16.mxu0 0
        %1530 = vmatpush1.bf16.xpose.msra.mxu0 0
        %1531 = vmatprep.subr.bf16.mxu0 0
        %1532 = vmatpush1.bf16.xpose.msra.mxu0 0
        %1533 = vmatprep.subr.bf16.mxu0 0
        %1534 = vmatpush1.bf16.xpose.msra.mxu0 0
        %1535 = vmatprep.subr.bf16.mxu0 0
        %1536 = vmatpush1.bf16.xpose.msra.mxu0 0
        %1537 = vmatprep.subr.bf16.mxu0 0
        %1538 = vmatpush1.bf16.xpose.msra.mxu0 0
        %1539 = vmatprep.subr.bf16.mxu0 0
        %1540 = vmatpush1.bf16.xpose.msra.mxu0 0
        %1541 = vmatprep.subr.bf16.mxu0 0
        %1542 = vmatpush1.bf16.xpose.msra.mxu0 0
        %1543 = vmatprep.subr.bf16.mxu0 0
        %1544 = vmatpush1.bf16.xpose.msra.mxu0 0
        %1545 = vmatprep.subr.bf16.mxu0 0
        %1546 = vmatpush1.bf16.xpose.msra.mxu0 0
        %1547 = vmatprep.subr.bf16.mxu0 0
        %1548 = vmatpush1.bf16.xpose.msra.mxu0 0
        %1549 = vmatprep.subr.bf16.mxu0 0
        %1550 = vmatpush1.bf16.xpose.msra.mxu0 0
        %1551 = vmatprep.subr.bf16.mxu0 0
        %1552 = vmatpush1.bf16.xpose.msra.mxu0 0
        %1553 = vmatprep.subr.bf16.mxu0 0
        %1554 = vmatpush1.bf16.xpose.msra.mxu0 0
        %1555 = vmatprep.subr.bf16.mxu0 0
        %1556 = vmatpush1.bf16.xpose.msra.mxu0 0
        %1557 = vmatprep.subr.bf16.mxu0 0
        %1558 = vmatpush1.bf16.xpose.msra.mxu0 0
        %1559 = vmatprep.mubr.bf16.mxu0 0
        %1560 = vmatmul.mubr.bf16.gmra.mrb[0].mxu0 %v1522
        %v1561 = vpop.f32.mrb[0].mxu0
        %v1562 = vadd.f32 %v484, %v1561
        %v1563 = vpop.f32.mrb[0].mxu0
        %v1564 = vpop.f32.mrb[0].mxu0
        %v1565 = vpop.f32.mrb[0].mxu0
        %1566 = vdwg.mxu0
        %v1568 = vsel %vm581, %v1416, 0
        %v1571 = vsel %vm581, %v1429, 0
        %1573 = vmatprep.subr.bf16.mxu0 0
        %1574 = vmatpush1.bf16.xpose.msra.mxu0 %v1571
        %1575 = vmatprep.subr.bf16.mxu0 0
        %1576 = vmatpush1.bf16.xpose.msra.mxu0 0
        %1577 = vmatprep.subr.bf16.mxu0 0
        %1578 = vmatpush1.bf16.xpose.msra.mxu0 0
        %1579 = vmatprep.subr.bf16.mxu0 0
        %1580 = vmatpush1.bf16.xpose.msra.mxu0 0
        %1581 = vmatprep.subr.bf16.mxu0 0
        %1582 = vmatpush1.bf16.xpose.msra.mxu0 0
        %1583 = vmatprep.subr.bf16.mxu0 0
        %1584 = vmatpush1.bf16.xpose.msra.mxu0 0
        %1585 = vmatprep.subr.bf16.mxu0 0
        %1586 = vmatpush1.bf16.xpose.msra.mxu0 0
        %1587 = vmatprep.subr.bf16.mxu0 0
        %1588 = vmatpush1.bf16.xpose.msra.mxu0 0
        %1589 = vmatprep.subr.bf16.mxu0 0
        %1590 = vmatpush1.bf16.xpose.msra.mxu0 0
        %1591 = vmatprep.subr.bf16.mxu0 0
        %1592 = vmatpush1.bf16.xpose.msra.mxu0 0
        %1593 = vmatprep.subr.bf16.mxu0 0
        %1594 = vmatpush1.bf16.xpose.msra.mxu0 0
        %1595 = vmatprep.subr.bf16.mxu0 0
        %1596 = vmatpush1.bf16.xpose.msra.mxu0 0
        %1597 = vmatprep.subr.bf16.mxu0 0
        %1598 = vmatpush1.bf16.xpose.msra.mxu0 0
        %1599 = vmatprep.subr.bf16.mxu0 0
        %1600 = vmatpush1.bf16.xpose.msra.mxu0 0
        %1601 = vmatprep.subr.bf16.mxu0 0
        %1602 = vmatpush1.bf16.xpose.msra.mxu0 0
        %1603 = vmatprep.subr.bf16.mxu0 0
        %1604 = vmatpush1.bf16.xpose.msra.mxu0 0
        %1605 = vmatprep.mubr.bf16.mxu0 0
        %1606 = vmatmul.mubr.bf16.gmra.mrb[0].mxu0 %v1568
        %v1607 = vpop.f32.mrb[0].mxu0
        %v1608 = vadd.f32 %v484, %v1607
        %v1609 = vpop.f32.mrb[0].mxu0
        %v1610 = vpop.f32.mrb[0].mxu0
        %v1611 = vpop.f32.mrb[0].mxu0
        %1612 = vdwg.mxu0
        %v1613 = vsel %vm581, %v1470, -inf
        %1614 = vmax.xlane.f32.xlu0 %v1613
        %v1615 = vpop.xlane.xlu0 %1614
        %v1616 = vsel %vm581, %v1516, -inf
        %1617 = vmax.xlane.f32.xlu0 %v1616
        %v1618 = vpop.xlane.xlu0 %1617
        %v1619 = vsel %vm581, %v1562, -inf
        %1620 = vmax.xlane.f32.xlu0 %v1619
        %v1621 = vpop.xlane.xlu0 %1620
        %v1622 = vsel %vm581, %v1608, -inf
        %1623 = vmax.xlane.f32.xlu0 %v1622
        %v1624 = vpop.xlane.xlu0 %1623
        %v1625 = vsub.f32 %v1470, %v1615
        %v1626 = vsub.f32 %v1516, %v1618
        %v1627 = vsub.f32 %v1562, %v1621
        %v1628 = vsub.f32 %v1608, %v1624
        %v1629 = vmul.f32 %v1625, 1.442695
        %v1630 = vpow.pop %v1629
        %v1631 = vmul.f32 %v1626, 1.442695
        %v1632 = vpow.pop %v1631
        %v1633 = vmul.f32 %v1627, 1.442695
        %v1634 = vpow.pop %v1633
        %v1635 = vmul.f32 %v1628, 1.442695
        %v1636 = vpow.pop %v1635
        %v1637 = vsel %vm581, %v1630, 0.0
        %1638 = vadd.xlane.f32.xlu0 %v1637
        %v1639 = vpop.xlane.xlu0 %1638
        %v1640 = vsel %vm581, %v1632, 0.0
        %1641 = vadd.xlane.f32.xlu0 %v1640
        %v1642 = vpop.xlane.xlu0 %1641
        %v1643 = vsel %vm581, %v1634, 0.0
        %1644 = vadd.xlane.f32.xlu0 %v1643
        %v1645 = vpop.xlane.xlu0 %1644
        %v1646 = vsel %vm581, %v1636, 0.0
        %1647 = vadd.xlane.f32.xlu0 %v1646
        %v1648 = vpop.xlane.xlu0 %1647
        %v1649 = vrcp.pop %v1639
        %v1650 = vmul.f32 %v1630, %v1649
        %v1651 = vrcp.pop %v1642
        %v1652 = vmul.f32 %v1632, %v1651
        %v1653 = vrcp.pop %v1645
        %v1654 = vmul.f32 %v1634, %v1653
        %v1655 = vrcp.pop %v1648
        %v1656 = vmul.f32 %v1636, %v1655
        %v1657 = vpack.c.bf16 %v1650, %v1650
        %v1658 = vpack.c.bf16 %v1652, %v1652
        %v1659 = vpack.c.bf16 %v1654, %v1654
        %v1660 = vpack.c.bf16 %v1656, %v1656
        %1662 = vrot.lane.b32.xlu0 %v1413, 96
        %v1663 = vpop.permute.xlu0 %1662
        %v1665 = vsel %vm581, %v1657, 0
        %v1668 = vsel %vm819, %v1663, 0
        %1670 = vmatprep.subr.bf16.mxu0 0
        %1671 = vmatpush1.bf16.msra.mxu0 %v1668
        %1672 = vmatprep.subr.bf16.mxu0 0
        %1673 = vmatpush1.bf16.msra.mxu0 0
        %1674 = vmatprep.subr.bf16.mxu0 0
        %1675 = vmatpush1.bf16.msra.mxu0 0
        %1676 = vmatprep.subr.bf16.mxu0 0
        %1677 = vmatpush1.bf16.msra.mxu0 0
        %1678 = vmatprep.subr.bf16.mxu0 0
        %1679 = vmatpush1.bf16.msra.mxu0 0
        %1680 = vmatprep.subr.bf16.mxu0 0
        %1681 = vmatpush1.bf16.msra.mxu0 0
        %1682 = vmatprep.subr.bf16.mxu0 0
        %1683 = vmatpush1.bf16.msra.mxu0 0
        %1684 = vmatprep.subr.bf16.mxu0 0
        %1685 = vmatpush1.bf16.msra.mxu0 0
        %1686 = vmatprep.subr.bf16.mxu0 0
        %1687 = vmatpush1.bf16.msra.mxu0 0
        %1688 = vmatprep.subr.bf16.mxu0 0
        %1689 = vmatpush1.bf16.msra.mxu0 0
        %1690 = vmatprep.subr.bf16.mxu0 0
        %1691 = vmatpush1.bf16.msra.mxu0 0
        %1692 = vmatprep.subr.bf16.mxu0 0
        %1693 = vmatpush1.bf16.msra.mxu0 0
        %1694 = vmatprep.subr.bf16.mxu0 0
        %1695 = vmatpush1.bf16.msra.mxu0 0
        %1696 = vmatprep.subr.bf16.mxu0 0
        %1697 = vmatpush1.bf16.msra.mxu0 0
        %1698 = vmatprep.subr.bf16.mxu0 0
        %1699 = vmatpush1.bf16.msra.mxu0 0
        %1700 = vmatprep.subr.bf16.mxu0 0
        %1701 = vmatpush1.bf16.msra.mxu0 0
        %1702 = vmatprep.mubr.bf16.mxu0 0
        %1703 = vmatmul.mubr.bf16.gmra.mrb[0].mxu0 %v1665
        %v1704 = vpop.f32.mrb[0].mxu0
        %v1705 = vadd.f32 0.0, %v1704
        %v1706 = vpop.f32.mrb[0].mxu0
        %v1707 = vpop.f32.mrb[0].mxu0
        %v1708 = vpop.f32.mrb[0].mxu0
        %1709 = vdwg.mxu0
        %1711 = vrot.lane.b32.xlu0 %v1414, 96
        %v1712 = vpop.permute.xlu0 %1711
        %v1714 = vsel %vm581, %v1658, 0
        %v1717 = vsel %vm819, %v1712, 0
        %1719 = vmatprep.subr.bf16.mxu0 0
        %1720 = vmatpush1.bf16.msra.mxu0 %v1717
        %1721 = vmatprep.subr.bf16.mxu0 0
        %1722 = vmatpush1.bf16.msra.mxu0 0
        %1723 = vmatprep.subr.bf16.mxu0 0
        %1724 = vmatpush1.bf16.msra.mxu0 0
        %1725 = vmatprep.subr.bf16.mxu0 0
        %1726 = vmatpush1.bf16.msra.mxu0 0
        %1727 = vmatprep.subr.bf16.mxu0 0
        %1728 = vmatpush1.bf16.msra.mxu0 0
        %1729 = vmatprep.subr.bf16.mxu0 0
        %1730 = vmatpush1.bf16.msra.mxu0 0
        %1731 = vmatprep.subr.bf16.mxu0 0
        %1732 = vmatpush1.bf16.msra.mxu0 0
        %1733 = vmatprep.subr.bf16.mxu0 0
        %1734 = vmatpush1.bf16.msra.mxu0 0
        %1735 = vmatprep.subr.bf16.mxu0 0
        %1736 = vmatpush1.bf16.msra.mxu0 0
        %1737 = vmatprep.subr.bf16.mxu0 0
        %1738 = vmatpush1.bf16.msra.mxu0 0
        %1739 = vmatprep.subr.bf16.mxu0 0
        %1740 = vmatpush1.bf16.msra.mxu0 0
        %1741 = vmatprep.subr.bf16.mxu0 0
        %1742 = vmatpush1.bf16.msra.mxu0 0
        %1743 = vmatprep.subr.bf16.mxu0 0
        %1744 = vmatpush1.bf16.msra.mxu0 0
        %1745 = vmatprep.subr.bf16.mxu0 0
        %1746 = vmatpush1.bf16.msra.mxu0 0
        %1747 = vmatprep.subr.bf16.mxu0 0
        %1748 = vmatpush1.bf16.msra.mxu0 0
        %1749 = vmatprep.subr.bf16.mxu0 0
        %1750 = vmatpush1.bf16.msra.mxu0 0
        %1751 = vmatprep.mubr.bf16.mxu0 0
        %1752 = vmatmul.mubr.bf16.gmra.mrb[0].mxu0 %v1714
        %v1753 = vpop.f32.mrb[0].mxu0
        %v1754 = vadd.f32 0.0, %v1753
        %v1755 = vpop.f32.mrb[0].mxu0
        %v1756 = vpop.f32.mrb[0].mxu0
        %v1757 = vpop.f32.mrb[0].mxu0
        %1758 = vdwg.mxu0
        %1760 = vrot.lane.b32.xlu0 %v1415, 96
        %v1761 = vpop.permute.xlu0 %1760
        %v1763 = vsel %vm581, %v1659, 0
        %v1766 = vsel %vm819, %v1761, 0
        %1768 = vmatprep.subr.bf16.mxu0 0
        %1769 = vmatpush1.bf16.msra.mxu0 %v1766
        %1770 = vmatprep.subr.bf16.mxu0 0
        %1771 = vmatpush1.bf16.msra.mxu0 0
        %1772 = vmatprep.subr.bf16.mxu0 0
        %1773 = vmatpush1.bf16.msra.mxu0 0
        %1774 = vmatprep.subr.bf16.mxu0 0
        %1775 = vmatpush1.bf16.msra.mxu0 0
        %1776 = vmatprep.subr.bf16.mxu0 0
        %1777 = vmatpush1.bf16.msra.mxu0 0
        %1778 = vmatprep.subr.bf16.mxu0 0
        %1779 = vmatpush1.bf16.msra.mxu0 0
        %1780 = vmatprep.subr.bf16.mxu0 0
        %1781 = vmatpush1.bf16.msra.mxu0 0
        %1782 = vmatprep.subr.bf16.mxu0 0
        %1783 = vmatpush1.bf16.msra.mxu0 0
        %1784 = vmatprep.subr.bf16.mxu0 0
        %1785 = vmatpush1.bf16.msra.mxu0 0
        %1786 = vmatprep.subr.bf16.mxu0 0
        %1787 = vmatpush1.bf16.msra.mxu0 0
        %1788 = vmatprep.subr.bf16.mxu0 0
        %1789 = vmatpush1.bf16.msra.mxu0 0
        %1790 = vmatprep.subr.bf16.mxu0 0
        %1791 = vmatpush1.bf16.msra.mxu0 0
        %1792 = vmatprep.subr.bf16.mxu0 0
        %1793 = vmatpush1.bf16.msra.mxu0 0
        %1794 = vmatprep.subr.bf16.mxu0 0
        %1795 = vmatpush1.bf16.msra.mxu0 0
        %1796 = vmatprep.subr.bf16.mxu0 0
        %1797 = vmatpush1.bf16.msra.mxu0 0
        %1798 = vmatprep.subr.bf16.mxu0 0
        %1799 = vmatpush1.bf16.msra.mxu0 0
        %1800 = vmatprep.mubr.bf16.mxu0 0
        %1801 = vmatmul.mubr.bf16.gmra.mrb[0].mxu0 %v1763
        %v1802 = vpop.f32.mrb[0].mxu0
        %v1803 = vadd.f32 0.0, %v1802
        %v1804 = vpop.f32.mrb[0].mxu0
        %v1805 = vpop.f32.mrb[0].mxu0
        %v1806 = vpop.f32.mrb[0].mxu0
        %1807 = vdwg.mxu0
        %1809 = vrot.lane.b32.xlu0 %v1416, 96
        %v1810 = vpop.permute.xlu0 %1809
        %v1812 = vsel %vm581, %v1660, 0
        %v1815 = vsel %vm819, %v1810, 0
        %1817 = vmatprep.subr.bf16.mxu0 0
        %1818 = vmatpush1.bf16.msra.mxu0 %v1815
        %1819 = vmatprep.subr.bf16.mxu0 0
        %1820 = vmatpush1.bf16.msra.mxu0 0
        %1821 = vmatprep.subr.bf16.mxu0 0
        %1822 = vmatpush1.bf16.msra.mxu0 0
        %1823 = vmatprep.subr.bf16.mxu0 0
        %1824 = vmatpush1.bf16.msra.mxu0 0
        %1825 = vmatprep.subr.bf16.mxu0 0
        %1826 = vmatpush1.bf16.msra.mxu0 0
        %1827 = vmatprep.subr.bf16.mxu0 0
        %1828 = vmatpush1.bf16.msra.mxu0 0
        %1829 = vmatprep.subr.bf16.mxu0 0
        %1830 = vmatpush1.bf16.msra.mxu0 0
        %1831 = vmatprep.subr.bf16.mxu0 0
        %1832 = vmatpush1.bf16.msra.mxu0 0
        %1833 = vmatprep.subr.bf16.mxu0 0
        %1834 = vmatpush1.bf16.msra.mxu0 0
        %1835 = vmatprep.subr.bf16.mxu0 0
        %1836 = vmatpush1.bf16.msra.mxu0 0
        %1837 = vmatprep.subr.bf16.mxu0 0
        %1838 = vmatpush1.bf16.msra.mxu0 0
        %1839 = vmatprep.subr.bf16.mxu0 0
        %1840 = vmatpush1.bf16.msra.mxu0 0
        %1841 = vmatprep.subr.bf16.mxu0 0
        %1842 = vmatpush1.bf16.msra.mxu0 0
        %1843 = vmatprep.subr.bf16.mxu0 0
        %1844 = vmatpush1.bf16.msra.mxu0 0
        %1845 = vmatprep.subr.bf16.mxu0 0
        %1846 = vmatpush1.bf16.msra.mxu0 0
        %1847 = vmatprep.subr.bf16.mxu0 0
        %1848 = vmatpush1.bf16.msra.mxu0 0
        %1849 = vmatprep.mubr.bf16.mxu0 0
        %1850 = vmatmul.mubr.bf16.gmra.mrb[0].mxu0 %v1812
        %v1851 = vpop.f32.mrb[0].mxu0
        %v1852 = vadd.f32 0.0, %v1851
        %v1853 = vpop.f32.mrb[0].mxu0
        %v1854 = vpop.f32.mrb[0].mxu0
        %v1855 = vpop.f32.mrb[0].mxu0
        %1856 = vdwg.mxu0
        %1858 = vrot.lane.b32.xlu0 %v1754, 8
        %v1859 = vpop.permute.xlu0 %1858
        %1862 = vrot.lane.b32.xlu0 %v1803, 16
        %v1863 = vpop.permute.xlu0 %1862
        %1866 = vrot.lane.b32.xlu0 %v1852, 24
        %v1867 = vpop.permute.xlu0 %1866
        %v1869 = vsel %vm581, %v1705, %v1859
        %v1870 = vsel %vm1023, %v1869, %v1863
        %v1871 = vsel %vm1025, %v1870, %v1867
        %v1872 = vpack.c.bf16 %v1871, %v1871
        %s1873 = scalar_lea.vmem %s4, 16
        %v1874 = vld [vmem:[%s1873] sm:$0xf]
        %v1875 = vld [vmem:[%s1873 + $0x4] sm:$0xf]
        %v1876 = vld [vmem:[%s1873 + $0x8] sm:$0xf]
        %v1877 = vld [vmem:[%s1873 + $0xc] sm:$0xf]
        %s1878 = scalar_lea.vmem %s5, 1
        %v1879 = vld [vmem:[%s1878] sm:$0x1]
        %v1881 = vlaneseq
        %v1882 = vshrl.u32 %v1881, 7
        %v1883 = vsub.s32 0, %v1882
        %v1884 = vrot.slane %v1879, %v1883
        %v1890 = vunpack.c.l.b16 %v1874
        %v1891 = vunpack.c.l.b16 %v1875
        %v1892 = vunpack.c.l.b16 %v1876
        %v1893 = vunpack.c.l.b16 %v1877
        %v1894 = vpack.c.b16 %v1891, %v1890
        %v1895 = vpack.c.b16 %v1893, %v1892
        %v1899 = vsel %vm510, %v1872, 0
        %1901 = vmatprep.subr.bf16.mxu0 0
        %1902 = vmatpush1.bf16.msra.mxu0 %v1894
        %1903 = vmatprep.subr.bf16.mxu0 0
        %1904 = vmatpush1.bf16.msra.mxu0 %v1895
        %1905 = vmatprep.subr.bf16.mxu0 0
        %1906 = vmatpush1.bf16.msra.mxu0 0
        %1907 = vmatprep.subr.bf16.mxu0 0
        %1908 = vmatpush1.bf16.msra.mxu0 0
        %1909 = vmatprep.subr.bf16.mxu0 0
        %1910 = vmatpush1.bf16.msra.mxu0 0
        %1911 = vmatprep.subr.bf16.mxu0 0
        %1912 = vmatpush1.bf16.msra.mxu0 0
        %1913 = vmatprep.subr.bf16.mxu0 0
        %1914 = vmatpush1.bf16.msra.mxu0 0
        %1915 = vmatprep.subr.bf16.mxu0 0
        %1916 = vmatpush1.bf16.msra.mxu0 0
        %1917 = vmatprep.subr.bf16.mxu0 0
        %1918 = vmatpush1.bf16.msra.mxu0 0
        %1919 = vmatprep.subr.bf16.mxu0 0
        %1920 = vmatpush1.bf16.msra.mxu0 0
        %1921 = vmatprep.subr.bf16.mxu0 0
        %1922 = vmatpush1.bf16.msra.mxu0 0
        %1923 = vmatprep.subr.bf16.mxu0 0
        %1924 = vmatpush1.bf16.msra.mxu0 0
        %1925 = vmatprep.subr.bf16.mxu0 0
        %1926 = vmatpush1.bf16.msra.mxu0 0
        %1927 = vmatprep.subr.bf16.mxu0 0
        %1928 = vmatpush1.bf16.msra.mxu0 0
        %1929 = vmatprep.subr.bf16.mxu0 0
        %1930 = vmatpush1.bf16.msra.mxu0 0
        %1931 = vmatprep.subr.bf16.mxu0 0
        %1932 = vmatpush1.bf16.msra.mxu0 0
        %1933 = vmatprep.mubr.bf16.mxu0 0
        %1934 = vmatmul.mubr.bf16.gmra.mrb[0].mxu0 %v1899
        %v1935 = vpop.f32.mrb[0].mxu0
        %v1936 = vadd.f32 %v1884, %v1935
        %v1937 = vpop.f32.mrb[0].mxu0
        %v1938 = vpop.f32.mrb[0].mxu0
        %v1939 = vpop.f32.mrb[0].mxu0
        %1940 = vdwg.mxu0
        %vm1941 = vcmp.ge.f32.partialorder %v1936, 0.0
        %v1942 = vmul.f32 %v1936, 0.01
        %v1943 = vsel %vm1941, %v1936, %v1942
        %v1944 = vadd.f32 %v1943, %v1333
        %s1945 = scalar_lea.vmem %s6, 1
        %v1946 = vld [vmem:[%s1945] sm:$0x1]
        %s1947 = scalar_lea.vmem %s7, 1
        %v1948 = vld [vmem:[%s1947] sm:$0x1]
        %v1949 = vsel %vm510, %v1944, 0.0
        %1950 = vadd.xlane.f32.xlu0 %v1949
        %v1951 = vpop.xlane.xlu0 %1950
        %v1952 = vmul.f32 %v1951, %v1103
        %v1953 = vmul.f32 %v1944, %v1944
        %v1954 = vsel %vm510, %v1953, 0.0
        %1955 = vadd.xlane.f32.xlu0 %v1954
        %v1956 = vpop.xlane.xlu0 %1955
        %v1957 = vmul.f32 %v1956, %v1103
        %v1958 = vmul.f32 %v1952, %v1952
        %v1959 = vsub.f32 %v1957, %v1958
        %v1960 = vmax.f32 %v1959, 0.0
        %v1961 = vsub.f32 %v1944, %v1952
        %v1962 = vadd.f32 %v1960, 1e-05
        %v1963 = vrsqrt.pop %v1962
        %v1964 = vmul.f32 %v1961, %v1963
        %v1966 = vlaneseq
        %v1967 = vshrl.u32 %v1966, 7
        %v1968 = vsub.s32 0, %v1967
        %v1969 = vrot.slane %v1946, %v1968
        %v1971 = vmul.f32 %v1964, %v1969
        %v1973 = vlaneseq
        %v1974 = vshrl.u32 %v1973, 7
        %v1975 = vsub.s32 0, %v1974
        %v1976 = vrot.slane %v1948, %v1975
        %v1978 = vadd.f32 %v1971, %v1976
        %v1979 = vpack.c.bf16 %v1978, %v1978
        %s1980 = scalar_lea.vmem %s8, 16
        %v1981 = vld [vmem:[%s1980] sm:$0xf]
        %v1982 = vld [vmem:[%s1980 + $0x4] sm:$0xf]
        %v1983 = vld [vmem:[%s1980 + $0x8] sm:$0xf]
        %v1984 = vld [vmem:[%s1980 + $0xc] sm:$0xf]
        %s1985 = scalar_lea.vmem %s9, 1
        %v1986 = vld [vmem:[%s1985] sm:$0x1]
        %v1988 = vlaneseq
        %v1989 = vshrl.u32 %v1988, 7
        %v1990 = vsub.s32 0, %v1989
        %v1991 = vrot.slane %v1986, %v1990
        %v1997 = vunpack.c.l.b16 %v1981
        %v1998 = vunpack.c.l.b16 %v1982
        %v1999 = vunpack.c.l.b16 %v1983
        %v2000 = vunpack.c.l.b16 %v1984
        %v2001 = vpack.c.b16 %v1998, %v1997
        %v2002 = vpack.c.b16 %v2000, %v1999
        %v2006 = vsel %vm510, %v1979, 0
        %2008 = vmatprep.subr.bf16.mxu0 0
        %2009 = vmatpush1.bf16.msra.mxu0 %v2001
        %2010 = vmatprep.subr.bf16.mxu0 0
        %2011 = vmatpush1.bf16.msra.mxu0 %v2002
        %2012 = vmatprep.subr.bf16.mxu0 0
        %2013 = vmatpush1.bf16.msra.mxu0 0
        %2014 = vmatprep.subr.bf16.mxu0 0
        %2015 = vmatpush1.bf16.msra.mxu0 0
        %2016 = vmatprep.subr.bf16.mxu0 0
        %2017 = vmatpush1.bf16.msra.mxu0 0
        %2018 = vmatprep.subr.bf16.mxu0 0
        %2019 = vmatpush1.bf16.msra.mxu0 0
        %2020 = vmatprep.subr.bf16.mxu0 0
        %2021 = vmatpush1.bf16.msra.mxu0 0
        %2022 = vmatprep.subr.bf16.mxu0 0
        %2023 = vmatpush1.bf16.msra.mxu0 0
        %2024 = vmatprep.subr.bf16.mxu0 0
        %2025 = vmatpush1.bf16.msra.mxu0 0
        %2026 = vmatprep.subr.bf16.mxu0 0
        %2027 = vmatpush1.bf16.msra.mxu0 0
        %2028 = vmatprep.subr.bf16.mxu0 0
        %2029 = vmatpush1.bf16.msra.mxu0 0
        %2030 = vmatprep.subr.bf16.mxu0 0
        %2031 = vmatpush1.bf16.msra.mxu0 0
        %2032 = vmatprep.subr.bf16.mxu0 0
        %2033 = vmatpush1.bf16.msra.mxu0 0
        %2034 = vmatprep.subr.bf16.mxu0 0
        %2035 = vmatpush1.bf16.msra.mxu0 0
        %2036 = vmatprep.subr.bf16.mxu0 0
        %2037 = vmatpush1.bf16.msra.mxu0 0
        %2038 = vmatprep.subr.bf16.mxu0 0
        %2039 = vmatpush1.bf16.msra.mxu0 0
        %2040 = vmatprep.mubr.bf16.mxu0 0
        %2041 = vmatmul.mubr.bf16.gmra.mrb[0].mxu0 %v2006
        %v2042 = vpop.f32.mrb[0].mxu0
        %v2043 = vadd.f32 %v1991, %v2042
        %v2044 = vpop.f32.mrb[0].mxu0
        %v2045 = vpop.f32.mrb[0].mxu0
        %v2046 = vpop.f32.mrb[0].mxu0
        %2047 = vdwg.mxu0
        %vm2048 = vcmp.ge.f32.partialorder %v2043, 0.0
        %v2049 = vmul.f32 %v2043, 0.01
        %v2050 = vsel %vm2048, %v2043, %v2049
        %v2051 = vpack.c.bf16 %v2050, %v2050
        %s2052 = scalar_lea.vmem %s10, 48
        %v2053 = vld [vmem:[%s2052] sm:$0xf]
        %v2054 = vld [vmem:[%s2052 + $0x4] sm:$0xf]
        %v2055 = vld [vmem:[%s2052 + $0x8] sm:$0xf]
        %v2056 = vld [vmem:[%s2052 + $0xc] sm:$0xf]
        %v2057 = vld [vmem:[%s2052 + $0x10] sm:$0xf]
        %v2058 = vld [vmem:[%s2052 + $0x14] sm:$0xf]
        %v2059 = vld [vmem:[%s2052 + $0x18] sm:$0xf]
        %v2060 = vld [vmem:[%s2052 + $0x1c] sm:$0xf]
        %v2061 = vld [vmem:[%s2052 + $0x20] sm:$0xf]
        %v2062 = vld [vmem:[%s2052 + $0x24] sm:$0xf]
        %v2063 = vld [vmem:[%s2052 + $0x28] sm:$0xf]
        %v2064 = vld [vmem:[%s2052 + $0x2c] sm:$0xf]
        %s2065 = scalar_lea.vmem %s11, 1
        %v2066 = vld [vmem:[%s2065] sm:$0x1]
        %v2068 = vlaneseq
        %v2069 = vshrl.u32 %v2068, 7
        %v2070 = vsub.s32 0, %v2069
        %v2071 = vrot.slane %v2066, %v2070
        %v2085 = vunpack.c.l.b16 %v2053
        %v2086 = vunpack.c.l.b16 %v2054
        %v2087 = vunpack.c.l.b16 %v2055
        %v2088 = vunpack.c.l.b16 %v2056
        %v2089 = vunpack.c.l.b16 %v2057
        %v2090 = vunpack.c.l.b16 %v2058
        %v2091 = vunpack.c.l.b16 %v2059
        %v2092 = vunpack.c.l.b16 %v2060
        %v2093 = vunpack.c.l.b16 %v2061
        %v2094 = vunpack.c.l.b16 %v2062
        %v2095 = vunpack.c.l.b16 %v2063
        %v2096 = vunpack.c.l.b16 %v2064
        %v2097 = vpack.c.b16 %v2086, %v2085
        %v2098 = vpack.c.b16 %v2088, %v2087
        %v2099 = vpack.c.b16 %v2090, %v2089
        %v2100 = vpack.c.b16 %v2092, %v2091
        %v2101 = vpack.c.b16 %v2094, %v2093
        %v2102 = vpack.c.b16 %v2096, %v2095
        %v2110 = vsel %vm1257, %v2051, 0
        %2112 = vmatprep.subr.bf16.mxu0 0
        %2113 = vmatpush1.bf16.msra.mxu0 %v2097
        %2114 = vmatprep.subr.bf16.mxu0 0
        %2115 = vmatpush1.bf16.msra.mxu0 %v2098
        %2116 = vmatprep.subr.bf16.mxu0 0
        %2117 = vmatpush1.bf16.msra.mxu0 %v2099
        %2118 = vmatprep.subr.bf16.mxu0 0
        %2119 = vmatpush1.bf16.msra.mxu0 %v2100
        %2120 = vmatprep.subr.bf16.mxu0 0
        %2121 = vmatpush1.bf16.msra.mxu0 %v2101
        %2122 = vmatprep.subr.bf16.mxu0 0
        %2123 = vmatpush1.bf16.msra.mxu0 %v2102
        %2124 = vmatprep.subr.bf16.mxu0 0
        %2125 = vmatpush1.bf16.msra.mxu0 0
        %2126 = vmatprep.subr.bf16.mxu0 0
        %2127 = vmatpush1.bf16.msra.mxu0 0
        %2128 = vmatprep.subr.bf16.mxu0 0
        %2129 = vmatpush1.bf16.msra.mxu0 0
        %2130 = vmatprep.subr.bf16.mxu0 0
        %2131 = vmatpush1.bf16.msra.mxu0 0
        %2132 = vmatprep.subr.bf16.mxu0 0
        %2133 = vmatpush1.bf16.msra.mxu0 0
        %2134 = vmatprep.subr.bf16.mxu0 0
        %2135 = vmatpush1.bf16.msra.mxu0 0
        %2136 = vmatprep.subr.bf16.mxu0 0
        %2137 = vmatpush1.bf16.msra.mxu0 0
        %2138 = vmatprep.subr.bf16.mxu0 0
        %2139 = vmatpush1.bf16.msra.mxu0 0
        %2140 = vmatprep.subr.bf16.mxu0 0
        %2141 = vmatpush1.bf16.msra.mxu0 0
        %2142 = vmatprep.subr.bf16.mxu0 0
        %2143 = vmatpush1.bf16.msra.mxu0 0
        %2144 = vmatprep.mubr.bf16.mxu0 0
        %2145 = vmatmul.mubr.bf16.gmra.mrb[0].mxu0 %v2110
        %v2146 = vpop.f32.mrb[0].mxu0
        %v2147 = vadd.f32 %v2071, %v2146
        %v2148 = vpop.f32.mrb[0].mxu0
        %v2149 = vpop.f32.mrb[0].mxu0
        %v2150 = vpop.f32.mrb[0].mxu0
        %2151 = vdwg.mxu0
        %v2152 = vadd.f32 %v2147, %v1978
        %s2153 = scalar_lea.vmem %s12, 1
        %v2154 = vld [vmem:[%s2153] sm:$0x1]
        %s2155 = scalar_lea.vmem %s13, 1
        %v2156 = vld [vmem:[%s2155] sm:$0x1]
        %v2157 = vsel %vm510, %v2152, 0.0
        %2158 = vadd.xlane.f32.xlu0 %v2157
        %v2159 = vpop.xlane.xlu0 %2158
        %v2160 = vmul.f32 %v2159, %v1103
        %v2161 = vmul.f32 %v2152, %v2152
        %v2162 = vsel %vm510, %v2161, 0.0
        %2163 = vadd.xlane.f32.xlu0 %v2162
        %v2164 = vpop.xlane.xlu0 %2163
        %v2165 = vmul.f32 %v2164, %v1103
        %v2166 = vmul.f32 %v2160, %v2160
        %v2167 = vsub.f32 %v2165, %v2166
        %v2168 = vmax.f32 %v2167, 0.0
        %v2169 = vsub.f32 %v2152, %v2160
        %v2170 = vadd.f32 %v2168, 1e-05
        %v2171 = vrsqrt.pop %v2170
        %v2172 = vmul.f32 %v2169, %v2171
        %v2174 = vlaneseq
        %v2175 = vshrl.u32 %v2174, 7
        %v2176 = vsub.s32 0, %v2175
        %v2177 = vrot.slane %v2154, %v2176
        %v2179 = vmul.f32 %v2172, %v2177
        %v2181 = vlaneseq
        %v2182 = vshrl.u32 %v2181, 7
        %v2183 = vsub.s32 0, %v2182
        %v2184 = vrot.slane %v2156, %v2183
        %v2186 = vadd.f32 %v2179, %v2184
        %2187 = vst.msk [vmem:[%s469] sm:$0xff] %vm510, %v2186
        %s2188 = sand.u32 %s340, 1
        %s2189 = scalar_lea.sflag [#allocation3], %s2188
        %s2190 = sand.u32 %s340, 1
        %s2191 = smul.addr %s2190, 8
        %s2192 = scalar_lea.vmem [#allocation2], %s2191
        // Predicated region
        $region77: #{tpu_custom_call.1} parent=75 // pred_check
          %p2193 = pneg %p350
        $region78: #{tpu_custom_call.1} parent=75 // pred_check_branch
          %2195 = sbr.rel (%p2193) target = $region80
        $region79: #{tpu_custom_call.1} parent=75 // pred_region
          %s2197 = ssub.s32 128, 128
          %2198 = vsyncadd %s2189, %s2197
          %s2199 = smul.addr %s28, 128
          %s2200 = scalar_lea.hbm %s14, %s2199
          %s2202 = sshll.u32 %s2192, 4
          %s2203 = int_to_ptr.vmem [resolvable:$true] %s2202
          %2205 = dma.vmem_to_hbm [thread:$0]  %s2203, 128, %s2200, %s2189
        $region80: #{tpu_custom_call.1} parent=75 // pred_fallthru
          _
      $region76: #{tpu_custom_call.1} parent=5 // pred_fallthru
        _
      %p2206 = scmp.le.s32.totalorder 2, %s23
      // Predicated region
      $region81: #{tpu_custom_call.1} parent=5 // pred_check
        %p2207 = pneg %p2206
      $region82: #{tpu_custom_call.1} parent=5 // pred_check_branch
        %2209 = sbr.rel (%p2207) target = $region84
      $region83: #{tpu_custom_call.1} parent=5 // pred_region
        %s2210 = ssub.s32 %s23, 2
        // Predicated region
        $region85: #{tpu_custom_call.1} parent=83 // pred_check
          %p2211 = pneg %p356
        $region86: #{tpu_custom_call.1} parent=83 // pred_check_branch
          %2213 = sbr.rel (%p2211) target = $region88
        $region87: #{tpu_custom_call.1} parent=83 // pred_region
          %s2214 = sand.u32 %s341, 1
          %s2215 = scalar_lea.sflag [#allocation3], %s2214
          %s2216 = sand.u32 %s341, 1
          %s2217 = smul.addr %s2216, 8
          %s2218 = scalar_lea.vmem [#allocation2], %s2217
          %2219 = dma.done %s2215, 128
        $region88: #{tpu_custom_call.1} parent=83 // pred_fallthru
          _
      $region84: #{tpu_custom_call.1} parent=5 // pred_fallthru
        _
    $region6: #{tpu_custom_call.1} parent=1 // loop_footer
      %s27 = sadd.s32 1, %s23
    $region7: #{tpu_custom_call.1} parent=1 // loop_footer_branch
      %22 = sbr.rel target = $region3
    $region8: #{tpu_custom_call.1} parent=1 // loop_exit
      _
    %2220 = vsyncpa [#allocation3], 1
    %s2221 = scalar_lea.sflag [#allocation3], 1
    %2222 = vsyncpa %s2221, 1

</llo_original>
